<compile_context>
chip_gen: v7x
topology: tpu7x:2x2x1
jax: 0.10.0
libtpu: 0.0.40
codegen_flags: <defaults>
</compile_context>

<pallas_src>
import math

import jax
import jax.numpy as jnp
from jax import lax
from jax.experimental import pallas as pl
from jax.experimental.pallas import tpu as pltpu

# Tile constants (sized so double-buffered tiles + accumulator stay far below
# the 32 MiB scoped-VMEM default on v5e/v6e/v7x).
_TM = 256                 # GEMM M tile (sublane axis)
_TN = 512                 # preferred GEMM N tile (lane axis, Cout)
_TK = 512                 # GEMM K reduction tile
_SINGLE_K_MAX = 1024      # if padded K <= this, use a 2-D grid (no K loop)
_TR = 256                 # row tile for the elementwise bn+relu kernel
_BN_LANES = 2048          # target lane width for the bn+relu kernel
_VMEM_LIMIT = 32 * 1024 * 1024


def _round_up(x, m):
    return (x + m - 1) // m * m


def _lcm(a, b):
    return a * b // math.gcd(a, b)


def _pad2(x, rows, cols):
    r, c = x.shape
    if r == rows and c == cols:
        return x
    return jnp.pad(x, ((0, rows - r), (0, cols - c)))


# ----------------------------------------------------------------------------
# Kernel 1: elementwise BN(scale/shift) + ReLU (applied once per element,
# before any zero padding / patch expansion), lane-dense layout.
# ----------------------------------------------------------------------------
def _bn_relu_kernel(x_ref, scale_ref, shift_ref, o_ref):
    o_ref[...] = jnp.maximum(
        x_ref[...] * scale_ref[...] + shift_ref[...], 0.0).astype(o_ref.dtype)


def bn_relu(x, scale, shift, out_dtype=jnp.float32):
    """relu(x * scale + shift) over the trailing channel axis of x.

    x is flattened and re-laid-out as (rows, L) with L a multiple of both 128
    (lane width) and C, so stores are lane-dense (unmasked vst) and the
    channel-periodic scale/shift tile exactly along the lane axis.
    """
    C = x.shape[-1]
    total = x.size
    l0 = _lcm(C, 128)
    L = l0 * max(1, min(_BN_LANES // l0, max(1, total // (l0 * 8))))
    rows = pl.cdiv(total, L)
    tr = min(_TR, _round_up(rows, 8))
    Rp = _round_up(rows, tr)

    flat = jnp.pad(x.reshape(-1), (0, Rp * L - total)).reshape(Rp, L)
    scale_t = jnp.tile(scale.astype(jnp.float32), L // C).reshape(1, L)
    shift_t = jnp.tile(shift.astype(jnp.float32), L // C).reshape(1, L)

    out = pl.pallas_call(
        _bn_relu_kernel,
        out_shape=jax.ShapeDtypeStruct((Rp, L), out_dtype),
        grid=(Rp // tr,),
        in_specs=[
            pl.BlockSpec((tr, L), lambda i: (i, 0)),
            pl.BlockSpec((1, L), lambda i: (0, 0)),
            pl.BlockSpec((1, L), lambda i: (0, 0)),
        ],
        out_specs=pl.BlockSpec((tr, L), lambda i: (i, 0)),
        compiler_params=pltpu.CompilerParams(
            dimension_semantics=("parallel",),
            vmem_limit_bytes=_VMEM_LIMIT),
    )(flat, scale_t, shift_t)
    return out.reshape(-1)[:total].reshape(x.shape)


# ----------------------------------------------------------------------------
# Kernel 2: tiled GEMM (im2col conv) with fused epilogues.
#   epilogue = "none"    : out = A @ B
#   epilogue = "bn_relu" : out = relu((A @ B) * scale + shift)
#   epilogue = "add"     : out = A @ B + residual   (residual aliased to out)
# ----------------------------------------------------------------------------
def _make_gemm_kernel(epilogue, use_bf16, single_k):
    def _dot(a_ref, b_ref):
        if use_bf16:
            return jnp.dot(a_ref[...], b_ref[...],
                           preferred_element_type=jnp.float32)
        return jnp.dot(a_ref[...], b_ref[...],
                       preferred_element_type=jnp.float32,
                       precision=lax.Precision.HIGHEST)

    if single_k:
        if epilogue == "bn_relu":
            def kernel(a_ref, b_ref, scale_ref, shift_ref, o_ref):
                o_ref[...] = jnp.maximum(
                    _dot(a_ref, b_ref) * scale_ref[...] + shift_ref[...],
                    0.0).astype(o_ref.dtype)
        elif epilogue == "add":
            def kernel(a_ref, b_ref, r_ref, o_ref):
                o_ref[...] = (_dot(a_ref, b_ref)
                              + r_ref[...].astype(jnp.float32)
                              ).astype(o_ref.dtype)
        else:
            def kernel(a_ref, b_ref, o_ref):
                o_ref[...] = _dot(a_ref, b_ref).astype(o_ref.dtype)
        return kernel

    def _accum(a_ref, b_ref, acc_ref):
        @pl.when(pl.program_id(2) == 0)
        def _init():
            acc_ref[...] = jnp.zeros_like(acc_ref)
        acc_ref[...] += _dot(a_ref, b_ref)

    def _is_last_k():
        return pl.program_id(2) == pl.num_programs(2) - 1

    if epilogue == "bn_relu":
        def kernel(a_ref, b_ref, scale_ref, shift_ref, o_ref, acc_ref):
            _accum(a_ref, b_ref, acc_ref)

            @pl.when(_is_last_k())
            def _fin():
                o_ref[...] = jnp.maximum(
                    acc_ref[...] * scale_ref[...] + shift_ref[...],
                    0.0).astype(o_ref.dtype)
    elif epilogue == "add":
        def kernel(a_ref, b_ref, r_ref, o_ref, acc_ref):
            _accum(a_ref, b_ref, acc_ref)

            @pl.when(_is_last_k())
            def _fin():
                o_ref[...] = (acc_ref[...]
                              + r_ref[...].astype(jnp.float32)
                              ).astype(o_ref.dtype)
    else:
        def kernel(a_ref, b_ref, o_ref, acc_ref):
            _accum(a_ref, b_ref, acc_ref)

            @pl.when(_is_last_k())
            def _fin():
                o_ref[...] = acc_ref[...].astype(o_ref.dtype)
    return kernel


def gemm(a, b, *, epilogue="none", scale=None, shift=None, residual=None,
         use_bf16=True, out_dtype=jnp.float32):
    """Tiled, pipelined GEMM with fused epilogue."""
    M, K = a.shape
    Kb, N = b.shape
    assert K == Kb

    # Cast MXU operands in the wrapper so they stream from HBM at bf16 width.
    in_dtype = jnp.bfloat16 if use_bf16 else jnp.float32
    a = a.astype(in_dtype)
    b = b.astype(in_dtype)

    # M: pad to a sublane multiple; N/K: pad lane-dense (multiples of 128).
    tm = min(_TM, _round_up(M, 8))
    Mp = _round_up(M, tm)
    Np = _round_up(N, 128)
    tn = next(t for t in (_TN, 256, 128) if Np % t == 0)
    Kp = _round_up(K, 128)

    single_k = Kp <= _SINGLE_K_MAX
    if single_k:
        tk = Kp
        grid = (Mp // tm, Np // tn)
        a_spec = pl.BlockSpec((tm, tk), lambda i, j: (i, 0))
        b_spec = pl.BlockSpec((tk, tn), lambda i, j: (0, j))
        sv_spec = pl.BlockSpec((1, tn), lambda i, j: (0, j))
        r_spec = pl.BlockSpec((tm, tn), lambda i, j: (i, j))
        o_spec = pl.BlockSpec((tm, tn), lambda i, j: (i, j))
        scratch = []
        semantics = ("parallel", "parallel")
    else:
        tk = next(t for t in (_TK, 256, 128) if Kp % t == 0)
        grid = (Mp // tm, Np // tn, Kp // tk)
        a_spec = pl.BlockSpec((tm, tk), lambda i, j, k: (i, k))
        b_spec = pl.BlockSpec((tk, tn), lambda i, j, k: (k, j))
        sv_spec = pl.BlockSpec((1, tn), lambda i, j, k: (0, j))
        r_spec = pl.BlockSpec((tm, tn), lambda i, j, k: (i, j))
        o_spec = pl.BlockSpec((tm, tn), lambda i, j, k: (i, j))
        scratch = [pltpu.VMEM((tm, tn), jnp.float32)]
        semantics = ("parallel", "parallel", "arbitrary")

    in_specs = [a_spec, b_spec]
    operands = [_pad2(a, Mp, Kp), _pad2(b, Kp, Np)]
    io_aliases = {}
    if epilogue == "bn_relu":
        in_specs += [sv_spec, sv_spec]
        operands += [_pad2(scale.astype(jnp.float32).reshape(1, N), 1, Np),
                     _pad2(shift.astype(jnp.float32).reshape(1, N), 1, Np)]
    elif epilogue == "add":
        in_specs += [r_spec]
        operands += [_pad2(residual.astype(out_dtype), Mp, Np)]
        io_aliases = {2: 0}   # residual buffer donated to / aliased with out

    bytes_accessed = (a.dtype.itemsize * Mp * Kp
                      + b.dtype.itemsize * Kp * Np
                      + 2 * jnp.dtype(out_dtype).itemsize * Mp * Np)
    cost = pl.CostEstimate(flops=2 * Mp * Np * Kp, transcendentals=0,
                           bytes_accessed=bytes_accessed)

    out = pl.pallas_call(
        _make_gemm_kernel(epilogue, use_bf16, single_k),
        out_shape=jax.ShapeDtypeStruct((Mp, Np), out_dtype),
        grid_spec=pltpu.PrefetchScalarGridSpec(
            num_scalar_prefetch=0,
            grid=grid,
            in_specs=in_specs,
            out_specs=o_spec,
            scratch_shapes=scratch),
        compiler_params=pltpu.CompilerParams(
            dimension_semantics=semantics,
            vmem_limit_bytes=_VMEM_LIMIT),
        cost_estimate=cost,
        input_output_aliases=io_aliases,
    )(*operands)
    return out[:M, :N]


# ----------------------------------------------------------------------------
# Glue: im2col patch extraction (indexing only; compute stays in the kernels).
# NOTE: operates on already BN+ReLU'd activations, so zero padding is correct.
# ----------------------------------------------------------------------------
def im2col(x, ksize, stride, padding):
    """x: (N, H, W, C) -> (N, Ho, Wo, ksize*ksize*C), tap-major [ky, kx, cin]."""
    N, H, W, C = x.shape
    xp = jnp.pad(x, ((0, 0), (padding, padding), (padding, padding), (0, 0)))
    Ho = (H + 2 * padding - ksize) // stride + 1
    Wo = (W + 2 * padding - ksize) // stride + 1
    cols = []
    for ky in range(ksize):
        for kx in range(ksize):
            cols.append(xp[:, ky:ky + Ho * stride:stride,
                           kx:kx + Wo * stride:stride, :])
    return jnp.concatenate(cols, axis=-1)


def _flatten_weight(w):
    # PyTorch conv weight (Cout, Cin, kh, kw) -> (kh*kw*Cin, Cout), tap-major.
    cout, cin, kh, kw = w.shape
    return jnp.transpose(w, (2, 3, 1, 0)).reshape(kh * kw * cin, cout)


# ----------------------------------------------------------------------------
# BasicBlock / NetworkBlock in terms of the fused kernels
# ----------------------------------------------------------------------------
def basic_block_apply(x, layer, stride, use_bf16=True):
    scale1, shift1 = layer["bn1"]          # (Cin,)
    scale2, shift2 = layer["bn2"]          # (Cout,)
    w1, w2 = layer["conv1"], layer["conv2"]
    w_sc = layer.get("conv_sc")
    equal_in_out = w_sc is None

    N, H, W, Cin = x.shape
    Cout = w1.shape[0]
    if equal_in_out:
        # Mirrors the PyTorch module's implicit assumption for identity skip.
        assert Cin == Cout and stride == 1, \
            "identity shortcut requires Cin == Cout and stride == 1"
    Ho = (H + 2 - 3) // stride + 1
    Wo = (W + 2 - 3) // stride + 1
    M = N * Ho * Wo

    act_dtype = jnp.bfloat16 if use_bf16 else jnp.float32

    # a1 = relu(bn1(x)) -- once per element, BEFORE padding / im2col.
    a1 = bn_relu(x, scale1, shift1, out_dtype=act_dtype)

    # conv1: 3x3 / stride GEMM with fused bn2+relu epilogue -> a2.
    p1 = im2col(a1, 3, stride, 1).reshape(M, 9 * Cin)
    a2 = gemm(p1, _flatten_weight(w1), epilogue="bn_relu",
              scale=scale2, shift=shift2, use_bf16=use_bf16,
              out_dtype=act_dtype)
    a2 = a2.reshape(N, Ho, Wo, Cout)

    # Residual path.
    if equal_in_out:
        res = x.reshape(M, Cout).astype(jnp.float32)
    else:
        xs = a1[:, ::stride, ::stride, :].reshape(M, Cin)  # 1x1/stride sampling
        res = gemm(xs, _flatten_weight(w_sc), use_bf16=use_bf16,
                   out_dtype=jnp.float32)

    # TODO(synk): drop_rate > 0 dropout masking not implemented (identity here).
    # conv2: 3x3 / 1 GEMM with fused residual add (residual aliased to out).
    p2 = im2col(a2, 3, 1, 1).reshape(M, 9 * Cout)
    out = gemm(p2, _flatten_weight(w2), epilogue="add", residual=res,
               use_bf16=use_bf16, out_dtype=jnp.float32)
    return out.reshape(N, Ho, Wo, Cout)


def network_block_apply(x, layers, strides, use_bf16=True):
    for layer, s in zip(layers, strides):
        x = basic_block_apply(x, layer, s, use_bf16=use_bf16)
    return x


# ----------------------------------------------------------------------------
# Deterministic parameter init (synthetic; shapes match the PyTorch module)
# ----------------------------------------------------------------------------
def init_bn_params(key, c):
    k1, k2, k3, k4 = jax.random.split(key, 4)
    gamma = 1.0 + 0.1 * jax.random.normal(k1, (c,), jnp.float32)
    beta = 0.1 * jax.random.normal(k2, (c,), jnp.float32)
    mean = 0.1 * jax.random.normal(k3, (c,), jnp.float32)
    var = 1.0 + 0.1 * jax.random.uniform(k4, (c,), jnp.float32)
    eps = 1e-5
    scale = gamma / jnp.sqrt(var + eps)
    shift = beta - mean * scale
    return scale, shift


def init_conv(key, cin, cout, k):
    fan = cin * k * k
    return jax.random.normal(key, (cout, cin, k, k), jnp.float32) * (2.0 / fan) ** 0.5


def network_block_init(key, nb_layers, in_planes, out_planes, stride):
    layers, strides = [], []
    for i in range(nb_layers):
        cin = in_planes if i == 0 else out_planes
        s = stride if i == 0 else 1
        key, k0, k1, k2, k3, k4 = jax.random.split(key, 6)
        layer = {
            "bn1": init_bn_params(k0, cin),
            "bn2": init_bn_params(k1, out_planes),
            "conv1": init_conv(k2, cin, out_planes, 3),
            "conv2": init_conv(k3, out_planes, out_planes, 3),
        }
        if cin != out_planes:  # matches PyTorch equalInOut logic
            layer["conv_sc"] = init_conv(k4, cin, out_planes, 1)
        layers.append(layer)
        strides.append(s)
    return layers, tuple(strides)


# ----------------------------------------------------------------------------
# Pure-JAX reference (for correctness check)
# ----------------------------------------------------------------------------
def _conv_ref(x, w, stride, padding):
    return lax.conv_general_dilated(
        x, jnp.transpose(w, (2, 3, 1, 0)),
        window_strides=(stride, stride),
        padding=[(padding, padding), (padding, padding)],
        dimension_numbers=("NHWC", "HWIO", "NHWC"),
        precision=lax.Precision.HIGHEST)


def _basic_block_ref(x, layer, s):
    scale1, shift1 = layer["bn1"]
    scale2, shift2 = layer["bn2"]
    o = jnp.maximum(x * scale1 + shift1, 0.0)
    res = _conv_ref(o, layer["conv_sc"], s, 0) if "conv_sc" in layer else x
    out = _conv_ref(o, layer["conv1"], s, 1)
    out = jnp.maximum(out * scale2 + shift2, 0.0)
    out = _conv_ref(out, layer["conv2"], 1, 1)
    return out + res


if __name__ == "__main__":
    key = jax.random.PRNGKey(0)
    k_x, k_p = jax.random.split(key)

    # NetworkBlock(nb_layers=2, in_planes=4, out_planes=8, block=BasicBlock,
    #              stride=2, drop_rate=0.0)
    N, Cin, H, W = 2, 4, 16, 16
    Cout, nb_layers, stride = 8, 2, 2

    x_nchw = jax.random.normal(k_x, (N, Cin, H, W), jnp.float32)
    x_nhwc = jnp.transpose(x_nchw, (0, 2, 3, 1))

    layers, strides = network_block_init(k_p, nb_layers, Cin, Cout, stride)

    # Pure-JAX (lax.conv) reference.
    ref = x_nhwc
    for layer, s in zip(layers, strides):
        ref = _basic_block_ref(ref, layer, s)
    ref = jax.block_until_ready(ref)

    fwd = jax.jit(network_block_apply, static_argnums=(2, 3))

    # f32 (HIGHEST precision MXU) path: strict semantic check.
    out_f32 = jax.block_until_ready(fwd(x_nhwc, layers, strides, False))
    assert out_f32.shape == (N, H // stride, W // stride, Cout), out_f32.shape
    assert bool(jnp.allclose(out_f32, ref, rtol=1e-3, atol=1e-3)), \
        "f32 path mismatch vs reference"

    # bf16-input / f32-accumulate MXU path (production config): bf16 tolerance.
    out_bf16 = jax.block_until_ready(fwd(x_nhwc, layers, strides, True))
    assert out_bf16.shape == out_f32.shape
    assert bool(jnp.allclose(out_bf16, ref, rtol=5e-2, atol=5e-2)), \
        "bf16 path mismatch vs reference"

    print("KERNEL_OK")
</pallas_src>

<mosaic_0001>
module attributes {stable_mosaic.version = 11 : i64} {
  func.func @_bn_relu_kernel(%arg0: i32, %arg1: memref<8x256xf32, #tpu.memory_space<vmem>>, %arg2: memref<1x256xf32, #tpu.memory_space<vmem>>, %arg3: memref<1x256xf32, #tpu.memory_space<vmem>>, %arg4: memref<8x256xf32, #tpu.memory_space<vmem>>) attributes {dimension_semantics = [#tpu.dimension_semantics<parallel>], iteration_bounds = array<i64: 1>, scalar_prefetch = 0 : i64, scratch_operands = 0 : i64, tpu.core_type = #tpu.core_type<tc>, window_params = [{transform_indices = @transform_0, window_bounds = array<i64: 8, 256>}, {pipeline_mode = #tpu.pipeline_mode<synchronous>, transform_indices = @transform_1, window_bounds = array<i64: 1, 256>}, {pipeline_mode = #tpu.pipeline_mode<synchronous>, transform_indices = @transform_2, window_bounds = array<i64: 1, 256>}, {transform_indices = @transform_3, window_bounds = array<i64: 8, 256>}]} {
    %c0 = arith.constant 0 : index
    %c0_0 = arith.constant 0 : index
    %0 = vector.load %arg1[%c0, %c0_0] : memref<8x256xf32, #tpu.memory_space<vmem>>, vector<8x256xf32>
    %c0_1 = arith.constant 0 : index
    %c0_2 = arith.constant 0 : index
    %1 = vector.load %arg2[%c0_1, %c0_2] : memref<1x256xf32, #tpu.memory_space<vmem>>, vector<1x256xf32>
    %2 = vector.broadcast %1 : vector<1x256xf32> to vector<8x256xf32>
    %3 = arith.mulf %0, %2 : vector<8x256xf32>
    %c0_3 = arith.constant 0 : index
    %c0_4 = arith.constant 0 : index
    %4 = vector.load %arg3[%c0_3, %c0_4] : memref<1x256xf32, #tpu.memory_space<vmem>>, vector<1x256xf32>
    %5 = vector.broadcast %4 : vector<1x256xf32> to vector<8x256xf32>
    %6 = arith.addf %3, %5 : vector<8x256xf32>
    %cst = arith.constant 0.000000e+00 : f32
    %7 = vector.broadcast %cst : f32 to vector<8x256xf32>
    %8 = arith.maximumf %6, %7 : vector<8x256xf32>
    %c0_5 = arith.constant 0 : index
    %c0_6 = arith.constant 0 : index
    %9 = vector.load %arg4[%c0_5, %c0_6] : memref<8x256xf32, #tpu.memory_space<vmem>>, vector<8x256xf32>
    tpu.vector_store %arg4[%c0_5, %c0_6], %8 {strides = array<i32>} : memref<8x256xf32, #tpu.memory_space<vmem>>, vector<8x256xf32>,
    return
  }
  func.func @transform_0(%arg0: i32) -> (i32, i32) {
    %c0_i32 = arith.constant 0 : i32
    %c0_i32_0 = arith.constant 0 : i32
    return %arg0, %c0_i32 : i32, i32
  }
  func.func @transform_1(%arg0: i32) -> (i32, i32) {
    %c0_i32 = arith.constant 0 : i32
    %c0_i32_0 = arith.constant 0 : i32
    %c0_i32_1 = arith.constant 0 : i32
    return %c0_i32, %c0_i32_0 : i32, i32
  }
  func.func @transform_2(%arg0: i32) -> (i32, i32) {
    %c0_i32 = arith.constant 0 : i32
    %c0_i32_0 = arith.constant 0 : i32
    %c0_i32_1 = arith.constant 0 : i32
    return %c0_i32, %c0_i32_0 : i32, i32
  }
  func.func @transform_3(%arg0: i32) -> (i32, i32) {
    %c0_i32 = arith.constant 0 : i32
    %c0_i32_0 = arith.constant 0 : i32
    return %arg0, %c0_i32 : i32, i32
  }
}

module attributes {stable_mosaic.version = 11 : i64} {
  func.func @kernel(%arg0: i32, %arg1: i32, %arg2: memref<128x128xf32, #tpu.memory_space<vmem>>, %arg3: memref<128x128xf32, #tpu.memory_space<vmem>>, %arg4: memref<1x128xf32, #tpu.memory_space<vmem>>, %arg5: memref<1x128xf32, #tpu.memory_space<vmem>>, %arg6: memref<128x128xf32, #tpu.memory_space<vmem>>) attributes {dimension_semantics = [#tpu.dimension_semantics<parallel>, #tpu.dimension_semantics<parallel>], iteration_bounds = array<i64: 1, 1>, scalar_prefetch = 0 : i64, scratch_operands = 0 : i64, tpu.core_type = #tpu.core_type<tc>, window_params = [{transform_indices = @transform_0, window_bounds = array<i64: 128, 128>}, {transform_indices = @transform_1, window_bounds = array<i64: 128, 128>}, {transform_indices = @transform_2, window_bounds = array<i64: 1, 128>}, {transform_indices = @transform_3, window_bounds = array<i64: 1, 128>}, {transform_indices = @transform_4, window_bounds = array<i64: 128, 128>}]} {
    %c0 = arith.constant 0 : index
    %c0_0 = arith.constant 0 : index
    %0 = vector.load %arg2[%c0, %c0_0] : memref<128x128xf32, #tpu.memory_space<vmem>>, vector<128x128xf32>
    %c0_1 = arith.constant 0 : index
    %c0_2 = arith.constant 0 : index
    %1 = vector.load %arg3[%c0_1, %c0_2] : memref<128x128xf32, #tpu.memory_space<vmem>>, vector<128x128xf32>
    %cst = arith.constant dense<0.000000e+00> : vector<128x128xf32>
    %2 = tpu.matmul %0, %1, %cst {dimension_numbers = #tpu.dot_dimension_numbers<[1], [0], [0], [1], [0, 0, 1, 1], [], []>, precision = #tpu.contract_precision<fp32>} : vector<128x128xf32>, vector<128x128xf32>, vector<128x128xf32> -> vector<128x128xf32>
    %c0_3 = arith.constant 0 : index
    %c0_4 = arith.constant 0 : index
    %3 = vector.load %arg4[%c0_3, %c0_4] : memref<1x128xf32, #tpu.memory_space<vmem>>, vector<1x128xf32>
    %4 = vector.broadcast %3 : vector<1x128xf32> to vector<128x128xf32>
    %5 = arith.mulf %2, %4 : vector<128x128xf32>
    %c0_5 = arith.constant 0 : index
    %c0_6 = arith.constant 0 : index
    %6 = vector.load %arg5[%c0_5, %c0_6] : memref<1x128xf32, #tpu.memory_space<vmem>>, vector<1x128xf32>
    %7 = vector.broadcast %6 : vector<1x128xf32> to vector<128x128xf32>
    %8 = arith.addf %5, %7 : vector<128x128xf32>
    %cst_7 = arith.constant 0.000000e+00 : f32
    %9 = vector.broadcast %cst_7 : f32 to vector<128x128xf32>
    %10 = arith.maximumf %8, %9 : vector<128x128xf32>
    %c0_8 = arith.constant 0 : index
    %c0_9 = arith.constant 0 : index
    %11 = vector.load %arg6[%c0_8, %c0_9] : memref<128x128xf32, #tpu.memory_space<vmem>>, vector<128x128xf32>
    tpu.vector_store %arg6[%c0_8, %c0_9], %10 {strides = array<i32>} : memref<128x128xf32, #tpu.memory_space<vmem>>, vector<128x128xf32>,
    return
  }
  func.func @transform_0(%arg0: i32, %arg1: i32) -> (i32, i32) {
    %c0_i32 = arith.constant 0 : i32
    %c0_i32_0 = arith.constant 0 : i32
    return %arg0, %c0_i32 : i32, i32
  }
  func.func @transform_1(%arg0: i32, %arg1: i32) -> (i32, i32) {
    %c0_i32 = arith.constant 0 : i32
    %c0_i32_0 = arith.constant 0 : i32
    return %c0_i32, %arg1 : i32, i32
  }
  func.func @transform_2(%arg0: i32, %arg1: i32) -> (i32, i32) {
    %c0_i32 = arith.constant 0 : i32
    %c0_i32_0 = arith.constant 0 : i32
    return %c0_i32, %arg1 : i32, i32
  }
  func.func @transform_3(%arg0: i32, %arg1: i32) -> (i32, i32) {
    %c0_i32 = arith.constant 0 : i32
    %c0_i32_0 = arith.constant 0 : i32
    return %c0_i32, %arg1 : i32, i32
  }
  func.func @transform_4(%arg0: i32, %arg1: i32) -> (i32, i32) {
    %c0_i32 = arith.constant 0 : i32
    return %arg0, %arg1 : i32, i32
  }
}

module attributes {stable_mosaic.version = 11 : i64} {
  func.func @kernel(%arg0: i32, %arg1: i32, %arg2: memref<128x128xf32, #tpu.memory_space<vmem>>, %arg3: memref<128x128xf32, #tpu.memory_space<vmem>>, %arg4: memref<128x128xf32, #tpu.memory_space<vmem>>) attributes {dimension_semantics = [#tpu.dimension_semantics<parallel>, #tpu.dimension_semantics<parallel>], iteration_bounds = array<i64: 1, 1>, scalar_prefetch = 0 : i64, scratch_operands = 0 : i64, tpu.core_type = #tpu.core_type<tc>, window_params = [{transform_indices = @transform_0, window_bounds = array<i64: 128, 128>}, {transform_indices = @transform_1, window_bounds = array<i64: 128, 128>}, {transform_indices = @transform_2, window_bounds = array<i64: 128, 128>}]} {
    %c0 = arith.constant 0 : index
    %c0_0 = arith.constant 0 : index
    %0 = vector.load %arg2[%c0, %c0_0] : memref<128x128xf32, #tpu.memory_space<vmem>>, vector<128x128xf32>
    %c0_1 = arith.constant 0 : index
    %c0_2 = arith.constant 0 : index
    %1 = vector.load %arg3[%c0_1, %c0_2] : memref<128x128xf32, #tpu.memory_space<vmem>>, vector<128x128xf32>
    %cst = arith.constant dense<0.000000e+00> : vector<128x128xf32>
    %2 = tpu.matmul %0, %1, %cst {dimension_numbers = #tpu.dot_dimension_numbers<[1], [0], [0], [1], [0, 0, 1, 1], [], []>, precision = #tpu.contract_precision<fp32>} : vector<128x128xf32>, vector<128x128xf32>, vector<128x128xf32> -> vector<128x128xf32>
    %c0_3 = arith.constant 0 : index
    %c0_4 = arith.constant 0 : index
    %3 = vector.load %arg4[%c0_3, %c0_4] : memref<128x128xf32, #tpu.memory_space<vmem>>, vector<128x128xf32>
    tpu.vector_store %arg4[%c0_3, %c0_4], %2 {strides = array<i32>} : memref<128x128xf32, #tpu.memory_space<vmem>>, vector<128x128xf32>,
    return
  }
  func.func @transform_0(%arg0: i32, %arg1: i32) -> (i32, i32) {
    %c0_i32 = arith.constant 0 : i32
    %c0_i32_0 = arith.constant 0 : i32
    return %arg0, %c0_i32 : i32, i32
  }
  func.func @transform_1(%arg0: i32, %arg1: i32) -> (i32, i32) {
    %c0_i32 = arith.constant 0 : i32
    %c0_i32_0 = arith.constant 0 : i32
    return %c0_i32, %arg1 : i32, i32
  }
  func.func @transform_2(%arg0: i32, %arg1: i32) -> (i32, i32) {
    %c0_i32 = arith.constant 0 : i32
    return %arg0, %arg1 : i32, i32
  }
}

module attributes {stable_mosaic.version = 11 : i64} {
  func.func @kernel(%arg0: i32, %arg1: i32, %arg2: memref<128x128xf32, #tpu.memory_space<vmem>>, %arg3: memref<128x128xf32, #tpu.memory_space<vmem>>, %arg4: memref<128x128xf32, #tpu.memory_space<vmem>>, %arg5: memref<128x128xf32, #tpu.memory_space<vmem>>) attributes {dimension_semantics = [#tpu.dimension_semantics<parallel>, #tpu.dimension_semantics<parallel>], iteration_bounds = array<i64: 1, 1>, scalar_prefetch = 0 : i64, scratch_operands = 0 : i64, tpu.core_type = #tpu.core_type<tc>, window_params = [{transform_indices = @transform_0, window_bounds = array<i64: 128, 128>}, {transform_indices = @transform_1, window_bounds = array<i64: 128, 128>}, {transform_indices = @transform_2, window_bounds = array<i64: 128, 128>}, {transform_indices = @transform_3, window_bounds = array<i64: 128, 128>}]} {
    %c0 = arith.constant 0 : index
    %c0_0 = arith.constant 0 : index
    %0 = vector.load %arg2[%c0, %c0_0] : memref<128x128xf32, #tpu.memory_space<vmem>>, vector<128x128xf32>
    %c0_1 = arith.constant 0 : index
    %c0_2 = arith.constant 0 : index
    %1 = vector.load %arg3[%c0_1, %c0_2] : memref<128x128xf32, #tpu.memory_space<vmem>>, vector<128x128xf32>
    %cst = arith.constant dense<0.000000e+00> : vector<128x128xf32>
    %2 = tpu.matmul %0, %1, %cst {dimension_numbers = #tpu.dot_dimension_numbers<[1], [0], [0], [1], [0, 0, 1, 1], [], []>, precision = #tpu.contract_precision<fp32>} : vector<128x128xf32>, vector<128x128xf32>, vector<128x128xf32> -> vector<128x128xf32>
    %c0_3 = arith.constant 0 : index
    %c0_4 = arith.constant 0 : index
    %3 = vector.load %arg4[%c0_3, %c0_4] : memref<128x128xf32, #tpu.memory_space<vmem>>, vector<128x128xf32>
    %4 = arith.addf %2, %3 : vector<128x128xf32>
    %c0_5 = arith.constant 0 : index
    %c0_6 = arith.constant 0 : index
    %5 = vector.load %arg5[%c0_5, %c0_6] : memref<128x128xf32, #tpu.memory_space<vmem>>, vector<128x128xf32>
    tpu.vector_store %arg5[%c0_5, %c0_6], %4 {strides = array<i32>} : memref<128x128xf32, #tpu.memory_space<vmem>>, vector<128x128xf32>,
    return
  }
  func.func @transform_0(%arg0: i32, %arg1: i32) -> (i32, i32) {
    %c0_i32 = arith.constant 0 : i32
    %c0_i32_0 = arith.constant 0 : i32
    return %arg0, %c0_i32 : i32, i32
  }
  func.func @transform_1(%arg0: i32, %arg1: i32) -> (i32, i32) {
    %c0_i32 = arith.constant 0 : i32
    %c0_i32_0 = arith.constant 0 : i32
    return %c0_i32, %arg1 : i32, i32
  }
  func.func @transform_2(%arg0: i32, %arg1: i32) -> (i32, i32) {
    %c0_i32 = arith.constant 0 : i32
    return %arg0, %arg1 : i32, i32
  }
  func.func @transform_3(%arg0: i32, %arg1: i32) -> (i32, i32) {
    %c0_i32 = arith.constant 0 : i32
    return %arg0, %arg1 : i32, i32
  }
}

module attributes {stable_mosaic.version = 11 : i64} {
  func.func @_bn_relu_kernel(%arg0: i32, %arg1: memref<8x128xf32, #tpu.memory_space<vmem>>, %arg2: memref<1x128xf32, #tpu.memory_space<vmem>>, %arg3: memref<1x128xf32, #tpu.memory_space<vmem>>, %arg4: memref<8x128xf32, #tpu.memory_space<vmem>>) attributes {dimension_semantics = [#tpu.dimension_semantics<parallel>], iteration_bounds = array<i64: 1>, scalar_prefetch = 0 : i64, scratch_operands = 0 : i64, tpu.core_type = #tpu.core_type<tc>, window_params = [{transform_indices = @transform_0, window_bounds = array<i64: 8, 128>}, {pipeline_mode = #tpu.pipeline_mode<synchronous>, transform_indices = @transform_1, window_bounds = array<i64: 1, 128>}, {pipeline_mode = #tpu.pipeline_mode<synchronous>, transform_indices = @transform_2, window_bounds = array<i64: 1, 128>}, {transform_indices = @transform_3, window_bounds = array<i64: 8, 128>}]} {
    %c0 = arith.constant 0 : index
    %c0_0 = arith.constant 0 : index
    %0 = vector.load %arg1[%c0, %c0_0] : memref<8x128xf32, #tpu.memory_space<vmem>>, vector<8x128xf32>
    %c0_1 = arith.constant 0 : index
    %c0_2 = arith.constant 0 : index
    %1 = vector.load %arg2[%c0_1, %c0_2] : memref<1x128xf32, #tpu.memory_space<vmem>>, vector<1x128xf32>
    %2 = vector.broadcast %1 : vector<1x128xf32> to vector<8x128xf32>
    %3 = arith.mulf %0, %2 : vector<8x128xf32>
    %c0_3 = arith.constant 0 : index
    %c0_4 = arith.constant 0 : index
    %4 = vector.load %arg3[%c0_3, %c0_4] : memref<1x128xf32, #tpu.memory_space<vmem>>, vector<1x128xf32>
    %5 = vector.broadcast %4 : vector<1x128xf32> to vector<8x128xf32>
    %6 = arith.addf %3, %5 : vector<8x128xf32>
    %cst = arith.constant 0.000000e+00 : f32
    %7 = vector.broadcast %cst : f32 to vector<8x128xf32>
    %8 = arith.maximumf %6, %7 : vector<8x128xf32>
    %c0_5 = arith.constant 0 : index
    %c0_6 = arith.constant 0 : index
    %9 = vector.load %arg4[%c0_5, %c0_6] : memref<8x128xf32, #tpu.memory_space<vmem>>, vector<8x128xf32>
    tpu.vector_store %arg4[%c0_5, %c0_6], %8 {strides = array<i32>} : memref<8x128xf32, #tpu.memory_space<vmem>>, vector<8x128xf32>,
    return
  }
  func.func @transform_0(%arg0: i32) -> (i32, i32) {
    %c0_i32 = arith.constant 0 : i32
    %c0_i32_0 = arith.constant 0 : i32
    return %arg0, %c0_i32 : i32, i32
  }
  func.func @transform_1(%arg0: i32) -> (i32, i32) {
    %c0_i32 = arith.constant 0 : i32
    %c0_i32_0 = arith.constant 0 : i32
    %c0_i32_1 = arith.constant 0 : i32
    return %c0_i32, %c0_i32_0 : i32, i32
  }
  func.func @transform_2(%arg0: i32) -> (i32, i32) {
    %c0_i32 = arith.constant 0 : i32
    %c0_i32_0 = arith.constant 0 : i32
    %c0_i32_1 = arith.constant 0 : i32
    return %c0_i32, %c0_i32_0 : i32, i32
  }
  func.func @transform_3(%arg0: i32) -> (i32, i32) {
    %c0_i32 = arith.constant 0 : i32
    %c0_i32_0 = arith.constant 0 : i32
    return %arg0, %c0_i32 : i32, i32
  }
}

</mosaic_0001>

<llo_original>
// kernel: tile.23
$region0: #{tile.23}
  #allocation0 [shape = 's32[1]{0}', space=sflag, size = 0x4, scoped, tag = 'scoped memory for tile.23']
  %s0 = inlined_call_operand.vmem [shape: f32[4], index: 0, kind: input, shape index: {}]
  %s1 = inlined_call_operand.vmem [shape: f32[64,4], index: 1, kind: output, shape index: {}]
  // Predicated region
  $region2: #{tile.23} parent=0 // pred_check
    _
  $region3: #{tile.23} parent=0 // pred_check_branch
    %3 = sbr.rel (0) target = $region5
  $region4: #{tile.23} parent=0 // pred_region
    _
  $region5: #{tile.23} parent=0 // pred_fallthru
    _
  %v4 = vld [vmem:[%s0] ss:$0 sm:$0xff]
  %5 = vst [vmem:[%s1] sm:$0xff] %v4
  %s6 = scalar_lea.vmem %s1, 8
  %7 = vst [vmem:[%s6] sm:$0xff] %v4
  %s8 = scalar_lea.vmem %s1, 16
  %9 = vst [vmem:[%s8] sm:$0xff] %v4
  %s10 = scalar_lea.vmem %s1, 24
  %11 = vst [vmem:[%s10] sm:$0xff] %v4
  %s12 = scalar_lea.vmem %s1, 32
  %13 = vst [vmem:[%s12] sm:$0xff] %v4
  %s14 = scalar_lea.vmem %s1, 40
  %15 = vst [vmem:[%s14] sm:$0xff] %v4
  %s16 = scalar_lea.vmem %s1, 48
  %17 = vst [vmem:[%s16] sm:$0xff] %v4
  %s18 = scalar_lea.vmem %s1, 56
  %19 = vst [vmem:[%s18] sm:$0xff] %v4

// kernel: tile.24
$region0: #{tile.24}
  %s0 = inlined_call_operand.vmem [shape: f32[64,4], index: 0, kind: input, shape index: {}]
  %s1 = inlined_call_operand.vmem [shape: f32[1,256], index: 1, kind: output, shape index: {}]
  $region1: #{tile.24} parent=0
    #allocation0 [shape = 'u8[8192]{0}', space=vmem, size = 0x2000, scoped, tag = 'scoped mem for output reshape']
    %v2 = vld [vmem:[%s0] sm:$0x1]
    %s3 = scalar_lea.vmem %s0, 31
    %v4 = vld [vmem:[%s3] sm:$0x2]
    %vm5 = vcmask 1041409
    %v6 = vsel %vm5, %v4, %v2
    %vm7 = vcmask 31744
    %8 = vst.msk [vmem:[#allocation0] ss:$8 sm:$0x3] %vm7, %v6
    %s9 = scalar_lea.vmem %s0, 31
    %v10 = vld [vmem:[%s9] sm:$0x1]
    %s11 = scalar_lea.vmem %s0, 62
    %v12 = vld [vmem:[%s11] sm:$0x2]
    %vm13 = vcmask 1041409
    %v14 = vsel %vm13, %v12, %v10
    %15 = vrot.lane.b32.xlu0 %v14, 124
    %v16 = vpop.permute.xlu0 %15
    %vm17 = vcmask 1048544
    %18 = vst.msk [vmem:[#allocation0] ss:$8 sm:$0x3] %vm17, %v16
    %s19 = scalar_lea.vmem %s0, 30
    %v20 = vld [vmem:[%s19] sm:$0x1]
    %s21 = scalar_lea.vmem %s0, 61
    %v22 = vld [vmem:[%s21] sm:$0x2]
    %vm23 = vcmask 1041409
    %v24 = vsel %vm23, %v22, %v20
    %25 = vrot.lane.b32.xlu0 %v24, 120
    %v26 = vpop.permute.xlu0 %25
    %vm27 = vcmask 1015744
    %28 = vst.msk [vmem:[#allocation0] ss:$8 sm:$0x3] %vm27, %v26
    %s29 = scalar_lea.vmem %s0, 29
    %v30 = vld [vmem:[%s29] sm:$0x1]
    %s31 = scalar_lea.vmem %s0, 60
    %v32 = vld [vmem:[%s31] sm:$0x2]
    %vm33 = vcmask 1041409
    %v34 = vsel %vm33, %v32, %v30
    %35 = vrot.lane.b32.xlu0 %v34, 116
    %v36 = vpop.permute.xlu0 %35
    %vm37 = vcmask 982944
    %38 = vst.msk [vmem:[#allocation0] ss:$8 sm:$0x3] %vm37, %v36
    %s39 = scalar_lea.vmem %s0, 28
    %v40 = vld [vmem:[%s39] sm:$0x1]
    %s41 = scalar_lea.vmem %s0, 59
    %v42 = vld [vmem:[%s41] sm:$0x2]
    %vm43 = vcmask 1041409
    %v44 = vsel %vm43, %v42, %v40
    %45 = vrot.lane.b32.xlu0 %v44, 112
    %v46 = vpop.permute.xlu0 %45
    %vm47 = vcmask 950144
    %48 = vst.msk [vmem:[#allocation0] ss:$8 sm:$0x3] %vm47, %v46
    %s49 = scalar_lea.vmem %s0, 27
    %v50 = vld [vmem:[%s49] sm:$0x1]
    %s51 = scalar_lea.vmem %s0, 58
    %v52 = vld [vmem:[%s51] sm:$0x2]
    %vm53 = vcmask 1041409
    %v54 = vsel %vm53, %v52, %v50
    %55 = vrot.lane.b32.xlu0 %v54, 108
    %v56 = vpop.permute.xlu0 %55
    %vm57 = vcmask 917344
    %58 = vst.msk [vmem:[#allocation0] ss:$8 sm:$0x3] %vm57, %v56
    %s59 = scalar_lea.vmem %s0, 26
    %v60 = vld [vmem:[%s59] sm:$0x1]
    %s61 = scalar_lea.vmem %s0, 57
    %v62 = vld [vmem:[%s61] sm:$0x2]
    %vm63 = vcmask 1041409
    %v64 = vsel %vm63, %v62, %v60
    %65 = vrot.lane.b32.xlu0 %v64, 104
    %v66 = vpop.permute.xlu0 %65
    %vm67 = vcmask 884544
    %68 = vst.msk [vmem:[#allocation0] ss:$8 sm:$0x3] %vm67, %v66
    %s69 = scalar_lea.vmem %s0, 25
    %v70 = vld [vmem:[%s69] sm:$0x1]
    %s71 = scalar_lea.vmem %s0, 56
    %v72 = vld [vmem:[%s71] sm:$0x2]
    %vm73 = vcmask 1041409
    %v74 = vsel %vm73, %v72, %v70
    %75 = vrot.lane.b32.xlu0 %v74, 100
    %v76 = vpop.permute.xlu0 %75
    %vm77 = vcmask 851744
    %78 = vst.msk [vmem:[#allocation0] ss:$8 sm:$0x3] %vm77, %v76
    %s79 = scalar_lea.vmem %s0, 24
    %v80 = vld [vmem:[%s79] sm:$0x1]
    %s81 = scalar_lea.vmem %s0, 55
    %v82 = vld [vmem:[%s81] sm:$0x2]
    %vm83 = vcmask 1041409
    %v84 = vsel %vm83, %v82, %v80
    %85 = vrot.lane.b32.xlu0 %v84, 96
    %v86 = vpop.permute.xlu0 %85
    %vm87 = vcmask 818944
    %88 = vst.msk [vmem:[#allocation0] ss:$8 sm:$0x3] %vm87, %v86
    %s89 = scalar_lea.vmem %s0, 23
    %v90 = vld [vmem:[%s89] sm:$0x1]
    %s91 = scalar_lea.vmem %s0, 54
    %v92 = vld [vmem:[%s91] sm:$0x2]
    %vm93 = vcmask 1041409
    %v94 = vsel %vm93, %v92, %v90
    %95 = vrot.lane.b32.xlu0 %v94, 92
    %v96 = vpop.permute.xlu0 %95
    %vm97 = vcmask 786144
    %98 = vst.msk [vmem:[#allocation0] ss:$8 sm:$0x3] %vm97, %v96
    %s99 = scalar_lea.vmem %s0, 22
    %v100 = vld [vmem:[%s99] sm:$0x1]
    %s101 = scalar_lea.vmem %s0, 53
    %v102 = vld [vmem:[%s101] sm:$0x2]
    %vm103 = vcmask 1041409
    %v104 = vsel %vm103, %v102, %v100
    %105 = vrot.lane.b32.xlu0 %v104, 88
    %v106 = vpop.permute.xlu0 %105
    %vm107 = vcmask 753344
    %108 = vst.msk [vmem:[#allocation0] ss:$8 sm:$0x3] %vm107, %v106
    %s109 = scalar_lea.vmem %s0, 21
    %v110 = vld [vmem:[%s109] sm:$0x1]
    %s111 = scalar_lea.vmem %s0, 52
    %v112 = vld [vmem:[%s111] sm:$0x2]
    %vm113 = vcmask 1041409
    %v114 = vsel %vm113, %v112, %v110
    %115 = vrot.lane.b32.xlu0 %v114, 84
    %v116 = vpop.permute.xlu0 %115
    %vm117 = vcmask 720544
    %118 = vst.msk [vmem:[#allocation0] ss:$8 sm:$0x3] %vm117, %v116
    %s119 = scalar_lea.vmem %s0, 20
    %v120 = vld [vmem:[%s119] sm:$0x1]
    %s121 = scalar_lea.vmem %s0, 51
    %v122 = vld [vmem:[%s121] sm:$0x2]
    %vm123 = vcmask 1041409
    %v124 = vsel %vm123, %v122, %v120
    %125 = vrot.lane.b32.xlu0 %v124, 80
    %v126 = vpop.permute.xlu0 %125
    %vm127 = vcmask 687744
    %128 = vst.msk [vmem:[#allocation0] ss:$8 sm:$0x3] %vm127, %v126
    %s129 = scalar_lea.vmem %s0, 19
    %v130 = vld [vmem:[%s129] sm:$0x1]
    %s131 = scalar_lea.vmem %s0, 50
    %v132 = vld [vmem:[%s131] sm:$0x2]
    %vm133 = vcmask 1041409
    %v134 = vsel %vm133, %v132, %v130
    %135 = vrot.lane.b32.xlu0 %v134, 76
    %v136 = vpop.permute.xlu0 %135
    %vm137 = vcmask 654944
    %138 = vst.msk [vmem:[#allocation0] ss:$8 sm:$0x3] %vm137, %v136
    %s139 = scalar_lea.vmem %s0, 18
    %v140 = vld [vmem:[%s139] sm:$0x1]
    %s141 = scalar_lea.vmem %s0, 49
    %v142 = vld [vmem:[%s141] sm:$0x2]
    %vm143 = vcmask 1041409
    %v144 = vsel %vm143, %v142, %v140
    %145 = vrot.lane.b32.xlu0 %v144, 72
    %v146 = vpop.permute.xlu0 %145
    %vm147 = vcmask 622144
    %148 = vst.msk [vmem:[#allocation0] ss:$8 sm:$0x3] %vm147, %v146
    %s149 = scalar_lea.vmem %s0, 17
    %v150 = vld [vmem:[%s149] sm:$0x1]
    %s151 = scalar_lea.vmem %s0, 48
    %v152 = vld [vmem:[%s151] sm:$0x2]
    %vm153 = vcmask 1041409
    %v154 = vsel %vm153, %v152, %v150
    %155 = vrot.lane.b32.xlu0 %v154, 68
    %v156 = vpop.permute.xlu0 %155
    %vm157 = vcmask 589344
    %158 = vst.msk [vmem:[#allocation0] ss:$8 sm:$0x3] %vm157, %v156
    %s159 = scalar_lea.vmem %s0, 16
    %v160 = vld [vmem:[%s159] sm:$0x1]
    %s161 = scalar_lea.vmem %s0, 47
    %v162 = vld [vmem:[%s161] sm:$0x2]
    %vm163 = vcmask 1041409
    %v164 = vsel %vm163, %v162, %v160
    %165 = vrot.lane.b32.xlu0 %v164, 64
    %v166 = vpop.permute.xlu0 %165
    %vm167 = vcmask 556544
    %168 = vst.msk [vmem:[#allocation0] ss:$8 sm:$0x3] %vm167, %v166
    %s169 = scalar_lea.vmem %s0, 15
    %v170 = vld [vmem:[%s169] sm:$0x1]
    %s171 = scalar_lea.vmem %s0, 46
    %v172 = vld [vmem:[%s171] sm:$0x2]
    %vm173 = vcmask 1041409
    %v174 = vsel %vm173, %v172, %v170
    %175 = vrot.lane.b32.xlu0 %v174, 60
    %v176 = vpop.permute.xlu0 %175
    %vm177 = vcmask 523744
    %178 = vst.msk [vmem:[#allocation0] ss:$8 sm:$0x3] %vm177, %v176
    %s179 = scalar_lea.vmem %s0, 14
    %v180 = vld [vmem:[%s179] sm:$0x1]
    %s181 = scalar_lea.vmem %s0, 45
    %v182 = vld [vmem:[%s181] sm:$0x2]
    %vm183 = vcmask 1041409
    %v184 = vsel %vm183, %v182, %v180
    %185 = vrot.lane.b32.xlu0 %v184, 56
    %v186 = vpop.permute.xlu0 %185
    %vm187 = vcmask 490944
    %188 = vst.msk [vmem:[#allocation0] ss:$8 sm:$0x3] %vm187, %v186
    %s189 = scalar_lea.vmem %s0, 13
    %v190 = vld [vmem:[%s189] sm:$0x1]
    %s191 = scalar_lea.vmem %s0, 44
    %v192 = vld [vmem:[%s191] sm:$0x2]
    %vm193 = vcmask 1041409
    %v194 = vsel %vm193, %v192, %v190
    %195 = vrot.lane.b32.xlu0 %v194, 52
    %v196 = vpop.permute.xlu0 %195
    %vm197 = vcmask 458144
    %198 = vst.msk [vmem:[#allocation0] ss:$8 sm:$0x3] %vm197, %v196
    %s199 = scalar_lea.vmem %s0, 12
    %v200 = vld [vmem:[%s199] sm:$0x1]
    %s201 = scalar_lea.vmem %s0, 43
    %v202 = vld [vmem:[%s201] sm:$0x2]
    %vm203 = vcmask 1041409
    %v204 = vsel %vm203, %v202, %v200
    %205 = vrot.lane.b32.xlu0 %v204, 48
    %v206 = vpop.permute.xlu0 %205
    %vm207 = vcmask 425344
    %208 = vst.msk [vmem:[#allocation0] ss:$8 sm:$0x3] %vm207, %v206
    %s209 = scalar_lea.vmem %s0, 11
    %v210 = vld [vmem:[%s209] sm:$0x1]
    %s211 = scalar_lea.vmem %s0, 42
    %v212 = vld [vmem:[%s211] sm:$0x2]
    %vm213 = vcmask 1041409
    %v214 = vsel %vm213, %v212, %v210
    %215 = vrot.lane.b32.xlu0 %v214, 44
    %v216 = vpop.permute.xlu0 %215
    %vm217 = vcmask 392544
    %218 = vst.msk [vmem:[#allocation0] ss:$8 sm:$0x3] %vm217, %v216
    %s219 = scalar_lea.vmem %s0, 10
    %v220 = vld [vmem:[%s219] sm:$0x1]
    %s221 = scalar_lea.vmem %s0, 41
    %v222 = vld [vmem:[%s221] sm:$0x2]
    %vm223 = vcmask 1041409
    %v224 = vsel %vm223, %v222, %v220
    %225 = vrot.lane.b32.xlu0 %v224, 40
    %v226 = vpop.permute.xlu0 %225
    %vm227 = vcmask 359744
    %228 = vst.msk [vmem:[#allocation0] ss:$8 sm:$0x3] %vm227, %v226
    %s229 = scalar_lea.vmem %s0, 9
    %v230 = vld [vmem:[%s229] sm:$0x1]
    %s231 = scalar_lea.vmem %s0, 40
    %v232 = vld [vmem:[%s231] sm:$0x2]
    %vm233 = vcmask 1041409
    %v234 = vsel %vm233, %v232, %v230
    %235 = vrot.lane.b32.xlu0 %v234, 36
    %v236 = vpop.permute.xlu0 %235
    %vm237 = vcmask 326944
    %238 = vst.msk [vmem:[#allocation0] ss:$8 sm:$0x3] %vm237, %v236
    %s239 = scalar_lea.vmem %s0, 8
    %v240 = vld [vmem:[%s239] sm:$0x1]
    %s241 = scalar_lea.vmem %s0, 39
    %v242 = vld [vmem:[%s241] sm:$0x2]
    %vm243 = vcmask 1041409
    %v244 = vsel %vm243, %v242, %v240
    %245 = vrot.lane.b32.xlu0 %v244, 32
    %v246 = vpop.permute.xlu0 %245
    %vm247 = vcmask 294144
    %248 = vst.msk [vmem:[#allocation0] ss:$8 sm:$0x3] %vm247, %v246
    %s249 = scalar_lea.vmem %s0, 7
    %v250 = vld [vmem:[%s249] sm:$0x1]
    %s251 = scalar_lea.vmem %s0, 38
    %v252 = vld [vmem:[%s251] sm:$0x2]
    %vm253 = vcmask 1041409
    %v254 = vsel %vm253, %v252, %v250
    %255 = vrot.lane.b32.xlu0 %v254, 28
    %v256 = vpop.permute.xlu0 %255
    %vm257 = vcmask 261344
    %258 = vst.msk [vmem:[#allocation0] ss:$8 sm:$0x3] %vm257, %v256
    %s259 = scalar_lea.vmem %s0, 6
    %v260 = vld [vmem:[%s259] sm:$0x1]
    %s261 = scalar_lea.vmem %s0, 37
    %v262 = vld [vmem:[%s261] sm:$0x2]
    %vm263 = vcmask 1041409
    %v264 = vsel %vm263, %v262, %v260
    %265 = vrot.lane.b32.xlu0 %v264, 24
    %v266 = vpop.permute.xlu0 %265
    %vm267 = vcmask 228544
    %268 = vst.msk [vmem:[#allocation0] ss:$8 sm:$0x3] %vm267, %v266
    %s269 = scalar_lea.vmem %s0, 5
    %v270 = vld [vmem:[%s269] sm:$0x1]
    %s271 = scalar_lea.vmem %s0, 36
    %v272 = vld [vmem:[%s271] sm:$0x2]
    %vm273 = vcmask 1041409
    %v274 = vsel %vm273, %v272, %v270
    %275 = vrot.lane.b32.xlu0 %v274, 20
    %v276 = vpop.permute.xlu0 %275
    %vm277 = vcmask 195744
    %278 = vst.msk [vmem:[#allocation0] ss:$8 sm:$0x3] %vm277, %v276
    %s279 = scalar_lea.vmem %s0, 4
    %v280 = vld [vmem:[%s279] sm:$0x1]
    %s281 = scalar_lea.vmem %s0, 35
    %v282 = vld [vmem:[%s281] sm:$0x2]
    %vm283 = vcmask 1041409
    %v284 = vsel %vm283, %v282, %v280
    %285 = vrot.lane.b32.xlu0 %v284, 16
    %v286 = vpop.permute.xlu0 %285
    %vm287 = vcmask 162944
    %288 = vst.msk [vmem:[#allocation0] ss:$8 sm:$0x3] %vm287, %v286
    %s289 = scalar_lea.vmem %s0, 3
    %v290 = vld [vmem:[%s289] sm:$0x1]
    %s291 = scalar_lea.vmem %s0, 34
    %v292 = vld [vmem:[%s291] sm:$0x2]
    %vm293 = vcmask 1041409
    %v294 = vsel %vm293, %v292, %v290
    %295 = vrot.lane.b32.xlu0 %v294, 12
    %v296 = vpop.permute.xlu0 %295
    %vm297 = vcmask 130144
    %298 = vst.msk [vmem:[#allocation0] ss:$8 sm:$0x3] %vm297, %v296
    %s299 = scalar_lea.vmem %s0, 2
    %v300 = vld [vmem:[%s299] sm:$0x1]
    %s301 = scalar_lea.vmem %s0, 33
    %v302 = vld [vmem:[%s301] sm:$0x2]
    %vm303 = vcmask 1041409
    %v304 = vsel %vm303, %v302, %v300
    %305 = vrot.lane.b32.xlu0 %v304, 8
    %v306 = vpop.permute.xlu0 %305
    %vm307 = vcmask 97344
    %308 = vst.msk [vmem:[#allocation0] ss:$8 sm:$0x3] %vm307, %v306
    %s309 = scalar_lea.vmem %s0, 1
    %v310 = vld [vmem:[%s309] sm:$0x1]
    %s311 = scalar_lea.vmem %s0, 32
    %v312 = vld [vmem:[%s311] sm:$0x2]
    %vm313 = vcmask 1041409
    %v314 = vsel %vm313, %v312, %v310
    %315 = vrot.lane.b32.xlu0 %v314, 4
    %v316 = vpop.permute.xlu0 %315
    %vm317 = vcmask 64544
    %318 = vst.msk [vmem:[#allocation0] ss:$8 sm:$0x3] %vm317, %v316
    %s320 = sshllo.u32 0, 1
    %v322 = vld [vmem:[#allocation0] sm:%s320]
    %s323 = sshllo.u32 0, 1
    %324 = vst [vmem:[%s1] sm:%s323] %v322
    %s325 = scalar_lea.vmem [#allocation0], 8
    %v326 = vld [vmem:[%s325] sm:%s320]
    %s327 = sshllo.u32 0, 1
    %s328 = scalar_lea.vmem %s1, 1
    %329 = vst [vmem:[%s328] sm:%s327] %v326

// kernel: network_block_apply.7
$region0: #{network_block_apply.7}
  #allocation0 [shape = 'u32[]', space=smem, size = 0x4, offset = 0x4, fixed_abs, tag = 'smem constant byte address 0x4 - core index']
  #allocation1 [shape = 'u32[144,128]{1,0:T(1,128)}', space=vmem, size = 0x12000, scoped, tag = 'internal scratch']
  %s0 = inlined_call_operand.vmem [shape: f32[8,256], index: 0, kind: input, shape index: {}]
  %s1 = inlined_call_operand.vmem [shape: f32[1,256], index: 1, kind: input, shape index: {}]
  %s2 = inlined_call_operand.vmem [shape: f32[1,256], index: 2, kind: input, shape index: {}]
  %s3 = inlined_call_operand.vmem [shape: f32[8,256], index: 3, kind: output, shape index: {}]
  %s4 = sld [smem:[#allocation0]]
  $region22: #{network_block_apply.7} parent=0
    _
  %s6 = ssub.s32 1, %s4
  %s7 = scalar_select 0, %s6, %s4
  // Predicated region
  $region2: #{network_block_apply.7} parent=0 // pred_check
    _
  $region3: #{network_block_apply.7} parent=0 // pred_check_branch
    %9 = sbr.rel (0) target = $region5
  $region4: #{network_block_apply.7} parent=0 // pred_region
    _
  $region5: #{network_block_apply.7} parent=0 // pred_fallthru
    _
  // Predicated region
  $region6: #{network_block_apply.7} parent=0 // pred_check
    _
  $region7: #{network_block_apply.7} parent=0 // pred_check_branch
    %11 = sbr.rel (0) target = $region9
  $region8: #{network_block_apply.7} parent=0 // pred_region
    _
  $region9: #{network_block_apply.7} parent=0 // pred_fallthru
    _
  // Predicated region
  $region10: #{network_block_apply.7} parent=0 // pred_check
    _
  $region11: #{network_block_apply.7} parent=0 // pred_check_branch
    %13 = sbr.rel (0) target = $region13
  $region12: #{network_block_apply.7} parent=0 // pred_region
    _
  $region13: #{network_block_apply.7} parent=0 // pred_fallthru
    _
  %v14 = vld [vmem:[%s0] sm:$0xff]
  %v15 = vld [vmem:[%s0 + $0x8] sm:$0xff]
  %v16 = vld [vmem:[%s1] sm:$0x3]
  %v18 = vlaneseq
  %v19 = vshrl.u32 %v18, 7
  %v20 = vsub.s32 0, %v19
  %v21 = vrot.slane %v16, %v20
  %v22 = vlaneseq
  %v23 = vshrl.u32 %v22, 7
  %v24 = vsub.s32 1, %v23
  %v25 = vrot.slane %v16, %v24
  %v28 = vmul.f32 %v14, %v21
  %v29 = vmul.f32 %v15, %v25
  %v30 = vld [vmem:[%s2] sm:$0x3]
  %v32 = vlaneseq
  %v33 = vshrl.u32 %v32, 7
  %v34 = vsub.s32 0, %v33
  %v35 = vrot.slane %v30, %v34
  %v36 = vlaneseq
  %v37 = vshrl.u32 %v36, 7
  %v38 = vsub.s32 1, %v37
  %v39 = vrot.slane %v30, %v38
  %v42 = vadd.f32 %v28, %v35
  %v43 = vadd.f32 %v29, %v39
  %v44 = vmax.f32 %v42, 0.0
  %v45 = vmax.f32 %v43, 0.0
  %46 = vst [vmem:[%s3] sm:$0xff] %v44
  %47 = vst [vmem:[%s3 + $0x8] sm:$0xff] %v45
  // Predicated region
  $region14: #{network_block_apply.7} parent=0 // pred_check
    _
  $region15: #{network_block_apply.7} parent=0 // pred_check_branch
    %49 = sbr.rel (0) target = $region17
  $region16: #{network_block_apply.7} parent=0 // pred_region
    _
  $region17: #{network_block_apply.7} parent=0 // pred_fallthru
    _
  // Predicated region
  $region18: #{network_block_apply.7} parent=0 // pred_check
    _
  $region19: #{network_block_apply.7} parent=0 // pred_check_branch
    %51 = sbr.rel (0) target = $region21
  $region20: #{network_block_apply.7} parent=0 // pred_region
    _
  $region21: #{network_block_apply.7} parent=0 // pred_fallthru
    _

// kernel: tile.33
$region0: #{tile.33}
  #allocation0 [shape = 's32[1]{0}', space=sflag, size = 0x4, scoped, tag = 'scoped memory for tile.33']
  %s0 = inlined_call_operand.vmem [shape: f32[8], index: 0, kind: input, shape index: {}]
  %s1 = inlined_call_operand.vmem [shape: f32[16,8], index: 1, kind: output, shape index: {}]
  // Predicated region
  $region2: #{tile.33} parent=0 // pred_check
    _
  $region3: #{tile.33} parent=0 // pred_check_branch
    %3 = sbr.rel (0) target = $region5
  $region4: #{tile.33} parent=0 // pred_region
    _
  $region5: #{tile.33} parent=0 // pred_fallthru
    _
  %v4 = vld [vmem:[%s0] ss:$0 sm:$0xff]
  %5 = vst [vmem:[%s1] sm:$0xff] %v4
  %s6 = scalar_lea.vmem %s1, 8
  %7 = vst [vmem:[%s6] sm:$0xff] %v4

// kernel: tile.34
$region0: #{tile.34}
  %s0 = inlined_call_operand.vmem [shape: f32[16,8], index: 0, kind: input, shape index: {}]
  %s1 = inlined_call_operand.vmem [shape: f32[1,128], index: 1, kind: output, shape index: {}]
  $region1: #{tile.34} parent=0
    #allocation0 [shape = 'u8[4096]{0}', space=vmem, size = 0x1000, scoped, tag = 'scoped mem for output reshape']
    %v2 = vld [vmem:[%s0] sm:$0x1]
    %vm3 = vcmask 64512
    %4 = vst.msk [vmem:[#allocation0] sm:$0x1] %vm3, %v2
    %s5 = scalar_lea.vmem %s0, 15
    %v6 = vld [vmem:[%s5] sm:$0x1]
    %7 = vrot.lane.b32.xlu0 %v6, 120
    %v8 = vpop.permute.xlu0 %7
    %vm9 = vcmask 1048512
    %10 = vst.msk [vmem:[#allocation0] sm:$0x1] %vm9, %v8
    %s11 = scalar_lea.vmem %s0, 14
    %v12 = vld [vmem:[%s11] sm:$0x1]
    %13 = vrot.lane.b32.xlu0 %v12, 112
    %v14 = vpop.permute.xlu0 %13
    %vm15 = vcmask 982912
    %16 = vst.msk [vmem:[#allocation0] sm:$0x1] %vm15, %v14
    %s17 = scalar_lea.vmem %s0, 13
    %v18 = vld [vmem:[%s17] sm:$0x1]
    %19 = vrot.lane.b32.xlu0 %v18, 104
    %v20 = vpop.permute.xlu0 %19
    %vm21 = vcmask 917312
    %22 = vst.msk [vmem:[#allocation0] sm:$0x1] %vm21, %v20
    %s23 = scalar_lea.vmem %s0, 12
    %v24 = vld [vmem:[%s23] sm:$0x1]
    %25 = vrot.lane.b32.xlu0 %v24, 96
    %v26 = vpop.permute.xlu0 %25
    %vm27 = vcmask 851712
    %28 = vst.msk [vmem:[#allocation0] sm:$0x1] %vm27, %v26
    %s29 = scalar_lea.vmem %s0, 11
    %v30 = vld [vmem:[%s29] sm:$0x1]
    %31 = vrot.lane.b32.xlu0 %v30, 88
    %v32 = vpop.permute.xlu0 %31
    %vm33 = vcmask 786112
    %34 = vst.msk [vmem:[#allocation0] sm:$0x1] %vm33, %v32
    %s35 = scalar_lea.vmem %s0, 10
    %v36 = vld [vmem:[%s35] sm:$0x1]
    %37 = vrot.lane.b32.xlu0 %v36, 80
    %v38 = vpop.permute.xlu0 %37
    %vm39 = vcmask 720512
    %40 = vst.msk [vmem:[#allocation0] sm:$0x1] %vm39, %v38
    %s41 = scalar_lea.vmem %s0, 9
    %v42 = vld [vmem:[%s41] sm:$0x1]
    %43 = vrot.lane.b32.xlu0 %v42, 72
    %v44 = vpop.permute.xlu0 %43
    %vm45 = vcmask 654912
    %46 = vst.msk [vmem:[#allocation0] sm:$0x1] %vm45, %v44
    %s47 = scalar_lea.vmem %s0, 8
    %v48 = vld [vmem:[%s47] sm:$0x1]
    %49 = vrot.lane.b32.xlu0 %v48, 64
    %v50 = vpop.permute.xlu0 %49
    %vm51 = vcmask 589312
    %52 = vst.msk [vmem:[#allocation0] sm:$0x1] %vm51, %v50
    %s53 = scalar_lea.vmem %s0, 7
    %v54 = vld [vmem:[%s53] sm:$0x1]
    %55 = vrot.lane.b32.xlu0 %v54, 56
    %v56 = vpop.permute.xlu0 %55
    %vm57 = vcmask 523712
    %58 = vst.msk [vmem:[#allocation0] sm:$0x1] %vm57, %v56
    %s59 = scalar_lea.vmem %s0, 6
    %v60 = vld [vmem:[%s59] sm:$0x1]
    %61 = vrot.lane.b32.xlu0 %v60, 48
    %v62 = vpop.permute.xlu0 %61
    %vm63 = vcmask 458112
    %64 = vst.msk [vmem:[#allocation0] sm:$0x1] %vm63, %v62
    %s65 = scalar_lea.vmem %s0, 5
    %v66 = vld [vmem:[%s65] sm:$0x1]
    %67 = vrot.lane.b32.xlu0 %v66, 40
    %v68 = vpop.permute.xlu0 %67
    %vm69 = vcmask 392512
    %70 = vst.msk [vmem:[#allocation0] sm:$0x1] %vm69, %v68
    %s71 = scalar_lea.vmem %s0, 4
    %v72 = vld [vmem:[%s71] sm:$0x1]
    %73 = vrot.lane.b32.xlu0 %v72, 32
    %v74 = vpop.permute.xlu0 %73
    %vm75 = vcmask 326912
    %76 = vst.msk [vmem:[#allocation0] sm:$0x1] %vm75, %v74
    %s77 = scalar_lea.vmem %s0, 3
    %v78 = vld [vmem:[%s77] sm:$0x1]
    %79 = vrot.lane.b32.xlu0 %v78, 24
    %v80 = vpop.permute.xlu0 %79
    %vm81 = vcmask 261312
    %82 = vst.msk [vmem:[#allocation0] sm:$0x1] %vm81, %v80
    %s83 = scalar_lea.vmem %s0, 2
    %v84 = vld [vmem:[%s83] sm:$0x1]
    %85 = vrot.lane.b32.xlu0 %v84, 16
    %v86 = vpop.permute.xlu0 %85
    %vm87 = vcmask 195712
    %88 = vst.msk [vmem:[#allocation0] sm:$0x1] %vm87, %v86
    %s89 = scalar_lea.vmem %s0, 1
    %v90 = vld [vmem:[%s89] sm:$0x1]
    %91 = vrot.lane.b32.xlu0 %v90, 8
    %v92 = vpop.permute.xlu0 %91
    %vm93 = vcmask 130112
    %94 = vst.msk [vmem:[#allocation0] sm:$0x1] %vm93, %v92
    %s96 = sshllo.u32 0, 1
    %v98 = vld [vmem:[#allocation0] sm:%s96]
    %s99 = sshllo.u32 0, 1
    %100 = vst [vmem:[%s1] sm:%s99] %v98

// kernel: network_block_apply.9
$region0: #{network_block_apply.9}
  #allocation0 [shape = 'u32[]', space=smem, size = 0x4, offset = 0x4, fixed_abs, tag = 'smem constant byte address 0x4 - core index']
  #allocation1 [shape = 'u32[144,128]{1,0:T(1,128)}', space=vmem, size = 0x12000, scoped, tag = 'internal scratch']
  %s0 = inlined_call_operand.vmem [shape: f32[128,128], index: 0, kind: input, shape index: {}]
  %s1 = inlined_call_operand.vmem [shape: f32[128,128], index: 1, kind: input, shape index: {}]
  %s2 = inlined_call_operand.vmem [shape: f32[128,128], index: 2, kind: output, shape index: {}]
  %s3 = sld [smem:[#allocation0]]
  $region18: #{network_block_apply.9} parent=0
    _
  %s5 = ssub.s32 1, %s3
  %s6 = scalar_select 0, %s5, %s3
  // Predicated region
  $region2: #{network_block_apply.9} parent=0 // pred_check
    _
  $region3: #{network_block_apply.9} parent=0 // pred_check_branch
    %8 = sbr.rel (0) target = $region5
  $region4: #{network_block_apply.9} parent=0 // pred_region
    _
  $region5: #{network_block_apply.9} parent=0 // pred_fallthru
    _
  // Predicated region
  $region6: #{network_block_apply.9} parent=0 // pred_check
    _
  $region7: #{network_block_apply.9} parent=0 // pred_check_branch
    %10 = sbr.rel (0) target = $region9
  $region8: #{network_block_apply.9} parent=0 // pred_region
    _
  $region9: #{network_block_apply.9} parent=0 // pred_fallthru
    _
  %v11 = vld [vmem:[%s0] sm:$0xff]
  %v12 = vld [vmem:[%s0 + $0x8] sm:$0xff]
  %v13 = vld [vmem:[%s0 + $0x10] sm:$0xff]
  %v14 = vld [vmem:[%s0 + $0x18] sm:$0xff]
  %v15 = vld [vmem:[%s0 + $0x20] sm:$0xff]
  %v16 = vld [vmem:[%s0 + $0x28] sm:$0xff]
  %v17 = vld [vmem:[%s0 + $0x30] sm:$0xff]
  %v18 = vld [vmem:[%s0 + $0x38] sm:$0xff]
  %v19 = vld [vmem:[%s0 + $0x40] sm:$0xff]
  %v20 = vld [vmem:[%s0 + $0x48] sm:$0xff]
  %v21 = vld [vmem:[%s0 + $0x50] sm:$0xff]
  %v22 = vld [vmem:[%s0 + $0x58] sm:$0xff]
  %v23 = vld [vmem:[%s0 + $0x60] sm:$0xff]
  %v24 = vld [vmem:[%s0 + $0x68] sm:$0xff]
  %v25 = vld [vmem:[%s0 + $0x70] sm:$0xff]
  %v26 = vld [vmem:[%s0 + $0x78] sm:$0xff]
  %v27 = vld [vmem:[%s1] sm:$0xff]
  %v28 = vld [vmem:[%s1 + $0x8] sm:$0xff]
  %v29 = vld [vmem:[%s1 + $0x10] sm:$0xff]
  %v30 = vld [vmem:[%s1 + $0x18] sm:$0xff]
  %v31 = vld [vmem:[%s1 + $0x20] sm:$0xff]
  %v32 = vld [vmem:[%s1 + $0x28] sm:$0xff]
  %v33 = vld [vmem:[%s1 + $0x30] sm:$0xff]
  %v34 = vld [vmem:[%s1 + $0x38] sm:$0xff]
  %v35 = vld [vmem:[%s1 + $0x40] sm:$0xff]
  %v36 = vld [vmem:[%s1 + $0x48] sm:$0xff]
  %v37 = vld [vmem:[%s1 + $0x50] sm:$0xff]
  %v38 = vld [vmem:[%s1 + $0x58] sm:$0xff]
  %v39 = vld [vmem:[%s1 + $0x60] sm:$0xff]
  %v40 = vld [vmem:[%s1 + $0x68] sm:$0xff]
  %v41 = vld [vmem:[%s1 + $0x70] sm:$0xff]
  %v42 = vld [vmem:[%s1 + $0x78] sm:$0xff]
  %43 = vmatprep.subr.mxu0 0.0
  %v44 = vand.u32 %v27, 4294901760
  %45 = vmatpush1.msra.mxu0 %v44
  %46 = vmatprep.subr.mxu0 0.0
  %v47 = vand.u32 %v28, 4294901760
  %48 = vmatpush1.msra.mxu0 %v47
  %49 = vmatprep.subr.mxu0 0.0
  %v50 = vand.u32 %v29, 4294901760
  %51 = vmatpush1.msra.mxu0 %v50
  %52 = vmatprep.subr.mxu0 0.0
  %v53 = vand.u32 %v30, 4294901760
  %54 = vmatpush1.msra.mxu0 %v53
  %55 = vmatprep.subr.mxu0 0.0
  %v56 = vand.u32 %v31, 4294901760
  %57 = vmatpush1.msra.mxu0 %v56
  %58 = vmatprep.subr.mxu0 0.0
  %v59 = vand.u32 %v32, 4294901760
  %60 = vmatpush1.msra.mxu0 %v59
  %61 = vmatprep.subr.mxu0 0.0
  %v62 = vand.u32 %v33, 4294901760
  %63 = vmatpush1.msra.mxu0 %v62
  %64 = vmatprep.subr.mxu0 0.0
  %v65 = vand.u32 %v34, 4294901760
  %66 = vmatpush1.msra.mxu0 %v65
  %67 = vmatprep.subr.mxu0 0.0
  %v68 = vand.u32 %v35, 4294901760
  %69 = vmatpush1.msra.mxu0 %v68
  %70 = vmatprep.subr.mxu0 0.0
  %v71 = vand.u32 %v36, 4294901760
  %72 = vmatpush1.msra.mxu0 %v71
  %73 = vmatprep.subr.mxu0 0.0
  %v74 = vand.u32 %v37, 4294901760
  %75 = vmatpush1.msra.mxu0 %v74
  %76 = vmatprep.subr.mxu0 0.0
  %v77 = vand.u32 %v38, 4294901760
  %78 = vmatpush1.msra.mxu0 %v77
  %79 = vmatprep.subr.mxu0 0.0
  %v80 = vand.u32 %v39, 4294901760
  %81 = vmatpush1.msra.mxu0 %v80
  %82 = vmatprep.subr.mxu0 0.0
  %v83 = vand.u32 %v40, 4294901760
  %84 = vmatpush1.msra.mxu0 %v83
  %85 = vmatprep.subr.mxu0 0.0
  %v86 = vand.u32 %v41, 4294901760
  %87 = vmatpush1.msra.mxu0 %v86
  %88 = vmatprep.subr.mxu0 0.0
  %v89 = vand.u32 %v42, 4294901760
  %90 = vmatpush1.msra.mxu0 %v89
  %91 = vmatprep.subr.mxu0 0.0
  %92 = vmatpush1.msra.mxu0 0.0
  %93 = vmatprep.subr.mxu0 0.0
  %94 = vmatpush1.msra.mxu0 0.0
  %95 = vmatprep.subr.mxu0 0.0
  %96 = vmatpush1.msra.mxu0 0.0
  %97 = vmatprep.subr.mxu0 0.0
  %98 = vmatpush1.msra.mxu0 0.0
  %99 = vmatprep.subr.mxu0 0.0
  %100 = vmatpush1.msra.mxu0 0.0
  %101 = vmatprep.subr.mxu0 0.0
  %102 = vmatpush1.msra.mxu0 0.0
  %103 = vmatprep.subr.mxu0 0.0
  %104 = vmatpush1.msra.mxu0 0.0
  %105 = vmatprep.subr.mxu0 0.0
  %106 = vmatpush1.msra.mxu0 0.0
  %107 = vmatprep.subr.mxu0 0.0
  %108 = vmatpush1.msra.mxu0 0.0
  %109 = vmatprep.subr.mxu0 0.0
  %110 = vmatpush1.msra.mxu0 0.0
  %111 = vmatprep.subr.mxu0 0.0
  %112 = vmatpush1.msra.mxu0 0.0
  %113 = vmatprep.subr.mxu0 0.0
  %114 = vmatpush1.msra.mxu0 0.0
  %115 = vmatprep.subr.mxu0 0.0
  %116 = vmatpush1.msra.mxu0 0.0
  %117 = vmatprep.subr.mxu0 0.0
  %118 = vmatpush1.msra.mxu0 0.0
  %119 = vmatprep.subr.mxu0 0.0
  %120 = vmatpush1.msra.mxu0 0.0
  %121 = vmatprep.subr.mxu0 0.0
  %122 = vmatpush1.msra.mxu0 0.0
  %123 = vmatprep.mubr.f32.mxu0 0.0
  %v124 = vand.u32 %v11, 4294901760
  %v125 = vsub.f32 %v11, %v124
  %v126 = vand.u32 %v125, 4294901760
  %v127 = vsub.f32 %v125, %v126
  %v128 = vand.u32 %v127, 4294901760
  %129 = vmatmul.mubr.f32.gmra.mrb[0].mxu0 %v128
  %v130 = vpop.f32.mrb[0].mxu0
  %v131 = vadd.f32 0.0, %v130
  %v132 = vpop.f32.mrb[0].mxu0
  %133 = vmatprep.mubr.f32.mxu0 0.0
  %v134 = vand.u32 %v12, 4294901760
  %v135 = vsub.f32 %v12, %v134
  %v136 = vand.u32 %v135, 4294901760
  %v137 = vsub.f32 %v135, %v136
  %v138 = vand.u32 %v137, 4294901760
  %139 = vmatmul.mubr.f32.gmra.mrb[0].mxu0 %v138
  %v140 = vpop.f32.mrb[0].mxu0
  %v141 = vadd.f32 0.0, %v140
  %v142 = vpop.f32.mrb[0].mxu0
  %143 = vmatprep.mubr.f32.mxu0 0.0
  %v144 = vand.u32 %v13, 4294901760
  %v145 = vsub.f32 %v13, %v144
  %v146 = vand.u32 %v145, 4294901760
  %v147 = vsub.f32 %v145, %v146
  %v148 = vand.u32 %v147, 4294901760
  %149 = vmatmul.mubr.f32.gmra.mrb[0].mxu0 %v148
  %v150 = vpop.f32.mrb[0].mxu0
  %v151 = vadd.f32 0.0, %v150
  %v152 = vpop.f32.mrb[0].mxu0
  %153 = vmatprep.mubr.f32.mxu0 0.0
  %v154 = vand.u32 %v14, 4294901760
  %v155 = vsub.f32 %v14, %v154
  %v156 = vand.u32 %v155, 4294901760
  %v157 = vsub.f32 %v155, %v156
  %v158 = vand.u32 %v157, 4294901760
  %159 = vmatmul.mubr.f32.gmra.mrb[0].mxu0 %v158
  %v160 = vpop.f32.mrb[0].mxu0
  %v161 = vadd.f32 0.0, %v160
  %v162 = vpop.f32.mrb[0].mxu0
  %163 = vmatprep.mubr.f32.mxu0 0.0
  %v164 = vand.u32 %v15, 4294901760
  %v165 = vsub.f32 %v15, %v164
  %v166 = vand.u32 %v165, 4294901760
  %v167 = vsub.f32 %v165, %v166
  %v168 = vand.u32 %v167, 4294901760
  %169 = vmatmul.mubr.f32.gmra.mrb[0].mxu0 %v168
  %v170 = vpop.f32.mrb[0].mxu0
  %v171 = vadd.f32 0.0, %v170
  %v172 = vpop.f32.mrb[0].mxu0
  %173 = vmatprep.mubr.f32.mxu0 0.0
  %v174 = vand.u32 %v16, 4294901760
  %v175 = vsub.f32 %v16, %v174
  %v176 = vand.u32 %v175, 4294901760
  %v177 = vsub.f32 %v175, %v176
  %v178 = vand.u32 %v177, 4294901760
  %179 = vmatmul.mubr.f32.gmra.mrb[0].mxu0 %v178
  %v180 = vpop.f32.mrb[0].mxu0
  %v181 = vadd.f32 0.0, %v180
  %v182 = vpop.f32.mrb[0].mxu0
  %183 = vmatprep.mubr.f32.mxu0 0.0
  %v184 = vand.u32 %v17, 4294901760
  %v185 = vsub.f32 %v17, %v184
  %v186 = vand.u32 %v185, 4294901760
  %v187 = vsub.f32 %v185, %v186
  %v188 = vand.u32 %v187, 4294901760
  %189 = vmatmul.mubr.f32.gmra.mrb[0].mxu0 %v188
  %v190 = vpop.f32.mrb[0].mxu0
  %v191 = vadd.f32 0.0, %v190
  %v192 = vpop.f32.mrb[0].mxu0
  %193 = vmatprep.mubr.f32.mxu0 0.0
  %v194 = vand.u32 %v18, 4294901760
  %v195 = vsub.f32 %v18, %v194
  %v196 = vand.u32 %v195, 4294901760
  %v197 = vsub.f32 %v195, %v196
  %v198 = vand.u32 %v197, 4294901760
  %199 = vmatmul.mubr.f32.gmra.mrb[0].mxu0 %v198
  %v200 = vpop.f32.mrb[0].mxu0
  %v201 = vadd.f32 0.0, %v200
  %v202 = vpop.f32.mrb[0].mxu0
  %203 = vmatprep.mubr.f32.mxu0 0.0
  %v204 = vand.u32 %v19, 4294901760
  %v205 = vsub.f32 %v19, %v204
  %v206 = vand.u32 %v205, 4294901760
  %v207 = vsub.f32 %v205, %v206
  %v208 = vand.u32 %v207, 4294901760
  %209 = vmatmul.mubr.f32.gmra.mrb[0].mxu0 %v208
  %v210 = vpop.f32.mrb[0].mxu0
  %v211 = vadd.f32 0.0, %v210
  %v212 = vpop.f32.mrb[0].mxu0
  %213 = vmatprep.mubr.f32.mxu0 0.0
  %v214 = vand.u32 %v20, 4294901760
  %v215 = vsub.f32 %v20, %v214
  %v216 = vand.u32 %v215, 4294901760
  %v217 = vsub.f32 %v215, %v216
  %v218 = vand.u32 %v217, 4294901760
  %219 = vmatmul.mubr.f32.gmra.mrb[0].mxu0 %v218
  %v220 = vpop.f32.mrb[0].mxu0
  %v221 = vadd.f32 0.0, %v220
  %v222 = vpop.f32.mrb[0].mxu0
  %223 = vmatprep.mubr.f32.mxu0 0.0
  %v224 = vand.u32 %v21, 4294901760
  %v225 = vsub.f32 %v21, %v224
  %v226 = vand.u32 %v225, 4294901760
  %v227 = vsub.f32 %v225, %v226
  %v228 = vand.u32 %v227, 4294901760
  %229 = vmatmul.mubr.f32.gmra.mrb[0].mxu0 %v228
  %v230 = vpop.f32.mrb[0].mxu0
  %v231 = vadd.f32 0.0, %v230
  %v232 = vpop.f32.mrb[0].mxu0
  %233 = vmatprep.mubr.f32.mxu0 0.0
  %v234 = vand.u32 %v22, 4294901760
  %v235 = vsub.f32 %v22, %v234
  %v236 = vand.u32 %v235, 4294901760
  %v237 = vsub.f32 %v235, %v236
  %v238 = vand.u32 %v237, 4294901760
  %239 = vmatmul.mubr.f32.gmra.mrb[0].mxu0 %v238
  %v240 = vpop.f32.mrb[0].mxu0
  %v241 = vadd.f32 0.0, %v240
  %v242 = vpop.f32.mrb[0].mxu0
  %243 = vmatprep.mubr.f32.mxu0 0.0
  %v244 = vand.u32 %v23, 4294901760
  %v245 = vsub.f32 %v23, %v244
  %v246 = vand.u32 %v245, 4294901760
  %v247 = vsub.f32 %v245, %v246
  %v248 = vand.u32 %v247, 4294901760
  %249 = vmatmul.mubr.f32.gmra.mrb[0].mxu0 %v248
  %v250 = vpop.f32.mrb[0].mxu0
  %v251 = vadd.f32 0.0, %v250
  %v252 = vpop.f32.mrb[0].mxu0
  %253 = vmatprep.mubr.f32.mxu0 0.0
  %v254 = vand.u32 %v24, 4294901760
  %v255 = vsub.f32 %v24, %v254
  %v256 = vand.u32 %v255, 4294901760
  %v257 = vsub.f32 %v255, %v256
  %v258 = vand.u32 %v257, 4294901760
  %259 = vmatmul.mubr.f32.gmra.mrb[0].mxu0 %v258
  %v260 = vpop.f32.mrb[0].mxu0
  %v261 = vadd.f32 0.0, %v260
  %v262 = vpop.f32.mrb[0].mxu0
  %263 = vmatprep.mubr.f32.mxu0 0.0
  %v264 = vand.u32 %v25, 4294901760
  %v265 = vsub.f32 %v25, %v264
  %v266 = vand.u32 %v265, 4294901760
  %v267 = vsub.f32 %v265, %v266
  %v268 = vand.u32 %v267, 4294901760
  %269 = vmatmul.mubr.f32.gmra.mrb[0].mxu0 %v268
  %v270 = vpop.f32.mrb[0].mxu0
  %v271 = vadd.f32 0.0, %v270
  %v272 = vpop.f32.mrb[0].mxu0
  %273 = vmatprep.mubr.f32.mxu0 0.0
  %v274 = vand.u32 %v26, 4294901760
  %v275 = vsub.f32 %v26, %v274
  %v276 = vand.u32 %v275, 4294901760
  %v277 = vsub.f32 %v275, %v276
  %v278 = vand.u32 %v277, 4294901760
  %279 = vmatmul.mubr.f32.gmra.mrb[0].mxu0 %v278
  %v280 = vpop.f32.mrb[0].mxu0
  %v281 = vadd.f32 0.0, %v280
  %v282 = vpop.f32.mrb[0].mxu0
  %283 = vdwg.mxu0
  %284 = vmatprep.subr.mxu0 0.0
  %v285 = vand.u32 %v27, 4294901760
  %v286 = vsub.f32 %v27, %v285
  %v287 = vand.u32 %v286, 4294901760
  %v288 = vsub.f32 %v286, %v287
  %v289 = vand.u32 %v288, 4294901760
  %290 = vmatpush1.msra.mxu0 %v289
  %291 = vmatprep.subr.mxu0 0.0
  %v292 = vand.u32 %v28, 4294901760
  %v293 = vsub.f32 %v28, %v292
  %v294 = vand.u32 %v293, 4294901760
  %v295 = vsub.f32 %v293, %v294
  %v296 = vand.u32 %v295, 4294901760
  %297 = vmatpush1.msra.mxu0 %v296
  %298 = vmatprep.subr.mxu0 0.0
  %v299 = vand.u32 %v29, 4294901760
  %v300 = vsub.f32 %v29, %v299
  %v301 = vand.u32 %v300, 4294901760
  %v302 = vsub.f32 %v300, %v301
  %v303 = vand.u32 %v302, 4294901760
  %304 = vmatpush1.msra.mxu0 %v303
  %305 = vmatprep.subr.mxu0 0.0
  %v306 = vand.u32 %v30, 4294901760
  %v307 = vsub.f32 %v30, %v306
  %v308 = vand.u32 %v307, 4294901760
  %v309 = vsub.f32 %v307, %v308
  %v310 = vand.u32 %v309, 4294901760
  %311 = vmatpush1.msra.mxu0 %v310
  %312 = vmatprep.subr.mxu0 0.0
  %v313 = vand.u32 %v31, 4294901760
  %v314 = vsub.f32 %v31, %v313
  %v315 = vand.u32 %v314, 4294901760
  %v316 = vsub.f32 %v314, %v315
  %v317 = vand.u32 %v316, 4294901760
  %318 = vmatpush1.msra.mxu0 %v317
  %319 = vmatprep.subr.mxu0 0.0
  %v320 = vand.u32 %v32, 4294901760
  %v321 = vsub.f32 %v32, %v320
  %v322 = vand.u32 %v321, 4294901760
  %v323 = vsub.f32 %v321, %v322
  %v324 = vand.u32 %v323, 4294901760
  %325 = vmatpush1.msra.mxu0 %v324
  %326 = vmatprep.subr.mxu0 0.0
  %v327 = vand.u32 %v33, 4294901760
  %v328 = vsub.f32 %v33, %v327
  %v329 = vand.u32 %v328, 4294901760
  %v330 = vsub.f32 %v328, %v329
  %v331 = vand.u32 %v330, 4294901760
  %332 = vmatpush1.msra.mxu0 %v331
  %333 = vmatprep.subr.mxu0 0.0
  %v334 = vand.u32 %v34, 4294901760
  %v335 = vsub.f32 %v34, %v334
  %v336 = vand.u32 %v335, 4294901760
  %v337 = vsub.f32 %v335, %v336
  %v338 = vand.u32 %v337, 4294901760
  %339 = vmatpush1.msra.mxu0 %v338
  %340 = vmatprep.subr.mxu0 0.0
  %v341 = vand.u32 %v35, 4294901760
  %v342 = vsub.f32 %v35, %v341
  %v343 = vand.u32 %v342, 4294901760
  %v344 = vsub.f32 %v342, %v343
  %v345 = vand.u32 %v344, 4294901760
  %346 = vmatpush1.msra.mxu0 %v345
  %347 = vmatprep.subr.mxu0 0.0
  %v348 = vand.u32 %v36, 4294901760
  %v349 = vsub.f32 %v36, %v348
  %v350 = vand.u32 %v349, 4294901760
  %v351 = vsub.f32 %v349, %v350
  %v352 = vand.u32 %v351, 4294901760
  %353 = vmatpush1.msra.mxu0 %v352
  %354 = vmatprep.subr.mxu0 0.0
  %v355 = vand.u32 %v37, 4294901760
  %v356 = vsub.f32 %v37, %v355
  %v357 = vand.u32 %v356, 4294901760
  %v358 = vsub.f32 %v356, %v357
  %v359 = vand.u32 %v358, 4294901760
  %360 = vmatpush1.msra.mxu0 %v359
  %361 = vmatprep.subr.mxu0 0.0
  %v362 = vand.u32 %v38, 4294901760
  %v363 = vsub.f32 %v38, %v362
  %v364 = vand.u32 %v363, 4294901760
  %v365 = vsub.f32 %v363, %v364
  %v366 = vand.u32 %v365, 4294901760
  %367 = vmatpush1.msra.mxu0 %v366
  %368 = vmatprep.subr.mxu0 0.0
  %v369 = vand.u32 %v39, 4294901760
  %v370 = vsub.f32 %v39, %v369
  %v371 = vand.u32 %v370, 4294901760
  %v372 = vsub.f32 %v370, %v371
  %v373 = vand.u32 %v372, 4294901760
  %374 = vmatpush1.msra.mxu0 %v373
  %375 = vmatprep.subr.mxu0 0.0
  %v376 = vand.u32 %v40, 4294901760
  %v377 = vsub.f32 %v40, %v376
  %v378 = vand.u32 %v377, 4294901760
  %v379 = vsub.f32 %v377, %v378
  %v380 = vand.u32 %v379, 4294901760
  %381 = vmatpush1.msra.mxu0 %v380
  %382 = vmatprep.subr.mxu0 0.0
  %v383 = vand.u32 %v41, 4294901760
  %v384 = vsub.f32 %v41, %v383
  %v385 = vand.u32 %v384, 4294901760
  %v386 = vsub.f32 %v384, %v385
  %v387 = vand.u32 %v386, 4294901760
  %388 = vmatpush1.msra.mxu0 %v387
  %389 = vmatprep.subr.mxu0 0.0
  %v390 = vand.u32 %v42, 4294901760
  %v391 = vsub.f32 %v42, %v390
  %v392 = vand.u32 %v391, 4294901760
  %v393 = vsub.f32 %v391, %v392
  %v394 = vand.u32 %v393, 4294901760
  %395 = vmatpush1.msra.mxu0 %v394
  %396 = vmatprep.subr.mxu0 0.0
  %397 = vmatpush1.msra.mxu0 0.0
  %398 = vmatprep.subr.mxu0 0.0
  %399 = vmatpush1.msra.mxu0 0.0
  %400 = vmatprep.subr.mxu0 0.0
  %401 = vmatpush1.msra.mxu0 0.0
  %402 = vmatprep.subr.mxu0 0.0
  %403 = vmatpush1.msra.mxu0 0.0
  %404 = vmatprep.subr.mxu0 0.0
  %405 = vmatpush1.msra.mxu0 0.0
  %406 = vmatprep.subr.mxu0 0.0
  %407 = vmatpush1.msra.mxu0 0.0
  %408 = vmatprep.subr.mxu0 0.0
  %409 = vmatpush1.msra.mxu0 0.0
  %410 = vmatprep.subr.mxu0 0.0
  %411 = vmatpush1.msra.mxu0 0.0
  %412 = vmatprep.subr.mxu0 0.0
  %413 = vmatpush1.msra.mxu0 0.0
  %414 = vmatprep.subr.mxu0 0.0
  %415 = vmatpush1.msra.mxu0 0.0
  %416 = vmatprep.subr.mxu0 0.0
  %417 = vmatpush1.msra.mxu0 0.0
  %418 = vmatprep.subr.mxu0 0.0
  %419 = vmatpush1.msra.mxu0 0.0
  %420 = vmatprep.subr.mxu0 0.0
  %421 = vmatpush1.msra.mxu0 0.0
  %422 = vmatprep.subr.mxu0 0.0
  %423 = vmatpush1.msra.mxu0 0.0
  %424 = vmatprep.subr.mxu0 0.0
  %425 = vmatpush1.msra.mxu0 0.0
  %426 = vmatprep.subr.mxu0 0.0
  %427 = vmatpush1.msra.mxu0 0.0
  %428 = vmatprep.mubr.f32.mxu0 0.0
  %v429 = vand.u32 %v11, 4294901760
  %430 = vmatmul.mubr.f32.gmra.mrb[0].mxu0 %v429
  %v431 = vpop.f32.mrb[0].mxu0
  %v432 = vadd.f32 %v131, %v431
  %v433 = vpop.f32.mrb[0].mxu0
  %434 = vmatprep.mubr.f32.mxu0 0.0
  %v435 = vand.u32 %v12, 4294901760
  %436 = vmatmul.mubr.f32.gmra.mrb[0].mxu0 %v435
  %v437 = vpop.f32.mrb[0].mxu0
  %v438 = vadd.f32 %v141, %v437
  %v439 = vpop.f32.mrb[0].mxu0
  %440 = vmatprep.mubr.f32.mxu0 0.0
  %v441 = vand.u32 %v13, 4294901760
  %442 = vmatmul.mubr.f32.gmra.mrb[0].mxu0 %v441
  %v443 = vpop.f32.mrb[0].mxu0
  %v444 = vadd.f32 %v151, %v443
  %v445 = vpop.f32.mrb[0].mxu0
  %446 = vmatprep.mubr.f32.mxu0 0.0
  %v447 = vand.u32 %v14, 4294901760
  %448 = vmatmul.mubr.f32.gmra.mrb[0].mxu0 %v447
  %v449 = vpop.f32.mrb[0].mxu0
  %v450 = vadd.f32 %v161, %v449
  %v451 = vpop.f32.mrb[0].mxu0
  %452 = vmatprep.mubr.f32.mxu0 0.0
  %v453 = vand.u32 %v15, 4294901760
  %454 = vmatmul.mubr.f32.gmra.mrb[0].mxu0 %v453
  %v455 = vpop.f32.mrb[0].mxu0
  %v456 = vadd.f32 %v171, %v455
  %v457 = vpop.f32.mrb[0].mxu0
  %458 = vmatprep.mubr.f32.mxu0 0.0
  %v459 = vand.u32 %v16, 4294901760
  %460 = vmatmul.mubr.f32.gmra.mrb[0].mxu0 %v459
  %v461 = vpop.f32.mrb[0].mxu0
  %v462 = vadd.f32 %v181, %v461
  %v463 = vpop.f32.mrb[0].mxu0
  %464 = vmatprep.mubr.f32.mxu0 0.0
  %v465 = vand.u32 %v17, 4294901760
  %466 = vmatmul.mubr.f32.gmra.mrb[0].mxu0 %v465
  %v467 = vpop.f32.mrb[0].mxu0
  %v468 = vadd.f32 %v191, %v467
  %v469 = vpop.f32.mrb[0].mxu0
  %470 = vmatprep.mubr.f32.mxu0 0.0
  %v471 = vand.u32 %v18, 4294901760
  %472 = vmatmul.mubr.f32.gmra.mrb[0].mxu0 %v471
  %v473 = vpop.f32.mrb[0].mxu0
  %v474 = vadd.f32 %v201, %v473
  %v475 = vpop.f32.mrb[0].mxu0
  %476 = vmatprep.mubr.f32.mxu0 0.0
  %v477 = vand.u32 %v19, 4294901760
  %478 = vmatmul.mubr.f32.gmra.mrb[0].mxu0 %v477
  %v479 = vpop.f32.mrb[0].mxu0
  %v480 = vadd.f32 %v211, %v479
  %v481 = vpop.f32.mrb[0].mxu0
  %482 = vmatprep.mubr.f32.mxu0 0.0
  %v483 = vand.u32 %v20, 4294901760
  %484 = vmatmul.mubr.f32.gmra.mrb[0].mxu0 %v483
  %v485 = vpop.f32.mrb[0].mxu0
  %v486 = vadd.f32 %v221, %v485
  %v487 = vpop.f32.mrb[0].mxu0
  %488 = vmatprep.mubr.f32.mxu0 0.0
  %v489 = vand.u32 %v21, 4294901760
  %490 = vmatmul.mubr.f32.gmra.mrb[0].mxu0 %v489
  %v491 = vpop.f32.mrb[0].mxu0
  %v492 = vadd.f32 %v231, %v491
  %v493 = vpop.f32.mrb[0].mxu0
  %494 = vmatprep.mubr.f32.mxu0 0.0
  %v495 = vand.u32 %v22, 4294901760
  %496 = vmatmul.mubr.f32.gmra.mrb[0].mxu0 %v495
  %v497 = vpop.f32.mrb[0].mxu0
  %v498 = vadd.f32 %v241, %v497
  %v499 = vpop.f32.mrb[0].mxu0
  %500 = vmatprep.mubr.f32.mxu0 0.0
  %v501 = vand.u32 %v23, 4294901760
  %502 = vmatmul.mubr.f32.gmra.mrb[0].mxu0 %v501
  %v503 = vpop.f32.mrb[0].mxu0
  %v504 = vadd.f32 %v251, %v503
  %v505 = vpop.f32.mrb[0].mxu0
  %506 = vmatprep.mubr.f32.mxu0 0.0
  %v507 = vand.u32 %v24, 4294901760
  %508 = vmatmul.mubr.f32.gmra.mrb[0].mxu0 %v507
  %v509 = vpop.f32.mrb[0].mxu0
  %v510 = vadd.f32 %v261, %v509
  %v511 = vpop.f32.mrb[0].mxu0
  %512 = vmatprep.mubr.f32.mxu0 0.0
  %v513 = vand.u32 %v25, 4294901760
  %514 = vmatmul.mubr.f32.gmra.mrb[0].mxu0 %v513
  %v515 = vpop.f32.mrb[0].mxu0
  %v516 = vadd.f32 %v271, %v515
  %v517 = vpop.f32.mrb[0].mxu0
  %518 = vmatprep.mubr.f32.mxu0 0.0
  %v519 = vand.u32 %v26, 4294901760
  %520 = vmatmul.mubr.f32.gmra.mrb[0].mxu0 %v519
  %v521 = vpop.f32.mrb[0].mxu0
  %v522 = vadd.f32 %v281, %v521
  %v523 = vpop.f32.mrb[0].mxu0
  %524 = vdwg.mxu0
  %525 = vmatprep.subr.mxu0 0.0
  %v526 = vand.u32 %v27, 4294901760
  %v527 = vsub.f32 %v27, %v526
  %528 = vmatpush1.msra.mxu0 %v527
  %529 = vmatprep.subr.mxu0 0.0
  %v530 = vand.u32 %v28, 4294901760
  %v531 = vsub.f32 %v28, %v530
  %532 = vmatpush1.msra.mxu0 %v531
  %533 = vmatprep.subr.mxu0 0.0
  %v534 = vand.u32 %v29, 4294901760
  %v535 = vsub.f32 %v29, %v534
  %536 = vmatpush1.msra.mxu0 %v535
  %537 = vmatprep.subr.mxu0 0.0
  %v538 = vand.u32 %v30, 4294901760
  %v539 = vsub.f32 %v30, %v538
  %540 = vmatpush1.msra.mxu0 %v539
  %541 = vmatprep.subr.mxu0 0.0
  %v542 = vand.u32 %v31, 4294901760
  %v543 = vsub.f32 %v31, %v542
  %544 = vmatpush1.msra.mxu0 %v543
  %545 = vmatprep.subr.mxu0 0.0
  %v546 = vand.u32 %v32, 4294901760
  %v547 = vsub.f32 %v32, %v546
  %548 = vmatpush1.msra.mxu0 %v547
  %549 = vmatprep.subr.mxu0 0.0
  %v550 = vand.u32 %v33, 4294901760
  %v551 = vsub.f32 %v33, %v550
  %552 = vmatpush1.msra.mxu0 %v551
  %553 = vmatprep.subr.mxu0 0.0
  %v554 = vand.u32 %v34, 4294901760
  %v555 = vsub.f32 %v34, %v554
  %556 = vmatpush1.msra.mxu0 %v555
  %557 = vmatprep.subr.mxu0 0.0
  %v558 = vand.u32 %v35, 4294901760
  %v559 = vsub.f32 %v35, %v558
  %560 = vmatpush1.msra.mxu0 %v559
  %561 = vmatprep.subr.mxu0 0.0
  %v562 = vand.u32 %v36, 4294901760
  %v563 = vsub.f32 %v36, %v562
  %564 = vmatpush1.msra.mxu0 %v563
  %565 = vmatprep.subr.mxu0 0.0
  %v566 = vand.u32 %v37, 4294901760
  %v567 = vsub.f32 %v37, %v566
  %568 = vmatpush1.msra.mxu0 %v567
  %569 = vmatprep.subr.mxu0 0.0
  %v570 = vand.u32 %v38, 4294901760
  %v571 = vsub.f32 %v38, %v570
  %572 = vmatpush1.msra.mxu0 %v571
  %573 = vmatprep.subr.mxu0 0.0
  %v574 = vand.u32 %v39, 4294901760
  %v575 = vsub.f32 %v39, %v574
  %576 = vmatpush1.msra.mxu0 %v575
  %577 = vmatprep.subr.mxu0 0.0
  %v578 = vand.u32 %v40, 4294901760
  %v579 = vsub.f32 %v40, %v578
  %580 = vmatpush1.msra.mxu0 %v579
  %581 = vmatprep.subr.mxu0 0.0
  %v582 = vand.u32 %v41, 4294901760
  %v583 = vsub.f32 %v41, %v582
  %584 = vmatpush1.msra.mxu0 %v583
  %585 = vmatprep.subr.mxu0 0.0
  %v586 = vand.u32 %v42, 4294901760
  %v587 = vsub.f32 %v42, %v586
  %588 = vmatpush1.msra.mxu0 %v587
  %589 = vmatprep.subr.mxu0 0.0
  %590 = vmatpush1.msra.mxu0 0.0
  %591 = vmatprep.subr.mxu0 0.0
  %592 = vmatpush1.msra.mxu0 0.0
  %593 = vmatprep.subr.mxu0 0.0
  %594 = vmatpush1.msra.mxu0 0.0
  %595 = vmatprep.subr.mxu0 0.0
  %596 = vmatpush1.msra.mxu0 0.0
  %597 = vmatprep.subr.mxu0 0.0
  %598 = vmatpush1.msra.mxu0 0.0
  %599 = vmatprep.subr.mxu0 0.0
  %600 = vmatpush1.msra.mxu0 0.0
  %601 = vmatprep.subr.mxu0 0.0
  %602 = vmatpush1.msra.mxu0 0.0
  %603 = vmatprep.subr.mxu0 0.0
  %604 = vmatpush1.msra.mxu0 0.0
  %605 = vmatprep.subr.mxu0 0.0
  %606 = vmatpush1.msra.mxu0 0.0
  %607 = vmatprep.subr.mxu0 0.0
  %608 = vmatpush1.msra.mxu0 0.0
  %609 = vmatprep.subr.mxu0 0.0
  %610 = vmatpush1.msra.mxu0 0.0
  %611 = vmatprep.subr.mxu0 0.0
  %612 = vmatpush1.msra.mxu0 0.0
  %613 = vmatprep.subr.mxu0 0.0
  %614 = vmatpush1.msra.mxu0 0.0
  %615 = vmatprep.subr.mxu0 0.0
  %616 = vmatpush1.msra.mxu0 0.0
  %617 = vmatprep.subr.mxu0 0.0
  %618 = vmatpush1.msra.mxu0 0.0
  %619 = vmatprep.subr.mxu0 0.0
  %620 = vmatpush1.msra.mxu0 0.0
  %621 = vmatprep.mubr.f32.mxu0 0.0
  %v622 = vand.u32 %v11, 4294901760
  %v623 = vsub.f32 %v11, %v622
  %624 = vmatmul.mubr.f32.gmra.mrb[0].mxu0 %v623
  %v625 = vpop.f32.mrb[0].mxu0
  %v626 = vadd.f32 %v432, %v625
  %v627 = vpop.f32.mrb[0].mxu0
  %628 = vmatprep.mubr.f32.mxu0 0.0
  %v629 = vand.u32 %v12, 4294901760
  %v630 = vsub.f32 %v12, %v629
  %631 = vmatmul.mubr.f32.gmra.mrb[0].mxu0 %v630
  %v632 = vpop.f32.mrb[0].mxu0
  %v633 = vadd.f32 %v438, %v632
  %v634 = vpop.f32.mrb[0].mxu0
  %635 = vmatprep.mubr.f32.mxu0 0.0
  %v636 = vand.u32 %v13, 4294901760
  %v637 = vsub.f32 %v13, %v636
  %638 = vmatmul.mubr.f32.gmra.mrb[0].mxu0 %v637
  %v639 = vpop.f32.mrb[0].mxu0
  %v640 = vadd.f32 %v444, %v639
  %v641 = vpop.f32.mrb[0].mxu0
  %642 = vmatprep.mubr.f32.mxu0 0.0
  %v643 = vand.u32 %v14, 4294901760
  %v644 = vsub.f32 %v14, %v643
  %645 = vmatmul.mubr.f32.gmra.mrb[0].mxu0 %v644
  %v646 = vpop.f32.mrb[0].mxu0
  %v647 = vadd.f32 %v450, %v646
  %v648 = vpop.f32.mrb[0].mxu0
  %649 = vmatprep.mubr.f32.mxu0 0.0
  %v650 = vand.u32 %v15, 4294901760
  %v651 = vsub.f32 %v15, %v650
  %652 = vmatmul.mubr.f32.gmra.mrb[0].mxu0 %v651
  %v653 = vpop.f32.mrb[0].mxu0
  %v654 = vadd.f32 %v456, %v653
  %v655 = vpop.f32.mrb[0].mxu0
  %656 = vmatprep.mubr.f32.mxu0 0.0
  %v657 = vand.u32 %v16, 4294901760
  %v658 = vsub.f32 %v16, %v657
  %659 = vmatmul.mubr.f32.gmra.mrb[0].mxu0 %v658
  %v660 = vpop.f32.mrb[0].mxu0
  %v661 = vadd.f32 %v462, %v660
  %v662 = vpop.f32.mrb[0].mxu0
  %663 = vmatprep.mubr.f32.mxu0 0.0
  %v664 = vand.u32 %v17, 4294901760
  %v665 = vsub.f32 %v17, %v664
  %666 = vmatmul.mubr.f32.gmra.mrb[0].mxu0 %v665
  %v667 = vpop.f32.mrb[0].mxu0
  %v668 = vadd.f32 %v468, %v667
  %v669 = vpop.f32.mrb[0].mxu0
  %670 = vmatprep.mubr.f32.mxu0 0.0
  %v671 = vand.u32 %v18, 4294901760
  %v672 = vsub.f32 %v18, %v671
  %673 = vmatmul.mubr.f32.gmra.mrb[0].mxu0 %v672
  %v674 = vpop.f32.mrb[0].mxu0
  %v675 = vadd.f32 %v474, %v674
  %v676 = vpop.f32.mrb[0].mxu0
  %677 = vmatprep.mubr.f32.mxu0 0.0
  %v678 = vand.u32 %v19, 4294901760
  %v679 = vsub.f32 %v19, %v678
  %680 = vmatmul.mubr.f32.gmra.mrb[0].mxu0 %v679
  %v681 = vpop.f32.mrb[0].mxu0
  %v682 = vadd.f32 %v480, %v681
  %v683 = vpop.f32.mrb[0].mxu0
  %684 = vmatprep.mubr.f32.mxu0 0.0
  %v685 = vand.u32 %v20, 4294901760
  %v686 = vsub.f32 %v20, %v685
  %687 = vmatmul.mubr.f32.gmra.mrb[0].mxu0 %v686
  %v688 = vpop.f32.mrb[0].mxu0
  %v689 = vadd.f32 %v486, %v688
  %v690 = vpop.f32.mrb[0].mxu0
  %691 = vmatprep.mubr.f32.mxu0 0.0
  %v692 = vand.u32 %v21, 4294901760
  %v693 = vsub.f32 %v21, %v692
  %694 = vmatmul.mubr.f32.gmra.mrb[0].mxu0 %v693
  %v695 = vpop.f32.mrb[0].mxu0
  %v696 = vadd.f32 %v492, %v695
  %v697 = vpop.f32.mrb[0].mxu0
  %698 = vmatprep.mubr.f32.mxu0 0.0
  %v699 = vand.u32 %v22, 4294901760
  %v700 = vsub.f32 %v22, %v699
  %701 = vmatmul.mubr.f32.gmra.mrb[0].mxu0 %v700
  %v702 = vpop.f32.mrb[0].mxu0
  %v703 = vadd.f32 %v498, %v702
  %v704 = vpop.f32.mrb[0].mxu0
  %705 = vmatprep.mubr.f32.mxu0 0.0
  %v706 = vand.u32 %v23, 4294901760
  %v707 = vsub.f32 %v23, %v706
  %708 = vmatmul.mubr.f32.gmra.mrb[0].mxu0 %v707
  %v709 = vpop.f32.mrb[0].mxu0
  %v710 = vadd.f32 %v504, %v709
  %v711 = vpop.f32.mrb[0].mxu0
  %712 = vmatprep.mubr.f32.mxu0 0.0
  %v713 = vand.u32 %v24, 4294901760
  %v714 = vsub.f32 %v24, %v713
  %715 = vmatmul.mubr.f32.gmra.mrb[0].mxu0 %v714
  %v716 = vpop.f32.mrb[0].mxu0
  %v717 = vadd.f32 %v510, %v716
  %v718 = vpop.f32.mrb[0].mxu0
  %719 = vmatprep.mubr.f32.mxu0 0.0
  %v720 = vand.u32 %v25, 4294901760
  %v721 = vsub.f32 %v25, %v720
  %722 = vmatmul.mubr.f32.gmra.mrb[0].mxu0 %v721
  %v723 = vpop.f32.mrb[0].mxu0
  %v724 = vadd.f32 %v516, %v723
  %v725 = vpop.f32.mrb[0].mxu0
  %726 = vmatprep.mubr.f32.mxu0 0.0
  %v727 = vand.u32 %v26, 4294901760
  %v728 = vsub.f32 %v26, %v727
  %729 = vmatmul.mubr.f32.gmra.mrb[0].mxu0 %v728
  %v730 = vpop.f32.mrb[0].mxu0
  %v731 = vadd.f32 %v522, %v730
  %v732 = vpop.f32.mrb[0].mxu0
  %733 = vdwg.mxu0
  %734 = vmatprep.subr.mxu0 0.0
  %v735 = vand.u32 %v27, 4294901760
  %736 = vmatpush1.msra.mxu0 %v735
  %737 = vmatprep.subr.mxu0 0.0
  %v738 = vand.u32 %v28, 4294901760
  %739 = vmatpush1.msra.mxu0 %v738
  %740 = vmatprep.subr.mxu0 0.0
  %v741 = vand.u32 %v29, 4294901760
  %742 = vmatpush1.msra.mxu0 %v741
  %743 = vmatprep.subr.mxu0 0.0
  %v744 = vand.u32 %v30, 4294901760
  %745 = vmatpush1.msra.mxu0 %v744
  %746 = vmatprep.subr.mxu0 0.0
  %v747 = vand.u32 %v31, 4294901760
  %748 = vmatpush1.msra.mxu0 %v747
  %749 = vmatprep.subr.mxu0 0.0
  %v750 = vand.u32 %v32, 4294901760
  %751 = vmatpush1.msra.mxu0 %v750
  %752 = vmatprep.subr.mxu0 0.0
  %v753 = vand.u32 %v33, 4294901760
  %754 = vmatpush1.msra.mxu0 %v753
  %755 = vmatprep.subr.mxu0 0.0
  %v756 = vand.u32 %v34, 4294901760
  %757 = vmatpush1.msra.mxu0 %v756
  %758 = vmatprep.subr.mxu0 0.0
  %v759 = vand.u32 %v35, 4294901760
  %760 = vmatpush1.msra.mxu0 %v759
  %761 = vmatprep.subr.mxu0 0.0
  %v762 = vand.u32 %v36, 4294901760
  %763 = vmatpush1.msra.mxu0 %v762
  %764 = vmatprep.subr.mxu0 0.0
  %v765 = vand.u32 %v37, 4294901760
  %766 = vmatpush1.msra.mxu0 %v765
  %767 = vmatprep.subr.mxu0 0.0
  %v768 = vand.u32 %v38, 4294901760
  %769 = vmatpush1.msra.mxu0 %v768
  %770 = vmatprep.subr.mxu0 0.0
  %v771 = vand.u32 %v39, 4294901760
  %772 = vmatpush1.msra.mxu0 %v771
  %773 = vmatprep.subr.mxu0 0.0
  %v774 = vand.u32 %v40, 4294901760
  %775 = vmatpush1.msra.mxu0 %v774
  %776 = vmatprep.subr.mxu0 0.0
  %v777 = vand.u32 %v41, 4294901760
  %778 = vmatpush1.msra.mxu0 %v777
  %779 = vmatprep.subr.mxu0 0.0
  %v780 = vand.u32 %v42, 4294901760
  %781 = vmatpush1.msra.mxu0 %v780
  %782 = vmatprep.subr.mxu0 0.0
  %783 = vmatpush1.msra.mxu0 0.0
  %784 = vmatprep.subr.mxu0 0.0
  %785 = vmatpush1.msra.mxu0 0.0
  %786 = vmatprep.subr.mxu0 0.0
  %787 = vmatpush1.msra.mxu0 0.0
  %788 = vmatprep.subr.mxu0 0.0
  %789 = vmatpush1.msra.mxu0 0.0
  %790 = vmatprep.subr.mxu0 0.0
  %791 = vmatpush1.msra.mxu0 0.0
  %792 = vmatprep.subr.mxu0 0.0
  %793 = vmatpush1.msra.mxu0 0.0
  %794 = vmatprep.subr.mxu0 0.0
  %795 = vmatpush1.msra.mxu0 0.0
  %796 = vmatprep.subr.mxu0 0.0
  %797 = vmatpush1.msra.mxu0 0.0
  %798 = vmatprep.subr.mxu0 0.0
  %799 = vmatpush1.msra.mxu0 0.0
  %800 = vmatprep.subr.mxu0 0.0
  %801 = vmatpush1.msra.mxu0 0.0
  %802 = vmatprep.subr.mxu0 0.0
  %803 = vmatpush1.msra.mxu0 0.0
  %804 = vmatprep.subr.mxu0 0.0
  %805 = vmatpush1.msra.mxu0 0.0
  %806 = vmatprep.subr.mxu0 0.0
  %807 = vmatpush1.msra.mxu0 0.0
  %808 = vmatprep.subr.mxu0 0.0
  %809 = vmatpush1.msra.mxu0 0.0
  %810 = vmatprep.subr.mxu0 0.0
  %811 = vmatpush1.msra.mxu0 0.0
  %812 = vmatprep.subr.mxu0 0.0
  %813 = vmatpush1.msra.mxu0 0.0
  %814 = vmatprep.mubr.f32.mxu0 0.0
  %v815 = vand.u32 %v11, 4294901760
  %v816 = vsub.f32 %v11, %v815
  %v817 = vand.u32 %v816, 4294901760
  %818 = vmatmul.mubr.f32.gmra.mrb[0].mxu0 %v817
  %v819 = vpop.f32.mrb[0].mxu0
  %v820 = vadd.f32 %v626, %v819
  %v821 = vpop.f32.mrb[0].mxu0
  %822 = vmatprep.mubr.f32.mxu0 0.0
  %v823 = vand.u32 %v12, 4294901760
  %v824 = vsub.f32 %v12, %v823
  %v825 = vand.u32 %v824, 4294901760
  %826 = vmatmul.mubr.f32.gmra.mrb[0].mxu0 %v825
  %v827 = vpop.f32.mrb[0].mxu0
  %v828 = vadd.f32 %v633, %v827
  %v829 = vpop.f32.mrb[0].mxu0
  %830 = vmatprep.mubr.f32.mxu0 0.0
  %v831 = vand.u32 %v13, 4294901760
  %v832 = vsub.f32 %v13, %v831
  %v833 = vand.u32 %v832, 4294901760
  %834 = vmatmul.mubr.f32.gmra.mrb[0].mxu0 %v833
  %v835 = vpop.f32.mrb[0].mxu0
  %v836 = vadd.f32 %v640, %v835
  %v837 = vpop.f32.mrb[0].mxu0
  %838 = vmatprep.mubr.f32.mxu0 0.0
  %v839 = vand.u32 %v14, 4294901760
  %v840 = vsub.f32 %v14, %v839
  %v841 = vand.u32 %v840, 4294901760
  %842 = vmatmul.mubr.f32.gmra.mrb[0].mxu0 %v841
  %v843 = vpop.f32.mrb[0].mxu0
  %v844 = vadd.f32 %v647, %v843
  %v845 = vpop.f32.mrb[0].mxu0
  %846 = vmatprep.mubr.f32.mxu0 0.0
  %v847 = vand.u32 %v15, 4294901760
  %v848 = vsub.f32 %v15, %v847
  %v849 = vand.u32 %v848, 4294901760
  %850 = vmatmul.mubr.f32.gmra.mrb[0].mxu0 %v849
  %v851 = vpop.f32.mrb[0].mxu0
  %v852 = vadd.f32 %v654, %v851
  %v853 = vpop.f32.mrb[0].mxu0
  %854 = vmatprep.mubr.f32.mxu0 0.0
  %v855 = vand.u32 %v16, 4294901760
  %v856 = vsub.f32 %v16, %v855
  %v857 = vand.u32 %v856, 4294901760
  %858 = vmatmul.mubr.f32.gmra.mrb[0].mxu0 %v857
  %v859 = vpop.f32.mrb[0].mxu0
  %v860 = vadd.f32 %v661, %v859
  %v861 = vpop.f32.mrb[0].mxu0
  %862 = vmatprep.mubr.f32.mxu0 0.0
  %v863 = vand.u32 %v17, 4294901760
  %v864 = vsub.f32 %v17, %v863
  %v865 = vand.u32 %v864, 4294901760
  %866 = vmatmul.mubr.f32.gmra.mrb[0].mxu0 %v865
  %v867 = vpop.f32.mrb[0].mxu0
  %v868 = vadd.f32 %v668, %v867
  %v869 = vpop.f32.mrb[0].mxu0
  %870 = vmatprep.mubr.f32.mxu0 0.0
  %v871 = vand.u32 %v18, 4294901760
  %v872 = vsub.f32 %v18, %v871
  %v873 = vand.u32 %v872, 4294901760
  %874 = vmatmul.mubr.f32.gmra.mrb[0].mxu0 %v873
  %v875 = vpop.f32.mrb[0].mxu0
  %v876 = vadd.f32 %v675, %v875
  %v877 = vpop.f32.mrb[0].mxu0
  %878 = vmatprep.mubr.f32.mxu0 0.0
  %v879 = vand.u32 %v19, 4294901760
  %v880 = vsub.f32 %v19, %v879
  %v881 = vand.u32 %v880, 4294901760
  %882 = vmatmul.mubr.f32.gmra.mrb[0].mxu0 %v881
  %v883 = vpop.f32.mrb[0].mxu0
  %v884 = vadd.f32 %v682, %v883
  %v885 = vpop.f32.mrb[0].mxu0
  %886 = vmatprep.mubr.f32.mxu0 0.0
  %v887 = vand.u32 %v20, 4294901760
  %v888 = vsub.f32 %v20, %v887
  %v889 = vand.u32 %v888, 4294901760
  %890 = vmatmul.mubr.f32.gmra.mrb[0].mxu0 %v889
  %v891 = vpop.f32.mrb[0].mxu0
  %v892 = vadd.f32 %v689, %v891
  %v893 = vpop.f32.mrb[0].mxu0
  %894 = vmatprep.mubr.f32.mxu0 0.0
  %v895 = vand.u32 %v21, 4294901760
  %v896 = vsub.f32 %v21, %v895
  %v897 = vand.u32 %v896, 4294901760
  %898 = vmatmul.mubr.f32.gmra.mrb[0].mxu0 %v897
  %v899 = vpop.f32.mrb[0].mxu0
  %v900 = vadd.f32 %v696, %v899
  %v901 = vpop.f32.mrb[0].mxu0
  %902 = vmatprep.mubr.f32.mxu0 0.0
  %v903 = vand.u32 %v22, 4294901760
  %v904 = vsub.f32 %v22, %v903
  %v905 = vand.u32 %v904, 4294901760
  %906 = vmatmul.mubr.f32.gmra.mrb[0].mxu0 %v905
  %v907 = vpop.f32.mrb[0].mxu0
  %v908 = vadd.f32 %v703, %v907
  %v909 = vpop.f32.mrb[0].mxu0
  %910 = vmatprep.mubr.f32.mxu0 0.0
  %v911 = vand.u32 %v23, 4294901760
  %v912 = vsub.f32 %v23, %v911
  %v913 = vand.u32 %v912, 4294901760
  %914 = vmatmul.mubr.f32.gmra.mrb[0].mxu0 %v913
  %v915 = vpop.f32.mrb[0].mxu0
  %v916 = vadd.f32 %v710, %v915
  %v917 = vpop.f32.mrb[0].mxu0
  %918 = vmatprep.mubr.f32.mxu0 0.0
  %v919 = vand.u32 %v24, 4294901760
  %v920 = vsub.f32 %v24, %v919
  %v921 = vand.u32 %v920, 4294901760
  %922 = vmatmul.mubr.f32.gmra.mrb[0].mxu0 %v921
  %v923 = vpop.f32.mrb[0].mxu0
  %v924 = vadd.f32 %v717, %v923
  %v925 = vpop.f32.mrb[0].mxu0
  %926 = vmatprep.mubr.f32.mxu0 0.0
  %v927 = vand.u32 %v25, 4294901760
  %v928 = vsub.f32 %v25, %v927
  %v929 = vand.u32 %v928, 4294901760
  %930 = vmatmul.mubr.f32.gmra.mrb[0].mxu0 %v929
  %v931 = vpop.f32.mrb[0].mxu0
  %v932 = vadd.f32 %v724, %v931
  %v933 = vpop.f32.mrb[0].mxu0
  %934 = vmatprep.mubr.f32.mxu0 0.0
  %v935 = vand.u32 %v26, 4294901760
  %v936 = vsub.f32 %v26, %v935
  %v937 = vand.u32 %v936, 4294901760
  %938 = vmatmul.mubr.f32.gmra.mrb[0].mxu0 %v937
  %v939 = vpop.f32.mrb[0].mxu0
  %v940 = vadd.f32 %v731, %v939
  %v941 = vpop.f32.mrb[0].mxu0
  %942 = vdwg.mxu0
  %943 = vmatprep.subr.mxu0 0.0
  %v944 = vand.u32 %v27, 4294901760
  %v945 = vsub.f32 %v27, %v944
  %v946 = vand.u32 %v945, 4294901760
  %947 = vmatpush1.msra.mxu0 %v946
  %948 = vmatprep.subr.mxu0 0.0
  %v949 = vand.u32 %v28, 4294901760
  %v950 = vsub.f32 %v28, %v949
  %v951 = vand.u32 %v950, 4294901760
  %952 = vmatpush1.msra.mxu0 %v951
  %953 = vmatprep.subr.mxu0 0.0
  %v954 = vand.u32 %v29, 4294901760
  %v955 = vsub.f32 %v29, %v954
  %v956 = vand.u32 %v955, 4294901760
  %957 = vmatpush1.msra.mxu0 %v956
  %958 = vmatprep.subr.mxu0 0.0
  %v959 = vand.u32 %v30, 4294901760
  %v960 = vsub.f32 %v30, %v959
  %v961 = vand.u32 %v960, 4294901760
  %962 = vmatpush1.msra.mxu0 %v961
  %963 = vmatprep.subr.mxu0 0.0
  %v964 = vand.u32 %v31, 4294901760
  %v965 = vsub.f32 %v31, %v964
  %v966 = vand.u32 %v965, 4294901760
  %967 = vmatpush1.msra.mxu0 %v966
  %968 = vmatprep.subr.mxu0 0.0
  %v969 = vand.u32 %v32, 4294901760
  %v970 = vsub.f32 %v32, %v969
  %v971 = vand.u32 %v970, 4294901760
  %972 = vmatpush1.msra.mxu0 %v971
  %973 = vmatprep.subr.mxu0 0.0
  %v974 = vand.u32 %v33, 4294901760
  %v975 = vsub.f32 %v33, %v974
  %v976 = vand.u32 %v975, 4294901760
  %977 = vmatpush1.msra.mxu0 %v976
  %978 = vmatprep.subr.mxu0 0.0
  %v979 = vand.u32 %v34, 4294901760
  %v980 = vsub.f32 %v34, %v979
  %v981 = vand.u32 %v980, 4294901760
  %982 = vmatpush1.msra.mxu0 %v981
  %983 = vmatprep.subr.mxu0 0.0
  %v984 = vand.u32 %v35, 4294901760
  %v985 = vsub.f32 %v35, %v984
  %v986 = vand.u32 %v985, 4294901760
  %987 = vmatpush1.msra.mxu0 %v986
  %988 = vmatprep.subr.mxu0 0.0
  %v989 = vand.u32 %v36, 4294901760
  %v990 = vsub.f32 %v36, %v989
  %v991 = vand.u32 %v990, 4294901760
  %992 = vmatpush1.msra.mxu0 %v991
  %993 = vmatprep.subr.mxu0 0.0
  %v994 = vand.u32 %v37, 4294901760
  %v995 = vsub.f32 %v37, %v994
  %v996 = vand.u32 %v995, 4294901760
  %997 = vmatpush1.msra.mxu0 %v996
  %998 = vmatprep.subr.mxu0 0.0
  %v999 = vand.u32 %v38, 4294901760
  %v1000 = vsub.f32 %v38, %v999
  %v1001 = vand.u32 %v1000, 4294901760
  %1002 = vmatpush1.msra.mxu0 %v1001
  %1003 = vmatprep.subr.mxu0 0.0
  %v1004 = vand.u32 %v39, 4294901760
  %v1005 = vsub.f32 %v39, %v1004
  %v1006 = vand.u32 %v1005, 4294901760
  %1007 = vmatpush1.msra.mxu0 %v1006
  %1008 = vmatprep.subr.mxu0 0.0
  %v1009 = vand.u32 %v40, 4294901760
  %v1010 = vsub.f32 %v40, %v1009
  %v1011 = vand.u32 %v1010, 4294901760
  %1012 = vmatpush1.msra.mxu0 %v1011
  %1013 = vmatprep.subr.mxu0 0.0
  %v1014 = vand.u32 %v41, 4294901760
  %v1015 = vsub.f32 %v41, %v1014
  %v1016 = vand.u32 %v1015, 4294901760
  %1017 = vmatpush1.msra.mxu0 %v1016
  %1018 = vmatprep.subr.mxu0 0.0
  %v1019 = vand.u32 %v42, 4294901760
  %v1020 = vsub.f32 %v42, %v1019
  %v1021 = vand.u32 %v1020, 4294901760
  %1022 = vmatpush1.msra.mxu0 %v1021
  %1023 = vmatprep.subr.mxu0 0.0
  %1024 = vmatpush1.msra.mxu0 0.0
  %1025 = vmatprep.subr.mxu0 0.0
  %1026 = vmatpush1.msra.mxu0 0.0
  %1027 = vmatprep.subr.mxu0 0.0
  %1028 = vmatpush1.msra.mxu0 0.0
  %1029 = vmatprep.subr.mxu0 0.0
  %1030 = vmatpush1.msra.mxu0 0.0
  %1031 = vmatprep.subr.mxu0 0.0
  %1032 = vmatpush1.msra.mxu0 0.0
  %1033 = vmatprep.subr.mxu0 0.0
  %1034 = vmatpush1.msra.mxu0 0.0
  %1035 = vmatprep.subr.mxu0 0.0
  %1036 = vmatpush1.msra.mxu0 0.0
  %1037 = vmatprep.subr.mxu0 0.0
  %1038 = vmatpush1.msra.mxu0 0.0
  %1039 = vmatprep.subr.mxu0 0.0
  %1040 = vmatpush1.msra.mxu0 0.0
  %1041 = vmatprep.subr.mxu0 0.0
  %1042 = vmatpush1.msra.mxu0 0.0
  %1043 = vmatprep.subr.mxu0 0.0
  %1044 = vmatpush1.msra.mxu0 0.0
  %1045 = vmatprep.subr.mxu0 0.0
  %1046 = vmatpush1.msra.mxu0 0.0
  %1047 = vmatprep.subr.mxu0 0.0
  %1048 = vmatpush1.msra.mxu0 0.0
  %1049 = vmatprep.subr.mxu0 0.0
  %1050 = vmatpush1.msra.mxu0 0.0
  %1051 = vmatprep.subr.mxu0 0.0
  %1052 = vmatpush1.msra.mxu0 0.0
  %1053 = vmatprep.subr.mxu0 0.0
  %1054 = vmatpush1.msra.mxu0 0.0
  %1055 = vmatprep.mubr.f32.mxu0 0.0
  %v1056 = vand.u32 %v11, 4294901760
  %1057 = vmatmul.mubr.f32.gmra.mrb[0].mxu0 %v1056
  %v1058 = vpop.f32.mrb[0].mxu0
  %v1059 = vadd.f32 %v820, %v1058
  %v1060 = vpop.f32.mrb[0].mxu0
  %1061 = vmatprep.mubr.f32.mxu0 0.0
  %v1062 = vand.u32 %v12, 4294901760
  %1063 = vmatmul.mubr.f32.gmra.mrb[0].mxu0 %v1062
  %v1064 = vpop.f32.mrb[0].mxu0
  %v1065 = vadd.f32 %v828, %v1064
  %v1066 = vpop.f32.mrb[0].mxu0
  %1067 = vmatprep.mubr.f32.mxu0 0.0
  %v1068 = vand.u32 %v13, 4294901760
  %1069 = vmatmul.mubr.f32.gmra.mrb[0].mxu0 %v1068
  %v1070 = vpop.f32.mrb[0].mxu0
  %v1071 = vadd.f32 %v836, %v1070
  %v1072 = vpop.f32.mrb[0].mxu0
  %1073 = vmatprep.mubr.f32.mxu0 0.0
  %v1074 = vand.u32 %v14, 4294901760
  %1075 = vmatmul.mubr.f32.gmra.mrb[0].mxu0 %v1074
  %v1076 = vpop.f32.mrb[0].mxu0
  %v1077 = vadd.f32 %v844, %v1076
  %v1078 = vpop.f32.mrb[0].mxu0
  %1079 = vmatprep.mubr.f32.mxu0 0.0
  %v1080 = vand.u32 %v15, 4294901760
  %1081 = vmatmul.mubr.f32.gmra.mrb[0].mxu0 %v1080
  %v1082 = vpop.f32.mrb[0].mxu0
  %v1083 = vadd.f32 %v852, %v1082
  %v1084 = vpop.f32.mrb[0].mxu0
  %1085 = vmatprep.mubr.f32.mxu0 0.0
  %v1086 = vand.u32 %v16, 4294901760
  %1087 = vmatmul.mubr.f32.gmra.mrb[0].mxu0 %v1086
  %v1088 = vpop.f32.mrb[0].mxu0
  %v1089 = vadd.f32 %v860, %v1088
  %v1090 = vpop.f32.mrb[0].mxu0
  %1091 = vmatprep.mubr.f32.mxu0 0.0
  %v1092 = vand.u32 %v17, 4294901760
  %1093 = vmatmul.mubr.f32.gmra.mrb[0].mxu0 %v1092
  %v1094 = vpop.f32.mrb[0].mxu0
  %v1095 = vadd.f32 %v868, %v1094
  %v1096 = vpop.f32.mrb[0].mxu0
  %1097 = vmatprep.mubr.f32.mxu0 0.0
  %v1098 = vand.u32 %v18, 4294901760
  %1099 = vmatmul.mubr.f32.gmra.mrb[0].mxu0 %v1098
  %v1100 = vpop.f32.mrb[0].mxu0
  %v1101 = vadd.f32 %v876, %v1100
  %v1102 = vpop.f32.mrb[0].mxu0
  %1103 = vmatprep.mubr.f32.mxu0 0.0
  %v1104 = vand.u32 %v19, 4294901760
  %1105 = vmatmul.mubr.f32.gmra.mrb[0].mxu0 %v1104
  %v1106 = vpop.f32.mrb[0].mxu0
  %v1107 = vadd.f32 %v884, %v1106
  %v1108 = vpop.f32.mrb[0].mxu0
  %1109 = vmatprep.mubr.f32.mxu0 0.0
  %v1110 = vand.u32 %v20, 4294901760
  %1111 = vmatmul.mubr.f32.gmra.mrb[0].mxu0 %v1110
  %v1112 = vpop.f32.mrb[0].mxu0
  %v1113 = vadd.f32 %v892, %v1112
  %v1114 = vpop.f32.mrb[0].mxu0
  %1115 = vmatprep.mubr.f32.mxu0 0.0
  %v1116 = vand.u32 %v21, 4294901760
  %1117 = vmatmul.mubr.f32.gmra.mrb[0].mxu0 %v1116
  %v1118 = vpop.f32.mrb[0].mxu0
  %v1119 = vadd.f32 %v900, %v1118
  %v1120 = vpop.f32.mrb[0].mxu0
  %1121 = vmatprep.mubr.f32.mxu0 0.0
  %v1122 = vand.u32 %v22, 4294901760
  %1123 = vmatmul.mubr.f32.gmra.mrb[0].mxu0 %v1122
  %v1124 = vpop.f32.mrb[0].mxu0
  %v1125 = vadd.f32 %v908, %v1124
  %v1126 = vpop.f32.mrb[0].mxu0
  %1127 = vmatprep.mubr.f32.mxu0 0.0
  %v1128 = vand.u32 %v23, 4294901760
  %1129 = vmatmul.mubr.f32.gmra.mrb[0].mxu0 %v1128
  %v1130 = vpop.f32.mrb[0].mxu0
  %v1131 = vadd.f32 %v916, %v1130
  %v1132 = vpop.f32.mrb[0].mxu0
  %1133 = vmatprep.mubr.f32.mxu0 0.0
  %v1134 = vand.u32 %v24, 4294901760
  %1135 = vmatmul.mubr.f32.gmra.mrb[0].mxu0 %v1134
  %v1136 = vpop.f32.mrb[0].mxu0
  %v1137 = vadd.f32 %v924, %v1136
  %v1138 = vpop.f32.mrb[0].mxu0
  %1139 = vmatprep.mubr.f32.mxu0 0.0
  %v1140 = vand.u32 %v25, 4294901760
  %1141 = vmatmul.mubr.f32.gmra.mrb[0].mxu0 %v1140
  %v1142 = vpop.f32.mrb[0].mxu0
  %v1143 = vadd.f32 %v932, %v1142
  %v1144 = vpop.f32.mrb[0].mxu0
  %1145 = vmatprep.mubr.f32.mxu0 0.0
  %v1146 = vand.u32 %v26, 4294901760
  %1147 = vmatmul.mubr.f32.gmra.mrb[0].mxu0 %v1146
  %v1148 = vpop.f32.mrb[0].mxu0
  %v1149 = vadd.f32 %v940, %v1148
  %v1150 = vpop.f32.mrb[0].mxu0
  %1151 = vdwg.mxu0
  %1152 = vmatprep.subr.mxu0 0.0
  %v1153 = vand.u32 %v27, 4294901760
  %1154 = vmatpush1.msra.mxu0 %v1153
  %1155 = vmatprep.subr.mxu0 0.0
  %v1156 = vand.u32 %v28, 4294901760
  %1157 = vmatpush1.msra.mxu0 %v1156
  %1158 = vmatprep.subr.mxu0 0.0
  %v1159 = vand.u32 %v29, 4294901760
  %1160 = vmatpush1.msra.mxu0 %v1159
  %1161 = vmatprep.subr.mxu0 0.0
  %v1162 = vand.u32 %v30, 4294901760
  %1163 = vmatpush1.msra.mxu0 %v1162
  %1164 = vmatprep.subr.mxu0 0.0
  %v1165 = vand.u32 %v31, 4294901760
  %1166 = vmatpush1.msra.mxu0 %v1165
  %1167 = vmatprep.subr.mxu0 0.0
  %v1168 = vand.u32 %v32, 4294901760
  %1169 = vmatpush1.msra.mxu0 %v1168
  %1170 = vmatprep.subr.mxu0 0.0
  %v1171 = vand.u32 %v33, 4294901760
  %1172 = vmatpush1.msra.mxu0 %v1171
  %1173 = vmatprep.subr.mxu0 0.0
  %v1174 = vand.u32 %v34, 4294901760
  %1175 = vmatpush1.msra.mxu0 %v1174
  %1176 = vmatprep.subr.mxu0 0.0
  %v1177 = vand.u32 %v35, 4294901760
  %1178 = vmatpush1.msra.mxu0 %v1177
  %1179 = vmatprep.subr.mxu0 0.0
  %v1180 = vand.u32 %v36, 4294901760
  %1181 = vmatpush1.msra.mxu0 %v1180
  %1182 = vmatprep.subr.mxu0 0.0
  %v1183 = vand.u32 %v37, 4294901760
  %1184 = vmatpush1.msra.mxu0 %v1183
  %1185 = vmatprep.subr.mxu0 0.0
  %v1186 = vand.u32 %v38, 4294901760
  %1187 = vmatpush1.msra.mxu0 %v1186
  %1188 = vmatprep.subr.mxu0 0.0
  %v1189 = vand.u32 %v39, 4294901760
  %1190 = vmatpush1.msra.mxu0 %v1189
  %1191 = vmatprep.subr.mxu0 0.0
  %v1192 = vand.u32 %v40, 4294901760
  %1193 = vmatpush1.msra.mxu0 %v1192
  %1194 = vmatprep.subr.mxu0 0.0
  %v1195 = vand.u32 %v41, 4294901760
  %1196 = vmatpush1.msra.mxu0 %v1195
  %1197 = vmatprep.subr.mxu0 0.0
  %v1198 = vand.u32 %v42, 4294901760
  %1199 = vmatpush1.msra.mxu0 %v1198
  %1200 = vmatprep.subr.mxu0 0.0
  %1201 = vmatpush1.msra.mxu0 0.0
  %1202 = vmatprep.subr.mxu0 0.0
  %1203 = vmatpush1.msra.mxu0 0.0
  %1204 = vmatprep.subr.mxu0 0.0
  %1205 = vmatpush1.msra.mxu0 0.0
  %1206 = vmatprep.subr.mxu0 0.0
  %1207 = vmatpush1.msra.mxu0 0.0
  %1208 = vmatprep.subr.mxu0 0.0
  %1209 = vmatpush1.msra.mxu0 0.0
  %1210 = vmatprep.subr.mxu0 0.0
  %1211 = vmatpush1.msra.mxu0 0.0
  %1212 = vmatprep.subr.mxu0 0.0
  %1213 = vmatpush1.msra.mxu0 0.0
  %1214 = vmatprep.subr.mxu0 0.0
  %1215 = vmatpush1.msra.mxu0 0.0
  %1216 = vmatprep.subr.mxu0 0.0
  %1217 = vmatpush1.msra.mxu0 0.0
  %1218 = vmatprep.subr.mxu0 0.0
  %1219 = vmatpush1.msra.mxu0 0.0
  %1220 = vmatprep.subr.mxu0 0.0
  %1221 = vmatpush1.msra.mxu0 0.0
  %1222 = vmatprep.subr.mxu0 0.0
  %1223 = vmatpush1.msra.mxu0 0.0
  %1224 = vmatprep.subr.mxu0 0.0
  %1225 = vmatpush1.msra.mxu0 0.0
  %1226 = vmatprep.subr.mxu0 0.0
  %1227 = vmatpush1.msra.mxu0 0.0
  %1228 = vmatprep.subr.mxu0 0.0
  %1229 = vmatpush1.msra.mxu0 0.0
  %1230 = vmatprep.subr.mxu0 0.0
  %1231 = vmatpush1.msra.mxu0 0.0
  %1232 = vmatprep.mubr.f32.mxu0 0.0
  %v1233 = vand.u32 %v11, 4294901760
  %1234 = vmatmul.mubr.f32.gmra.mrb[0].mxu0 %v1233
  %v1235 = vpop.f32.mrb[0].mxu0
  %v1236 = vadd.f32 %v1059, %v1235
  %v1237 = vpop.f32.mrb[0].mxu0
  %1238 = vmatprep.mubr.f32.mxu0 0.0
  %v1239 = vand.u32 %v12, 4294901760
  %1240 = vmatmul.mubr.f32.gmra.mrb[0].mxu0 %v1239
  %v1241 = vpop.f32.mrb[0].mxu0
  %v1242 = vadd.f32 %v1065, %v1241
  %v1243 = vpop.f32.mrb[0].mxu0
  %1244 = vmatprep.mubr.f32.mxu0 0.0
  %v1245 = vand.u32 %v13, 4294901760
  %1246 = vmatmul.mubr.f32.gmra.mrb[0].mxu0 %v1245
  %v1247 = vpop.f32.mrb[0].mxu0
  %v1248 = vadd.f32 %v1071, %v1247
  %v1249 = vpop.f32.mrb[0].mxu0
  %1250 = vmatprep.mubr.f32.mxu0 0.0
  %v1251 = vand.u32 %v14, 4294901760
  %1252 = vmatmul.mubr.f32.gmra.mrb[0].mxu0 %v1251
  %v1253 = vpop.f32.mrb[0].mxu0
  %v1254 = vadd.f32 %v1077, %v1253
  %v1255 = vpop.f32.mrb[0].mxu0
  %1256 = vmatprep.mubr.f32.mxu0 0.0
  %v1257 = vand.u32 %v15, 4294901760
  %1258 = vmatmul.mubr.f32.gmra.mrb[0].mxu0 %v1257
  %v1259 = vpop.f32.mrb[0].mxu0
  %v1260 = vadd.f32 %v1083, %v1259
  %v1261 = vpop.f32.mrb[0].mxu0
  %1262 = vmatprep.mubr.f32.mxu0 0.0
  %v1263 = vand.u32 %v16, 4294901760
  %1264 = vmatmul.mubr.f32.gmra.mrb[0].mxu0 %v1263
  %v1265 = vpop.f32.mrb[0].mxu0
  %v1266 = vadd.f32 %v1089, %v1265
  %v1267 = vpop.f32.mrb[0].mxu0
  %1268 = vmatprep.mubr.f32.mxu0 0.0
  %v1269 = vand.u32 %v17, 4294901760
  %1270 = vmatmul.mubr.f32.gmra.mrb[0].mxu0 %v1269
  %v1271 = vpop.f32.mrb[0].mxu0
  %v1272 = vadd.f32 %v1095, %v1271
  %v1273 = vpop.f32.mrb[0].mxu0
  %1274 = vmatprep.mubr.f32.mxu0 0.0
  %v1275 = vand.u32 %v18, 4294901760
  %1276 = vmatmul.mubr.f32.gmra.mrb[0].mxu0 %v1275
  %v1277 = vpop.f32.mrb[0].mxu0
  %v1278 = vadd.f32 %v1101, %v1277
  %v1279 = vpop.f32.mrb[0].mxu0
  %1280 = vmatprep.mubr.f32.mxu0 0.0
  %v1281 = vand.u32 %v19, 4294901760
  %1282 = vmatmul.mubr.f32.gmra.mrb[0].mxu0 %v1281
  %v1283 = vpop.f32.mrb[0].mxu0
  %v1284 = vadd.f32 %v1107, %v1283
  %v1285 = vpop.f32.mrb[0].mxu0
  %1286 = vmatprep.mubr.f32.mxu0 0.0
  %v1287 = vand.u32 %v20, 4294901760
  %1288 = vmatmul.mubr.f32.gmra.mrb[0].mxu0 %v1287
  %v1289 = vpop.f32.mrb[0].mxu0
  %v1290 = vadd.f32 %v1113, %v1289
  %v1291 = vpop.f32.mrb[0].mxu0
  %1292 = vmatprep.mubr.f32.mxu0 0.0
  %v1293 = vand.u32 %v21, 4294901760
  %1294 = vmatmul.mubr.f32.gmra.mrb[0].mxu0 %v1293
  %v1295 = vpop.f32.mrb[0].mxu0
  %v1296 = vadd.f32 %v1119, %v1295
  %v1297 = vpop.f32.mrb[0].mxu0
  %1298 = vmatprep.mubr.f32.mxu0 0.0
  %v1299 = vand.u32 %v22, 4294901760
  %1300 = vmatmul.mubr.f32.gmra.mrb[0].mxu0 %v1299
  %v1301 = vpop.f32.mrb[0].mxu0
  %v1302 = vadd.f32 %v1125, %v1301
  %v1303 = vpop.f32.mrb[0].mxu0
  %1304 = vmatprep.mubr.f32.mxu0 0.0
  %v1305 = vand.u32 %v23, 4294901760
  %1306 = vmatmul.mubr.f32.gmra.mrb[0].mxu0 %v1305
  %v1307 = vpop.f32.mrb[0].mxu0
  %v1308 = vadd.f32 %v1131, %v1307
  %v1309 = vpop.f32.mrb[0].mxu0
  %1310 = vmatprep.mubr.f32.mxu0 0.0
  %v1311 = vand.u32 %v24, 4294901760
  %1312 = vmatmul.mubr.f32.gmra.mrb[0].mxu0 %v1311
  %v1313 = vpop.f32.mrb[0].mxu0
  %v1314 = vadd.f32 %v1137, %v1313
  %v1315 = vpop.f32.mrb[0].mxu0
  %1316 = vmatprep.mubr.f32.mxu0 0.0
  %v1317 = vand.u32 %v25, 4294901760
  %1318 = vmatmul.mubr.f32.gmra.mrb[0].mxu0 %v1317
  %v1319 = vpop.f32.mrb[0].mxu0
  %v1320 = vadd.f32 %v1143, %v1319
  %v1321 = vpop.f32.mrb[0].mxu0
  %1322 = vmatprep.mubr.f32.mxu0 0.0
  %v1323 = vand.u32 %v26, 4294901760
  %1324 = vmatmul.mubr.f32.gmra.mrb[0].mxu0 %v1323
  %v1325 = vpop.f32.mrb[0].mxu0
  %v1326 = vadd.f32 %v1149, %v1325
  %v1327 = vpop.f32.mrb[0].mxu0
  %1328 = vdwg.mxu0
  %1329 = vst [vmem:[%s2] sm:$0xff] %v1236
  %1330 = vst [vmem:[%s2 + $0x8] sm:$0xff] %v1242
  %1331 = vst [vmem:[%s2 + $0x10] sm:$0xff] %v1248
  %1332 = vst [vmem:[%s2 + $0x18] sm:$0xff] %v1254
  %1333 = vst [vmem:[%s2 + $0x20] sm:$0xff] %v1260
  %1334 = vst [vmem:[%s2 + $0x28] sm:$0xff] %v1266
  %1335 = vst [vmem:[%s2 + $0x30] sm:$0xff] %v1272
  %1336 = vst [vmem:[%s2 + $0x38] sm:$0xff] %v1278
  %1337 = vst [vmem:[%s2 + $0x40] sm:$0xff] %v1284
  %1338 = vst [vmem:[%s2 + $0x48] sm:$0xff] %v1290
  %1339 = vst [vmem:[%s2 + $0x50] sm:$0xff] %v1296
  %1340 = vst [vmem:[%s2 + $0x58] sm:$0xff] %v1302
  %1341 = vst [vmem:[%s2 + $0x60] sm:$0xff] %v1308
  %1342 = vst [vmem:[%s2 + $0x68] sm:$0xff] %v1314
  %1343 = vst [vmem:[%s2 + $0x70] sm:$0xff] %v1320
  %1344 = vst [vmem:[%s2 + $0x78] sm:$0xff] %v1326
  // Predicated region
  $region10: #{network_block_apply.9} parent=0 // pred_check
    _
  $region11: #{network_block_apply.9} parent=0 // pred_check_branch
    %1346 = sbr.rel (0) target = $region13
  $region12: #{network_block_apply.9} parent=0 // pred_region
    _
  $region13: #{network_block_apply.9} parent=0 // pred_fallthru
    _
  // Predicated region
  $region14: #{network_block_apply.9} parent=0 // pred_check
    _
  $region15: #{network_block_apply.9} parent=0 // pred_check_branch
    %1348 = sbr.rel (0) target = $region17
  $region16: #{network_block_apply.9} parent=0 // pred_region
    _
  $region17: #{network_block_apply.9} parent=0 // pred_fallthru
    _

// kernel: network_block_apply.8
$region0: #{network_block_apply.8}
  #allocation0 [shape = 'u32[]', space=smem, size = 0x4, offset = 0x4, fixed_abs, tag = 'smem constant byte address 0x4 - core index']
  #allocation1 [shape = 'u32[144,128]{1,0:T(1,128)}', space=vmem, size = 0x12000, scoped, tag = 'internal scratch']
  %s0 = inlined_call_operand.vmem [shape: f32[128,128], index: 0, kind: input, shape index: {}]
  %s1 = inlined_call_operand.vmem [shape: f32[128,128], index: 1, kind: input, shape index: {}]
  %s2 = inlined_call_operand.vmem [shape: f32[1,128], index: 2, kind: input, shape index: {}]
  %s3 = inlined_call_operand.vmem [shape: f32[1,128], index: 3, kind: input, shape index: {}]
  %s4 = inlined_call_operand.vmem [shape: f32[128,128], index: 4, kind: output, shape index: {}]
  %s5 = sld [smem:[#allocation0]]
  $region26: #{network_block_apply.8} parent=0
    _
  %s7 = ssub.s32 1, %s5
  %s8 = scalar_select 0, %s7, %s5
  // Predicated region
  $region2: #{network_block_apply.8} parent=0 // pred_check
    _
  $region3: #{network_block_apply.8} parent=0 // pred_check_branch
    %10 = sbr.rel (0) target = $region5
  $region4: #{network_block_apply.8} parent=0 // pred_region
    _
  $region5: #{network_block_apply.8} parent=0 // pred_fallthru
    _
  // Predicated region
  $region6: #{network_block_apply.8} parent=0 // pred_check
    _
  $region7: #{network_block_apply.8} parent=0 // pred_check_branch
    %12 = sbr.rel (0) target = $region9
  $region8: #{network_block_apply.8} parent=0 // pred_region
    _
  $region9: #{network_block_apply.8} parent=0 // pred_fallthru
    _
  // Predicated region
  $region10: #{network_block_apply.8} parent=0 // pred_check
    _
  $region11: #{network_block_apply.8} parent=0 // pred_check_branch
    %14 = sbr.rel (0) target = $region13
  $region12: #{network_block_apply.8} parent=0 // pred_region
    _
  $region13: #{network_block_apply.8} parent=0 // pred_fallthru
    _
  // Predicated region
  $region14: #{network_block_apply.8} parent=0 // pred_check
    _
  $region15: #{network_block_apply.8} parent=0 // pred_check_branch
    %16 = sbr.rel (0) target = $region17
  $region16: #{network_block_apply.8} parent=0 // pred_region
    _
  $region17: #{network_block_apply.8} parent=0 // pred_fallthru
    _
  %v17 = vld [vmem:[%s0] sm:$0xff]
  %v18 = vld [vmem:[%s0 + $0x8] sm:$0xff]
  %v19 = vld [vmem:[%s0 + $0x10] sm:$0xff]
  %v20 = vld [vmem:[%s0 + $0x18] sm:$0xff]
  %v21 = vld [vmem:[%s0 + $0x20] sm:$0xff]
  %v22 = vld [vmem:[%s0 + $0x28] sm:$0xff]
  %v23 = vld [vmem:[%s0 + $0x30] sm:$0xff]
  %v24 = vld [vmem:[%s0 + $0x38] sm:$0xff]
  %v25 = vld [vmem:[%s0 + $0x40] sm:$0xff]
  %v26 = vld [vmem:[%s0 + $0x48] sm:$0xff]
  %v27 = vld [vmem:[%s0 + $0x50] sm:$0xff]
  %v28 = vld [vmem:[%s0 + $0x58] sm:$0xff]
  %v29 = vld [vmem:[%s0 + $0x60] sm:$0xff]
  %v30 = vld [vmem:[%s0 + $0x68] sm:$0xff]
  %v31 = vld [vmem:[%s0 + $0x70] sm:$0xff]
  %v32 = vld [vmem:[%s0 + $0x78] sm:$0xff]
  %v33 = vld [vmem:[%s1] sm:$0xff]
  %v34 = vld [vmem:[%s1 + $0x8] sm:$0xff]
  %v35 = vld [vmem:[%s1 + $0x10] sm:$0xff]
  %v36 = vld [vmem:[%s1 + $0x18] sm:$0xff]
  %v37 = vld [vmem:[%s1 + $0x20] sm:$0xff]
  %v38 = vld [vmem:[%s1 + $0x28] sm:$0xff]
  %v39 = vld [vmem:[%s1 + $0x30] sm:$0xff]
  %v40 = vld [vmem:[%s1 + $0x38] sm:$0xff]
  %v41 = vld [vmem:[%s1 + $0x40] sm:$0xff]
  %v42 = vld [vmem:[%s1 + $0x48] sm:$0xff]
  %v43 = vld [vmem:[%s1 + $0x50] sm:$0xff]
  %v44 = vld [vmem:[%s1 + $0x58] sm:$0xff]
  %v45 = vld [vmem:[%s1 + $0x60] sm:$0xff]
  %v46 = vld [vmem:[%s1 + $0x68] sm:$0xff]
  %v47 = vld [vmem:[%s1 + $0x70] sm:$0xff]
  %v48 = vld [vmem:[%s1 + $0x78] sm:$0xff]
  %49 = vmatprep.subr.mxu0 0.0
  %v50 = vand.u32 %v33, 4294901760
  %51 = vmatpush1.msra.mxu0 %v50
  %52 = vmatprep.subr.mxu0 0.0
  %v53 = vand.u32 %v34, 4294901760
  %54 = vmatpush1.msra.mxu0 %v53
  %55 = vmatprep.subr.mxu0 0.0
  %v56 = vand.u32 %v35, 4294901760
  %57 = vmatpush1.msra.mxu0 %v56
  %58 = vmatprep.subr.mxu0 0.0
  %v59 = vand.u32 %v36, 4294901760
  %60 = vmatpush1.msra.mxu0 %v59
  %61 = vmatprep.subr.mxu0 0.0
  %v62 = vand.u32 %v37, 4294901760
  %63 = vmatpush1.msra.mxu0 %v62
  %64 = vmatprep.subr.mxu0 0.0
  %v65 = vand.u32 %v38, 4294901760
  %66 = vmatpush1.msra.mxu0 %v65
  %67 = vmatprep.subr.mxu0 0.0
  %v68 = vand.u32 %v39, 4294901760
  %69 = vmatpush1.msra.mxu0 %v68
  %70 = vmatprep.subr.mxu0 0.0
  %v71 = vand.u32 %v40, 4294901760
  %72 = vmatpush1.msra.mxu0 %v71
  %73 = vmatprep.subr.mxu0 0.0
  %v74 = vand.u32 %v41, 4294901760
  %75 = vmatpush1.msra.mxu0 %v74
  %76 = vmatprep.subr.mxu0 0.0
  %v77 = vand.u32 %v42, 4294901760
  %78 = vmatpush1.msra.mxu0 %v77
  %79 = vmatprep.subr.mxu0 0.0
  %v80 = vand.u32 %v43, 4294901760
  %81 = vmatpush1.msra.mxu0 %v80
  %82 = vmatprep.subr.mxu0 0.0
  %v83 = vand.u32 %v44, 4294901760
  %84 = vmatpush1.msra.mxu0 %v83
  %85 = vmatprep.subr.mxu0 0.0
  %v86 = vand.u32 %v45, 4294901760
  %87 = vmatpush1.msra.mxu0 %v86
  %88 = vmatprep.subr.mxu0 0.0
  %v89 = vand.u32 %v46, 4294901760
  %90 = vmatpush1.msra.mxu0 %v89
  %91 = vmatprep.subr.mxu0 0.0
  %v92 = vand.u32 %v47, 4294901760
  %93 = vmatpush1.msra.mxu0 %v92
  %94 = vmatprep.subr.mxu0 0.0
  %v95 = vand.u32 %v48, 4294901760
  %96 = vmatpush1.msra.mxu0 %v95
  %97 = vmatprep.subr.mxu0 0.0
  %98 = vmatpush1.msra.mxu0 0.0
  %99 = vmatprep.subr.mxu0 0.0
  %100 = vmatpush1.msra.mxu0 0.0
  %101 = vmatprep.subr.mxu0 0.0
  %102 = vmatpush1.msra.mxu0 0.0
  %103 = vmatprep.subr.mxu0 0.0
  %104 = vmatpush1.msra.mxu0 0.0
  %105 = vmatprep.subr.mxu0 0.0
  %106 = vmatpush1.msra.mxu0 0.0
  %107 = vmatprep.subr.mxu0 0.0
  %108 = vmatpush1.msra.mxu0 0.0
  %109 = vmatprep.subr.mxu0 0.0
  %110 = vmatpush1.msra.mxu0 0.0
  %111 = vmatprep.subr.mxu0 0.0
  %112 = vmatpush1.msra.mxu0 0.0
  %113 = vmatprep.subr.mxu0 0.0
  %114 = vmatpush1.msra.mxu0 0.0
  %115 = vmatprep.subr.mxu0 0.0
  %116 = vmatpush1.msra.mxu0 0.0
  %117 = vmatprep.subr.mxu0 0.0
  %118 = vmatpush1.msra.mxu0 0.0
  %119 = vmatprep.subr.mxu0 0.0
  %120 = vmatpush1.msra.mxu0 0.0
  %121 = vmatprep.subr.mxu0 0.0
  %122 = vmatpush1.msra.mxu0 0.0
  %123 = vmatprep.subr.mxu0 0.0
  %124 = vmatpush1.msra.mxu0 0.0
  %125 = vmatprep.subr.mxu0 0.0
  %126 = vmatpush1.msra.mxu0 0.0
  %127 = vmatprep.subr.mxu0 0.0
  %128 = vmatpush1.msra.mxu0 0.0
  %129 = vmatprep.mubr.f32.mxu0 0.0
  %v130 = vand.u32 %v17, 4294901760
  %v131 = vsub.f32 %v17, %v130
  %v132 = vand.u32 %v131, 4294901760
  %v133 = vsub.f32 %v131, %v132
  %v134 = vand.u32 %v133, 4294901760
  %135 = vmatmul.mubr.f32.gmra.mrb[0].mxu0 %v134
  %v136 = vpop.f32.mrb[0].mxu0
  %v137 = vadd.f32 0.0, %v136
  %v138 = vpop.f32.mrb[0].mxu0
  %139 = vmatprep.mubr.f32.mxu0 0.0
  %v140 = vand.u32 %v18, 4294901760
  %v141 = vsub.f32 %v18, %v140
  %v142 = vand.u32 %v141, 4294901760
  %v143 = vsub.f32 %v141, %v142
  %v144 = vand.u32 %v143, 4294901760
  %145 = vmatmul.mubr.f32.gmra.mrb[0].mxu0 %v144
  %v146 = vpop.f32.mrb[0].mxu0
  %v147 = vadd.f32 0.0, %v146
  %v148 = vpop.f32.mrb[0].mxu0
  %149 = vmatprep.mubr.f32.mxu0 0.0
  %v150 = vand.u32 %v19, 4294901760
  %v151 = vsub.f32 %v19, %v150
  %v152 = vand.u32 %v151, 4294901760
  %v153 = vsub.f32 %v151, %v152
  %v154 = vand.u32 %v153, 4294901760
  %155 = vmatmul.mubr.f32.gmra.mrb[0].mxu0 %v154
  %v156 = vpop.f32.mrb[0].mxu0
  %v157 = vadd.f32 0.0, %v156
  %v158 = vpop.f32.mrb[0].mxu0
  %159 = vmatprep.mubr.f32.mxu0 0.0
  %v160 = vand.u32 %v20, 4294901760
  %v161 = vsub.f32 %v20, %v160
  %v162 = vand.u32 %v161, 4294901760
  %v163 = vsub.f32 %v161, %v162
  %v164 = vand.u32 %v163, 4294901760
  %165 = vmatmul.mubr.f32.gmra.mrb[0].mxu0 %v164
  %v166 = vpop.f32.mrb[0].mxu0
  %v167 = vadd.f32 0.0, %v166
  %v168 = vpop.f32.mrb[0].mxu0
  %169 = vmatprep.mubr.f32.mxu0 0.0
  %v170 = vand.u32 %v21, 4294901760
  %v171 = vsub.f32 %v21, %v170
  %v172 = vand.u32 %v171, 4294901760
  %v173 = vsub.f32 %v171, %v172
  %v174 = vand.u32 %v173, 4294901760
  %175 = vmatmul.mubr.f32.gmra.mrb[0].mxu0 %v174
  %v176 = vpop.f32.mrb[0].mxu0
  %v177 = vadd.f32 0.0, %v176
  %v178 = vpop.f32.mrb[0].mxu0
  %179 = vmatprep.mubr.f32.mxu0 0.0
  %v180 = vand.u32 %v22, 4294901760
  %v181 = vsub.f32 %v22, %v180
  %v182 = vand.u32 %v181, 4294901760
  %v183 = vsub.f32 %v181, %v182
  %v184 = vand.u32 %v183, 4294901760
  %185 = vmatmul.mubr.f32.gmra.mrb[0].mxu0 %v184
  %v186 = vpop.f32.mrb[0].mxu0
  %v187 = vadd.f32 0.0, %v186
  %v188 = vpop.f32.mrb[0].mxu0
  %189 = vmatprep.mubr.f32.mxu0 0.0
  %v190 = vand.u32 %v23, 4294901760
  %v191 = vsub.f32 %v23, %v190
  %v192 = vand.u32 %v191, 4294901760
  %v193 = vsub.f32 %v191, %v192
  %v194 = vand.u32 %v193, 4294901760
  %195 = vmatmul.mubr.f32.gmra.mrb[0].mxu0 %v194
  %v196 = vpop.f32.mrb[0].mxu0
  %v197 = vadd.f32 0.0, %v196
  %v198 = vpop.f32.mrb[0].mxu0
  %199 = vmatprep.mubr.f32.mxu0 0.0
  %v200 = vand.u32 %v24, 4294901760
  %v201 = vsub.f32 %v24, %v200
  %v202 = vand.u32 %v201, 4294901760
  %v203 = vsub.f32 %v201, %v202
  %v204 = vand.u32 %v203, 4294901760
  %205 = vmatmul.mubr.f32.gmra.mrb[0].mxu0 %v204
  %v206 = vpop.f32.mrb[0].mxu0
  %v207 = vadd.f32 0.0, %v206
  %v208 = vpop.f32.mrb[0].mxu0
  %209 = vmatprep.mubr.f32.mxu0 0.0
  %v210 = vand.u32 %v25, 4294901760
  %v211 = vsub.f32 %v25, %v210
  %v212 = vand.u32 %v211, 4294901760
  %v213 = vsub.f32 %v211, %v212
  %v214 = vand.u32 %v213, 4294901760
  %215 = vmatmul.mubr.f32.gmra.mrb[0].mxu0 %v214
  %v216 = vpop.f32.mrb[0].mxu0
  %v217 = vadd.f32 0.0, %v216
  %v218 = vpop.f32.mrb[0].mxu0
  %219 = vmatprep.mubr.f32.mxu0 0.0
  %v220 = vand.u32 %v26, 4294901760
  %v221 = vsub.f32 %v26, %v220
  %v222 = vand.u32 %v221, 4294901760
  %v223 = vsub.f32 %v221, %v222
  %v224 = vand.u32 %v223, 4294901760
  %225 = vmatmul.mubr.f32.gmra.mrb[0].mxu0 %v224
  %v226 = vpop.f32.mrb[0].mxu0
  %v227 = vadd.f32 0.0, %v226
  %v228 = vpop.f32.mrb[0].mxu0
  %229 = vmatprep.mubr.f32.mxu0 0.0
  %v230 = vand.u32 %v27, 4294901760
  %v231 = vsub.f32 %v27, %v230
  %v232 = vand.u32 %v231, 4294901760
  %v233 = vsub.f32 %v231, %v232
  %v234 = vand.u32 %v233, 4294901760
  %235 = vmatmul.mubr.f32.gmra.mrb[0].mxu0 %v234
  %v236 = vpop.f32.mrb[0].mxu0
  %v237 = vadd.f32 0.0, %v236
  %v238 = vpop.f32.mrb[0].mxu0
  %239 = vmatprep.mubr.f32.mxu0 0.0
  %v240 = vand.u32 %v28, 4294901760
  %v241 = vsub.f32 %v28, %v240
  %v242 = vand.u32 %v241, 4294901760
  %v243 = vsub.f32 %v241, %v242
  %v244 = vand.u32 %v243, 4294901760
  %245 = vmatmul.mubr.f32.gmra.mrb[0].mxu0 %v244
  %v246 = vpop.f32.mrb[0].mxu0
  %v247 = vadd.f32 0.0, %v246
  %v248 = vpop.f32.mrb[0].mxu0
  %249 = vmatprep.mubr.f32.mxu0 0.0
  %v250 = vand.u32 %v29, 4294901760
  %v251 = vsub.f32 %v29, %v250
  %v252 = vand.u32 %v251, 4294901760
  %v253 = vsub.f32 %v251, %v252
  %v254 = vand.u32 %v253, 4294901760
  %255 = vmatmul.mubr.f32.gmra.mrb[0].mxu0 %v254
  %v256 = vpop.f32.mrb[0].mxu0
  %v257 = vadd.f32 0.0, %v256
  %v258 = vpop.f32.mrb[0].mxu0
  %259 = vmatprep.mubr.f32.mxu0 0.0
  %v260 = vand.u32 %v30, 4294901760
  %v261 = vsub.f32 %v30, %v260
  %v262 = vand.u32 %v261, 4294901760
  %v263 = vsub.f32 %v261, %v262
  %v264 = vand.u32 %v263, 4294901760
  %265 = vmatmul.mubr.f32.gmra.mrb[0].mxu0 %v264
  %v266 = vpop.f32.mrb[0].mxu0
  %v267 = vadd.f32 0.0, %v266
  %v268 = vpop.f32.mrb[0].mxu0
  %269 = vmatprep.mubr.f32.mxu0 0.0
  %v270 = vand.u32 %v31, 4294901760
  %v271 = vsub.f32 %v31, %v270
  %v272 = vand.u32 %v271, 4294901760
  %v273 = vsub.f32 %v271, %v272
  %v274 = vand.u32 %v273, 4294901760
  %275 = vmatmul.mubr.f32.gmra.mrb[0].mxu0 %v274
  %v276 = vpop.f32.mrb[0].mxu0
  %v277 = vadd.f32 0.0, %v276
  %v278 = vpop.f32.mrb[0].mxu0
  %279 = vmatprep.mubr.f32.mxu0 0.0
  %v280 = vand.u32 %v32, 4294901760
  %v281 = vsub.f32 %v32, %v280
  %v282 = vand.u32 %v281, 4294901760
  %v283 = vsub.f32 %v281, %v282
  %v284 = vand.u32 %v283, 4294901760
  %285 = vmatmul.mubr.f32.gmra.mrb[0].mxu0 %v284
  %v286 = vpop.f32.mrb[0].mxu0
  %v287 = vadd.f32 0.0, %v286
  %v288 = vpop.f32.mrb[0].mxu0
  %289 = vdwg.mxu0
  %290 = vmatprep.subr.mxu0 0.0
  %v291 = vand.u32 %v33, 4294901760
  %v292 = vsub.f32 %v33, %v291
  %v293 = vand.u32 %v292, 4294901760
  %v294 = vsub.f32 %v292, %v293
  %v295 = vand.u32 %v294, 4294901760
  %296 = vmatpush1.msra.mxu0 %v295
  %297 = vmatprep.subr.mxu0 0.0
  %v298 = vand.u32 %v34, 4294901760
  %v299 = vsub.f32 %v34, %v298
  %v300 = vand.u32 %v299, 4294901760
  %v301 = vsub.f32 %v299, %v300
  %v302 = vand.u32 %v301, 4294901760
  %303 = vmatpush1.msra.mxu0 %v302
  %304 = vmatprep.subr.mxu0 0.0
  %v305 = vand.u32 %v35, 4294901760
  %v306 = vsub.f32 %v35, %v305
  %v307 = vand.u32 %v306, 4294901760
  %v308 = vsub.f32 %v306, %v307
  %v309 = vand.u32 %v308, 4294901760
  %310 = vmatpush1.msra.mxu0 %v309
  %311 = vmatprep.subr.mxu0 0.0
  %v312 = vand.u32 %v36, 4294901760
  %v313 = vsub.f32 %v36, %v312
  %v314 = vand.u32 %v313, 4294901760
  %v315 = vsub.f32 %v313, %v314
  %v316 = vand.u32 %v315, 4294901760
  %317 = vmatpush1.msra.mxu0 %v316
  %318 = vmatprep.subr.mxu0 0.0
  %v319 = vand.u32 %v37, 4294901760
  %v320 = vsub.f32 %v37, %v319
  %v321 = vand.u32 %v320, 4294901760
  %v322 = vsub.f32 %v320, %v321
  %v323 = vand.u32 %v322, 4294901760
  %324 = vmatpush1.msra.mxu0 %v323
  %325 = vmatprep.subr.mxu0 0.0
  %v326 = vand.u32 %v38, 4294901760
  %v327 = vsub.f32 %v38, %v326
  %v328 = vand.u32 %v327, 4294901760
  %v329 = vsub.f32 %v327, %v328
  %v330 = vand.u32 %v329, 4294901760
  %331 = vmatpush1.msra.mxu0 %v330
  %332 = vmatprep.subr.mxu0 0.0
  %v333 = vand.u32 %v39, 4294901760
  %v334 = vsub.f32 %v39, %v333
  %v335 = vand.u32 %v334, 4294901760
  %v336 = vsub.f32 %v334, %v335
  %v337 = vand.u32 %v336, 4294901760
  %338 = vmatpush1.msra.mxu0 %v337
  %339 = vmatprep.subr.mxu0 0.0
  %v340 = vand.u32 %v40, 4294901760
  %v341 = vsub.f32 %v40, %v340
  %v342 = vand.u32 %v341, 4294901760
  %v343 = vsub.f32 %v341, %v342
  %v344 = vand.u32 %v343, 4294901760
  %345 = vmatpush1.msra.mxu0 %v344
  %346 = vmatprep.subr.mxu0 0.0
  %v347 = vand.u32 %v41, 4294901760
  %v348 = vsub.f32 %v41, %v347
  %v349 = vand.u32 %v348, 4294901760
  %v350 = vsub.f32 %v348, %v349
  %v351 = vand.u32 %v350, 4294901760
  %352 = vmatpush1.msra.mxu0 %v351
  %353 = vmatprep.subr.mxu0 0.0
  %v354 = vand.u32 %v42, 4294901760
  %v355 = vsub.f32 %v42, %v354
  %v356 = vand.u32 %v355, 4294901760
  %v357 = vsub.f32 %v355, %v356
  %v358 = vand.u32 %v357, 4294901760
  %359 = vmatpush1.msra.mxu0 %v358
  %360 = vmatprep.subr.mxu0 0.0
  %v361 = vand.u32 %v43, 4294901760
  %v362 = vsub.f32 %v43, %v361
  %v363 = vand.u32 %v362, 4294901760
  %v364 = vsub.f32 %v362, %v363
  %v365 = vand.u32 %v364, 4294901760
  %366 = vmatpush1.msra.mxu0 %v365
  %367 = vmatprep.subr.mxu0 0.0
  %v368 = vand.u32 %v44, 4294901760
  %v369 = vsub.f32 %v44, %v368
  %v370 = vand.u32 %v369, 4294901760
  %v371 = vsub.f32 %v369, %v370
  %v372 = vand.u32 %v371, 4294901760
  %373 = vmatpush1.msra.mxu0 %v372
  %374 = vmatprep.subr.mxu0 0.0
  %v375 = vand.u32 %v45, 4294901760
  %v376 = vsub.f32 %v45, %v375
  %v377 = vand.u32 %v376, 4294901760
  %v378 = vsub.f32 %v376, %v377
  %v379 = vand.u32 %v378, 4294901760
  %380 = vmatpush1.msra.mxu0 %v379
  %381 = vmatprep.subr.mxu0 0.0
  %v382 = vand.u32 %v46, 4294901760
  %v383 = vsub.f32 %v46, %v382
  %v384 = vand.u32 %v383, 4294901760
  %v385 = vsub.f32 %v383, %v384
  %v386 = vand.u32 %v385, 4294901760
  %387 = vmatpush1.msra.mxu0 %v386
  %388 = vmatprep.subr.mxu0 0.0
  %v389 = vand.u32 %v47, 4294901760
  %v390 = vsub.f32 %v47, %v389
  %v391 = vand.u32 %v390, 4294901760
  %v392 = vsub.f32 %v390, %v391
  %v393 = vand.u32 %v392, 4294901760
  %394 = vmatpush1.msra.mxu0 %v393
  %395 = vmatprep.subr.mxu0 0.0
  %v396 = vand.u32 %v48, 4294901760
  %v397 = vsub.f32 %v48, %v396
  %v398 = vand.u32 %v397, 4294901760
  %v399 = vsub.f32 %v397, %v398
  %v400 = vand.u32 %v399, 4294901760
  %401 = vmatpush1.msra.mxu0 %v400
  %402 = vmatprep.subr.mxu0 0.0
  %403 = vmatpush1.msra.mxu0 0.0
  %404 = vmatprep.subr.mxu0 0.0
  %405 = vmatpush1.msra.mxu0 0.0
  %406 = vmatprep.subr.mxu0 0.0
  %407 = vmatpush1.msra.mxu0 0.0
  %408 = vmatprep.subr.mxu0 0.0
  %409 = vmatpush1.msra.mxu0 0.0
  %410 = vmatprep.subr.mxu0 0.0
  %411 = vmatpush1.msra.mxu0 0.0
  %412 = vmatprep.subr.mxu0 0.0
  %413 = vmatpush1.msra.mxu0 0.0
  %414 = vmatprep.subr.mxu0 0.0
  %415 = vmatpush1.msra.mxu0 0.0
  %416 = vmatprep.subr.mxu0 0.0
  %417 = vmatpush1.msra.mxu0 0.0
  %418 = vmatprep.subr.mxu0 0.0
  %419 = vmatpush1.msra.mxu0 0.0
  %420 = vmatprep.subr.mxu0 0.0
  %421 = vmatpush1.msra.mxu0 0.0
  %422 = vmatprep.subr.mxu0 0.0
  %423 = vmatpush1.msra.mxu0 0.0
  %424 = vmatprep.subr.mxu0 0.0
  %425 = vmatpush1.msra.mxu0 0.0
  %426 = vmatprep.subr.mxu0 0.0
  %427 = vmatpush1.msra.mxu0 0.0
  %428 = vmatprep.subr.mxu0 0.0
  %429 = vmatpush1.msra.mxu0 0.0
  %430 = vmatprep.subr.mxu0 0.0
  %431 = vmatpush1.msra.mxu0 0.0
  %432 = vmatprep.subr.mxu0 0.0
  %433 = vmatpush1.msra.mxu0 0.0
  %434 = vmatprep.mubr.f32.mxu0 0.0
  %v435 = vand.u32 %v17, 4294901760
  %436 = vmatmul.mubr.f32.gmra.mrb[0].mxu0 %v435
  %v437 = vpop.f32.mrb[0].mxu0
  %v438 = vadd.f32 %v137, %v437
  %v439 = vpop.f32.mrb[0].mxu0
  %440 = vmatprep.mubr.f32.mxu0 0.0
  %v441 = vand.u32 %v18, 4294901760
  %442 = vmatmul.mubr.f32.gmra.mrb[0].mxu0 %v441
  %v443 = vpop.f32.mrb[0].mxu0
  %v444 = vadd.f32 %v147, %v443
  %v445 = vpop.f32.mrb[0].mxu0
  %446 = vmatprep.mubr.f32.mxu0 0.0
  %v447 = vand.u32 %v19, 4294901760
  %448 = vmatmul.mubr.f32.gmra.mrb[0].mxu0 %v447
  %v449 = vpop.f32.mrb[0].mxu0
  %v450 = vadd.f32 %v157, %v449
  %v451 = vpop.f32.mrb[0].mxu0
  %452 = vmatprep.mubr.f32.mxu0 0.0
  %v453 = vand.u32 %v20, 4294901760
  %454 = vmatmul.mubr.f32.gmra.mrb[0].mxu0 %v453
  %v455 = vpop.f32.mrb[0].mxu0
  %v456 = vadd.f32 %v167, %v455
  %v457 = vpop.f32.mrb[0].mxu0
  %458 = vmatprep.mubr.f32.mxu0 0.0
  %v459 = vand.u32 %v21, 4294901760
  %460 = vmatmul.mubr.f32.gmra.mrb[0].mxu0 %v459
  %v461 = vpop.f32.mrb[0].mxu0
  %v462 = vadd.f32 %v177, %v461
  %v463 = vpop.f32.mrb[0].mxu0
  %464 = vmatprep.mubr.f32.mxu0 0.0
  %v465 = vand.u32 %v22, 4294901760
  %466 = vmatmul.mubr.f32.gmra.mrb[0].mxu0 %v465
  %v467 = vpop.f32.mrb[0].mxu0
  %v468 = vadd.f32 %v187, %v467
  %v469 = vpop.f32.mrb[0].mxu0
  %470 = vmatprep.mubr.f32.mxu0 0.0
  %v471 = vand.u32 %v23, 4294901760
  %472 = vmatmul.mubr.f32.gmra.mrb[0].mxu0 %v471
  %v473 = vpop.f32.mrb[0].mxu0
  %v474 = vadd.f32 %v197, %v473
  %v475 = vpop.f32.mrb[0].mxu0
  %476 = vmatprep.mubr.f32.mxu0 0.0
  %v477 = vand.u32 %v24, 4294901760
  %478 = vmatmul.mubr.f32.gmra.mrb[0].mxu0 %v477
  %v479 = vpop.f32.mrb[0].mxu0
  %v480 = vadd.f32 %v207, %v479
  %v481 = vpop.f32.mrb[0].mxu0
  %482 = vmatprep.mubr.f32.mxu0 0.0
  %v483 = vand.u32 %v25, 4294901760
  %484 = vmatmul.mubr.f32.gmra.mrb[0].mxu0 %v483
  %v485 = vpop.f32.mrb[0].mxu0
  %v486 = vadd.f32 %v217, %v485
  %v487 = vpop.f32.mrb[0].mxu0
  %488 = vmatprep.mubr.f32.mxu0 0.0
  %v489 = vand.u32 %v26, 4294901760
  %490 = vmatmul.mubr.f32.gmra.mrb[0].mxu0 %v489
  %v491 = vpop.f32.mrb[0].mxu0
  %v492 = vadd.f32 %v227, %v491
  %v493 = vpop.f32.mrb[0].mxu0
  %494 = vmatprep.mubr.f32.mxu0 0.0
  %v495 = vand.u32 %v27, 4294901760
  %496 = vmatmul.mubr.f32.gmra.mrb[0].mxu0 %v495
  %v497 = vpop.f32.mrb[0].mxu0
  %v498 = vadd.f32 %v237, %v497
  %v499 = vpop.f32.mrb[0].mxu0
  %500 = vmatprep.mubr.f32.mxu0 0.0
  %v501 = vand.u32 %v28, 4294901760
  %502 = vmatmul.mubr.f32.gmra.mrb[0].mxu0 %v501
  %v503 = vpop.f32.mrb[0].mxu0
  %v504 = vadd.f32 %v247, %v503
  %v505 = vpop.f32.mrb[0].mxu0
  %506 = vmatprep.mubr.f32.mxu0 0.0
  %v507 = vand.u32 %v29, 4294901760
  %508 = vmatmul.mubr.f32.gmra.mrb[0].mxu0 %v507
  %v509 = vpop.f32.mrb[0].mxu0
  %v510 = vadd.f32 %v257, %v509
  %v511 = vpop.f32.mrb[0].mxu0
  %512 = vmatprep.mubr.f32.mxu0 0.0
  %v513 = vand.u32 %v30, 4294901760
  %514 = vmatmul.mubr.f32.gmra.mrb[0].mxu0 %v513
  %v515 = vpop.f32.mrb[0].mxu0
  %v516 = vadd.f32 %v267, %v515
  %v517 = vpop.f32.mrb[0].mxu0
  %518 = vmatprep.mubr.f32.mxu0 0.0
  %v519 = vand.u32 %v31, 4294901760
  %520 = vmatmul.mubr.f32.gmra.mrb[0].mxu0 %v519
  %v521 = vpop.f32.mrb[0].mxu0
  %v522 = vadd.f32 %v277, %v521
  %v523 = vpop.f32.mrb[0].mxu0
  %524 = vmatprep.mubr.f32.mxu0 0.0
  %v525 = vand.u32 %v32, 4294901760
  %526 = vmatmul.mubr.f32.gmra.mrb[0].mxu0 %v525
  %v527 = vpop.f32.mrb[0].mxu0
  %v528 = vadd.f32 %v287, %v527
  %v529 = vpop.f32.mrb[0].mxu0
  %530 = vdwg.mxu0
  %531 = vmatprep.subr.mxu0 0.0
  %v532 = vand.u32 %v33, 4294901760
  %v533 = vsub.f32 %v33, %v532
  %534 = vmatpush1.msra.mxu0 %v533
  %535 = vmatprep.subr.mxu0 0.0
  %v536 = vand.u32 %v34, 4294901760
  %v537 = vsub.f32 %v34, %v536
  %538 = vmatpush1.msra.mxu0 %v537
  %539 = vmatprep.subr.mxu0 0.0
  %v540 = vand.u32 %v35, 4294901760
  %v541 = vsub.f32 %v35, %v540
  %542 = vmatpush1.msra.mxu0 %v541
  %543 = vmatprep.subr.mxu0 0.0
  %v544 = vand.u32 %v36, 4294901760
  %v545 = vsub.f32 %v36, %v544
  %546 = vmatpush1.msra.mxu0 %v545
  %547 = vmatprep.subr.mxu0 0.0
  %v548 = vand.u32 %v37, 4294901760
  %v549 = vsub.f32 %v37, %v548
  %550 = vmatpush1.msra.mxu0 %v549
  %551 = vmatprep.subr.mxu0 0.0
  %v552 = vand.u32 %v38, 4294901760
  %v553 = vsub.f32 %v38, %v552
  %554 = vmatpush1.msra.mxu0 %v553
  %555 = vmatprep.subr.mxu0 0.0
  %v556 = vand.u32 %v39, 4294901760
  %v557 = vsub.f32 %v39, %v556
  %558 = vmatpush1.msra.mxu0 %v557
  %559 = vmatprep.subr.mxu0 0.0
  %v560 = vand.u32 %v40, 4294901760
  %v561 = vsub.f32 %v40, %v560
  %562 = vmatpush1.msra.mxu0 %v561
  %563 = vmatprep.subr.mxu0 0.0
  %v564 = vand.u32 %v41, 4294901760
  %v565 = vsub.f32 %v41, %v564
  %566 = vmatpush1.msra.mxu0 %v565
  %567 = vmatprep.subr.mxu0 0.0
  %v568 = vand.u32 %v42, 4294901760
  %v569 = vsub.f32 %v42, %v568
  %570 = vmatpush1.msra.mxu0 %v569
  %571 = vmatprep.subr.mxu0 0.0
  %v572 = vand.u32 %v43, 4294901760
  %v573 = vsub.f32 %v43, %v572
  %574 = vmatpush1.msra.mxu0 %v573
  %575 = vmatprep.subr.mxu0 0.0
  %v576 = vand.u32 %v44, 4294901760
  %v577 = vsub.f32 %v44, %v576
  %578 = vmatpush1.msra.mxu0 %v577
  %579 = vmatprep.subr.mxu0 0.0
  %v580 = vand.u32 %v45, 4294901760
  %v581 = vsub.f32 %v45, %v580
  %582 = vmatpush1.msra.mxu0 %v581
  %583 = vmatprep.subr.mxu0 0.0
  %v584 = vand.u32 %v46, 4294901760
  %v585 = vsub.f32 %v46, %v584
  %586 = vmatpush1.msra.mxu0 %v585
  %587 = vmatprep.subr.mxu0 0.0
  %v588 = vand.u32 %v47, 4294901760
  %v589 = vsub.f32 %v47, %v588
  %590 = vmatpush1.msra.mxu0 %v589
  %591 = vmatprep.subr.mxu0 0.0
  %v592 = vand.u32 %v48, 4294901760
  %v593 = vsub.f32 %v48, %v592
  %594 = vmatpush1.msra.mxu0 %v593
  %595 = vmatprep.subr.mxu0 0.0
  %596 = vmatpush1.msra.mxu0 0.0
  %597 = vmatprep.subr.mxu0 0.0
  %598 = vmatpush1.msra.mxu0 0.0
  %599 = vmatprep.subr.mxu0 0.0
  %600 = vmatpush1.msra.mxu0 0.0
  %601 = vmatprep.subr.mxu0 0.0
  %602 = vmatpush1.msra.mxu0 0.0
  %603 = vmatprep.subr.mxu0 0.0
  %604 = vmatpush1.msra.mxu0 0.0
  %605 = vmatprep.subr.mxu0 0.0
  %606 = vmatpush1.msra.mxu0 0.0
  %607 = vmatprep.subr.mxu0 0.0
  %608 = vmatpush1.msra.mxu0 0.0
  %609 = vmatprep.subr.mxu0 0.0
  %610 = vmatpush1.msra.mxu0 0.0
  %611 = vmatprep.subr.mxu0 0.0
  %612 = vmatpush1.msra.mxu0 0.0
  %613 = vmatprep.subr.mxu0 0.0
  %614 = vmatpush1.msra.mxu0 0.0
  %615 = vmatprep.subr.mxu0 0.0
  %616 = vmatpush1.msra.mxu0 0.0
  %617 = vmatprep.subr.mxu0 0.0
  %618 = vmatpush1.msra.mxu0 0.0
  %619 = vmatprep.subr.mxu0 0.0
  %620 = vmatpush1.msra.mxu0 0.0
  %621 = vmatprep.subr.mxu0 0.0
  %622 = vmatpush1.msra.mxu0 0.0
  %623 = vmatprep.subr.mxu0 0.0
  %624 = vmatpush1.msra.mxu0 0.0
  %625 = vmatprep.subr.mxu0 0.0
  %626 = vmatpush1.msra.mxu0 0.0
  %627 = vmatprep.mubr.f32.mxu0 0.0
  %v628 = vand.u32 %v17, 4294901760
  %v629 = vsub.f32 %v17, %v628
  %630 = vmatmul.mubr.f32.gmra.mrb[0].mxu0 %v629
  %v631 = vpop.f32.mrb[0].mxu0
  %v632 = vadd.f32 %v438, %v631
  %v633 = vpop.f32.mrb[0].mxu0
  %634 = vmatprep.mubr.f32.mxu0 0.0
  %v635 = vand.u32 %v18, 4294901760
  %v636 = vsub.f32 %v18, %v635
  %637 = vmatmul.mubr.f32.gmra.mrb[0].mxu0 %v636
  %v638 = vpop.f32.mrb[0].mxu0
  %v639 = vadd.f32 %v444, %v638
  %v640 = vpop.f32.mrb[0].mxu0
  %641 = vmatprep.mubr.f32.mxu0 0.0
  %v642 = vand.u32 %v19, 4294901760
  %v643 = vsub.f32 %v19, %v642
  %644 = vmatmul.mubr.f32.gmra.mrb[0].mxu0 %v643
  %v645 = vpop.f32.mrb[0].mxu0
  %v646 = vadd.f32 %v450, %v645
  %v647 = vpop.f32.mrb[0].mxu0
  %648 = vmatprep.mubr.f32.mxu0 0.0
  %v649 = vand.u32 %v20, 4294901760
  %v650 = vsub.f32 %v20, %v649
  %651 = vmatmul.mubr.f32.gmra.mrb[0].mxu0 %v650
  %v652 = vpop.f32.mrb[0].mxu0
  %v653 = vadd.f32 %v456, %v652
  %v654 = vpop.f32.mrb[0].mxu0
  %655 = vmatprep.mubr.f32.mxu0 0.0
  %v656 = vand.u32 %v21, 4294901760
  %v657 = vsub.f32 %v21, %v656
  %658 = vmatmul.mubr.f32.gmra.mrb[0].mxu0 %v657
  %v659 = vpop.f32.mrb[0].mxu0
  %v660 = vadd.f32 %v462, %v659
  %v661 = vpop.f32.mrb[0].mxu0
  %662 = vmatprep.mubr.f32.mxu0 0.0
  %v663 = vand.u32 %v22, 4294901760
  %v664 = vsub.f32 %v22, %v663
  %665 = vmatmul.mubr.f32.gmra.mrb[0].mxu0 %v664
  %v666 = vpop.f32.mrb[0].mxu0
  %v667 = vadd.f32 %v468, %v666
  %v668 = vpop.f32.mrb[0].mxu0
  %669 = vmatprep.mubr.f32.mxu0 0.0
  %v670 = vand.u32 %v23, 4294901760
  %v671 = vsub.f32 %v23, %v670
  %672 = vmatmul.mubr.f32.gmra.mrb[0].mxu0 %v671
  %v673 = vpop.f32.mrb[0].mxu0
  %v674 = vadd.f32 %v474, %v673
  %v675 = vpop.f32.mrb[0].mxu0
  %676 = vmatprep.mubr.f32.mxu0 0.0
  %v677 = vand.u32 %v24, 4294901760
  %v678 = vsub.f32 %v24, %v677
  %679 = vmatmul.mubr.f32.gmra.mrb[0].mxu0 %v678
  %v680 = vpop.f32.mrb[0].mxu0
  %v681 = vadd.f32 %v480, %v680
  %v682 = vpop.f32.mrb[0].mxu0
  %683 = vmatprep.mubr.f32.mxu0 0.0
  %v684 = vand.u32 %v25, 4294901760
  %v685 = vsub.f32 %v25, %v684
  %686 = vmatmul.mubr.f32.gmra.mrb[0].mxu0 %v685
  %v687 = vpop.f32.mrb[0].mxu0
  %v688 = vadd.f32 %v486, %v687
  %v689 = vpop.f32.mrb[0].mxu0
  %690 = vmatprep.mubr.f32.mxu0 0.0
  %v691 = vand.u32 %v26, 4294901760
  %v692 = vsub.f32 %v26, %v691
  %693 = vmatmul.mubr.f32.gmra.mrb[0].mxu0 %v692
  %v694 = vpop.f32.mrb[0].mxu0
  %v695 = vadd.f32 %v492, %v694
  %v696 = vpop.f32.mrb[0].mxu0
  %697 = vmatprep.mubr.f32.mxu0 0.0
  %v698 = vand.u32 %v27, 4294901760
  %v699 = vsub.f32 %v27, %v698
  %700 = vmatmul.mubr.f32.gmra.mrb[0].mxu0 %v699
  %v701 = vpop.f32.mrb[0].mxu0
  %v702 = vadd.f32 %v498, %v701
  %v703 = vpop.f32.mrb[0].mxu0
  %704 = vmatprep.mubr.f32.mxu0 0.0
  %v705 = vand.u32 %v28, 4294901760
  %v706 = vsub.f32 %v28, %v705
  %707 = vmatmul.mubr.f32.gmra.mrb[0].mxu0 %v706
  %v708 = vpop.f32.mrb[0].mxu0
  %v709 = vadd.f32 %v504, %v708
  %v710 = vpop.f32.mrb[0].mxu0
  %711 = vmatprep.mubr.f32.mxu0 0.0
  %v712 = vand.u32 %v29, 4294901760
  %v713 = vsub.f32 %v29, %v712
  %714 = vmatmul.mubr.f32.gmra.mrb[0].mxu0 %v713
  %v715 = vpop.f32.mrb[0].mxu0
  %v716 = vadd.f32 %v510, %v715
  %v717 = vpop.f32.mrb[0].mxu0
  %718 = vmatprep.mubr.f32.mxu0 0.0
  %v719 = vand.u32 %v30, 4294901760
  %v720 = vsub.f32 %v30, %v719
  %721 = vmatmul.mubr.f32.gmra.mrb[0].mxu0 %v720
  %v722 = vpop.f32.mrb[0].mxu0
  %v723 = vadd.f32 %v516, %v722
  %v724 = vpop.f32.mrb[0].mxu0
  %725 = vmatprep.mubr.f32.mxu0 0.0
  %v726 = vand.u32 %v31, 4294901760
  %v727 = vsub.f32 %v31, %v726
  %728 = vmatmul.mubr.f32.gmra.mrb[0].mxu0 %v727
  %v729 = vpop.f32.mrb[0].mxu0
  %v730 = vadd.f32 %v522, %v729
  %v731 = vpop.f32.mrb[0].mxu0
  %732 = vmatprep.mubr.f32.mxu0 0.0
  %v733 = vand.u32 %v32, 4294901760
  %v734 = vsub.f32 %v32, %v733
  %735 = vmatmul.mubr.f32.gmra.mrb[0].mxu0 %v734
  %v736 = vpop.f32.mrb[0].mxu0
  %v737 = vadd.f32 %v528, %v736
  %v738 = vpop.f32.mrb[0].mxu0
  %739 = vdwg.mxu0
  %740 = vmatprep.subr.mxu0 0.0
  %v741 = vand.u32 %v33, 4294901760
  %742 = vmatpush1.msra.mxu0 %v741
  %743 = vmatprep.subr.mxu0 0.0
  %v744 = vand.u32 %v34, 4294901760
  %745 = vmatpush1.msra.mxu0 %v744
  %746 = vmatprep.subr.mxu0 0.0
  %v747 = vand.u32 %v35, 4294901760
  %748 = vmatpush1.msra.mxu0 %v747
  %749 = vmatprep.subr.mxu0 0.0
  %v750 = vand.u32 %v36, 4294901760
  %751 = vmatpush1.msra.mxu0 %v750
  %752 = vmatprep.subr.mxu0 0.0
  %v753 = vand.u32 %v37, 4294901760
  %754 = vmatpush1.msra.mxu0 %v753
  %755 = vmatprep.subr.mxu0 0.0
  %v756 = vand.u32 %v38, 4294901760
  %757 = vmatpush1.msra.mxu0 %v756
  %758 = vmatprep.subr.mxu0 0.0
  %v759 = vand.u32 %v39, 4294901760
  %760 = vmatpush1.msra.mxu0 %v759
  %761 = vmatprep.subr.mxu0 0.0
  %v762 = vand.u32 %v40, 4294901760
  %763 = vmatpush1.msra.mxu0 %v762
  %764 = vmatprep.subr.mxu0 0.0
  %v765 = vand.u32 %v41, 4294901760
  %766 = vmatpush1.msra.mxu0 %v765
  %767 = vmatprep.subr.mxu0 0.0
  %v768 = vand.u32 %v42, 4294901760
  %769 = vmatpush1.msra.mxu0 %v768
  %770 = vmatprep.subr.mxu0 0.0
  %v771 = vand.u32 %v43, 4294901760
  %772 = vmatpush1.msra.mxu0 %v771
  %773 = vmatprep.subr.mxu0 0.0
  %v774 = vand.u32 %v44, 4294901760
  %775 = vmatpush1.msra.mxu0 %v774
  %776 = vmatprep.subr.mxu0 0.0
  %v777 = vand.u32 %v45, 4294901760
  %778 = vmatpush1.msra.mxu0 %v777
  %779 = vmatprep.subr.mxu0 0.0
  %v780 = vand.u32 %v46, 4294901760
  %781 = vmatpush1.msra.mxu0 %v780
  %782 = vmatprep.subr.mxu0 0.0
  %v783 = vand.u32 %v47, 4294901760
  %784 = vmatpush1.msra.mxu0 %v783
  %785 = vmatprep.subr.mxu0 0.0
  %v786 = vand.u32 %v48, 4294901760
  %787 = vmatpush1.msra.mxu0 %v786
  %788 = vmatprep.subr.mxu0 0.0
  %789 = vmatpush1.msra.mxu0 0.0
  %790 = vmatprep.subr.mxu0 0.0
  %791 = vmatpush1.msra.mxu0 0.0
  %792 = vmatprep.subr.mxu0 0.0
  %793 = vmatpush1.msra.mxu0 0.0
  %794 = vmatprep.subr.mxu0 0.0
  %795 = vmatpush1.msra.mxu0 0.0
  %796 = vmatprep.subr.mxu0 0.0
  %797 = vmatpush1.msra.mxu0 0.0
  %798 = vmatprep.subr.mxu0 0.0
  %799 = vmatpush1.msra.mxu0 0.0
  %800 = vmatprep.subr.mxu0 0.0
  %801 = vmatpush1.msra.mxu0 0.0
  %802 = vmatprep.subr.mxu0 0.0
  %803 = vmatpush1.msra.mxu0 0.0
  %804 = vmatprep.subr.mxu0 0.0
  %805 = vmatpush1.msra.mxu0 0.0
  %806 = vmatprep.subr.mxu0 0.0
  %807 = vmatpush1.msra.mxu0 0.0
  %808 = vmatprep.subr.mxu0 0.0
  %809 = vmatpush1.msra.mxu0 0.0
  %810 = vmatprep.subr.mxu0 0.0
  %811 = vmatpush1.msra.mxu0 0.0
  %812 = vmatprep.subr.mxu0 0.0
  %813 = vmatpush1.msra.mxu0 0.0
  %814 = vmatprep.subr.mxu0 0.0
  %815 = vmatpush1.msra.mxu0 0.0
  %816 = vmatprep.subr.mxu0 0.0
  %817 = vmatpush1.msra.mxu0 0.0
  %818 = vmatprep.subr.mxu0 0.0
  %819 = vmatpush1.msra.mxu0 0.0
  %820 = vmatprep.mubr.f32.mxu0 0.0
  %v821 = vand.u32 %v17, 4294901760
  %v822 = vsub.f32 %v17, %v821
  %v823 = vand.u32 %v822, 4294901760
  %824 = vmatmul.mubr.f32.gmra.mrb[0].mxu0 %v823
  %v825 = vpop.f32.mrb[0].mxu0
  %v826 = vadd.f32 %v632, %v825
  %v827 = vpop.f32.mrb[0].mxu0
  %828 = vmatprep.mubr.f32.mxu0 0.0
  %v829 = vand.u32 %v18, 4294901760
  %v830 = vsub.f32 %v18, %v829
  %v831 = vand.u32 %v830, 4294901760
  %832 = vmatmul.mubr.f32.gmra.mrb[0].mxu0 %v831
  %v833 = vpop.f32.mrb[0].mxu0
  %v834 = vadd.f32 %v639, %v833
  %v835 = vpop.f32.mrb[0].mxu0
  %836 = vmatprep.mubr.f32.mxu0 0.0
  %v837 = vand.u32 %v19, 4294901760
  %v838 = vsub.f32 %v19, %v837
  %v839 = vand.u32 %v838, 4294901760
  %840 = vmatmul.mubr.f32.gmra.mrb[0].mxu0 %v839
  %v841 = vpop.f32.mrb[0].mxu0
  %v842 = vadd.f32 %v646, %v841
  %v843 = vpop.f32.mrb[0].mxu0
  %844 = vmatprep.mubr.f32.mxu0 0.0
  %v845 = vand.u32 %v20, 4294901760
  %v846 = vsub.f32 %v20, %v845
  %v847 = vand.u32 %v846, 4294901760
  %848 = vmatmul.mubr.f32.gmra.mrb[0].mxu0 %v847
  %v849 = vpop.f32.mrb[0].mxu0
  %v850 = vadd.f32 %v653, %v849
  %v851 = vpop.f32.mrb[0].mxu0
  %852 = vmatprep.mubr.f32.mxu0 0.0
  %v853 = vand.u32 %v21, 4294901760
  %v854 = vsub.f32 %v21, %v853
  %v855 = vand.u32 %v854, 4294901760
  %856 = vmatmul.mubr.f32.gmra.mrb[0].mxu0 %v855
  %v857 = vpop.f32.mrb[0].mxu0
  %v858 = vadd.f32 %v660, %v857
  %v859 = vpop.f32.mrb[0].mxu0
  %860 = vmatprep.mubr.f32.mxu0 0.0
  %v861 = vand.u32 %v22, 4294901760
  %v862 = vsub.f32 %v22, %v861
  %v863 = vand.u32 %v862, 4294901760
  %864 = vmatmul.mubr.f32.gmra.mrb[0].mxu0 %v863
  %v865 = vpop.f32.mrb[0].mxu0
  %v866 = vadd.f32 %v667, %v865
  %v867 = vpop.f32.mrb[0].mxu0
  %868 = vmatprep.mubr.f32.mxu0 0.0
  %v869 = vand.u32 %v23, 4294901760
  %v870 = vsub.f32 %v23, %v869
  %v871 = vand.u32 %v870, 4294901760
  %872 = vmatmul.mubr.f32.gmra.mrb[0].mxu0 %v871
  %v873 = vpop.f32.mrb[0].mxu0
  %v874 = vadd.f32 %v674, %v873
  %v875 = vpop.f32.mrb[0].mxu0
  %876 = vmatprep.mubr.f32.mxu0 0.0
  %v877 = vand.u32 %v24, 4294901760
  %v878 = vsub.f32 %v24, %v877
  %v879 = vand.u32 %v878, 4294901760
  %880 = vmatmul.mubr.f32.gmra.mrb[0].mxu0 %v879
  %v881 = vpop.f32.mrb[0].mxu0
  %v882 = vadd.f32 %v681, %v881
  %v883 = vpop.f32.mrb[0].mxu0
  %884 = vmatprep.mubr.f32.mxu0 0.0
  %v885 = vand.u32 %v25, 4294901760
  %v886 = vsub.f32 %v25, %v885
  %v887 = vand.u32 %v886, 4294901760
  %888 = vmatmul.mubr.f32.gmra.mrb[0].mxu0 %v887
  %v889 = vpop.f32.mrb[0].mxu0
  %v890 = vadd.f32 %v688, %v889
  %v891 = vpop.f32.mrb[0].mxu0
  %892 = vmatprep.mubr.f32.mxu0 0.0
  %v893 = vand.u32 %v26, 4294901760
  %v894 = vsub.f32 %v26, %v893
  %v895 = vand.u32 %v894, 4294901760
  %896 = vmatmul.mubr.f32.gmra.mrb[0].mxu0 %v895
  %v897 = vpop.f32.mrb[0].mxu0
  %v898 = vadd.f32 %v695, %v897
  %v899 = vpop.f32.mrb[0].mxu0
  %900 = vmatprep.mubr.f32.mxu0 0.0
  %v901 = vand.u32 %v27, 4294901760
  %v902 = vsub.f32 %v27, %v901
  %v903 = vand.u32 %v902, 4294901760
  %904 = vmatmul.mubr.f32.gmra.mrb[0].mxu0 %v903
  %v905 = vpop.f32.mrb[0].mxu0
  %v906 = vadd.f32 %v702, %v905
  %v907 = vpop.f32.mrb[0].mxu0
  %908 = vmatprep.mubr.f32.mxu0 0.0
  %v909 = vand.u32 %v28, 4294901760
  %v910 = vsub.f32 %v28, %v909
  %v911 = vand.u32 %v910, 4294901760
  %912 = vmatmul.mubr.f32.gmra.mrb[0].mxu0 %v911
  %v913 = vpop.f32.mrb[0].mxu0
  %v914 = vadd.f32 %v709, %v913
  %v915 = vpop.f32.mrb[0].mxu0
  %916 = vmatprep.mubr.f32.mxu0 0.0
  %v917 = vand.u32 %v29, 4294901760
  %v918 = vsub.f32 %v29, %v917
  %v919 = vand.u32 %v918, 4294901760
  %920 = vmatmul.mubr.f32.gmra.mrb[0].mxu0 %v919
  %v921 = vpop.f32.mrb[0].mxu0
  %v922 = vadd.f32 %v716, %v921
  %v923 = vpop.f32.mrb[0].mxu0
  %924 = vmatprep.mubr.f32.mxu0 0.0
  %v925 = vand.u32 %v30, 4294901760
  %v926 = vsub.f32 %v30, %v925
  %v927 = vand.u32 %v926, 4294901760
  %928 = vmatmul.mubr.f32.gmra.mrb[0].mxu0 %v927
  %v929 = vpop.f32.mrb[0].mxu0
  %v930 = vadd.f32 %v723, %v929
  %v931 = vpop.f32.mrb[0].mxu0
  %932 = vmatprep.mubr.f32.mxu0 0.0
  %v933 = vand.u32 %v31, 4294901760
  %v934 = vsub.f32 %v31, %v933
  %v935 = vand.u32 %v934, 4294901760
  %936 = vmatmul.mubr.f32.gmra.mrb[0].mxu0 %v935
  %v937 = vpop.f32.mrb[0].mxu0
  %v938 = vadd.f32 %v730, %v937
  %v939 = vpop.f32.mrb[0].mxu0
  %940 = vmatprep.mubr.f32.mxu0 0.0
  %v941 = vand.u32 %v32, 4294901760
  %v942 = vsub.f32 %v32, %v941
  %v943 = vand.u32 %v942, 4294901760
  %944 = vmatmul.mubr.f32.gmra.mrb[0].mxu0 %v943
  %v945 = vpop.f32.mrb[0].mxu0
  %v946 = vadd.f32 %v737, %v945
  %v947 = vpop.f32.mrb[0].mxu0
  %948 = vdwg.mxu0
  %949 = vmatprep.subr.mxu0 0.0
  %v950 = vand.u32 %v33, 4294901760
  %v951 = vsub.f32 %v33, %v950
  %v952 = vand.u32 %v951, 4294901760
  %953 = vmatpush1.msra.mxu0 %v952
  %954 = vmatprep.subr.mxu0 0.0
  %v955 = vand.u32 %v34, 4294901760
  %v956 = vsub.f32 %v34, %v955
  %v957 = vand.u32 %v956, 4294901760
  %958 = vmatpush1.msra.mxu0 %v957
  %959 = vmatprep.subr.mxu0 0.0
  %v960 = vand.u32 %v35, 4294901760
  %v961 = vsub.f32 %v35, %v960
  %v962 = vand.u32 %v961, 4294901760
  %963 = vmatpush1.msra.mxu0 %v962
  %964 = vmatprep.subr.mxu0 0.0
  %v965 = vand.u32 %v36, 4294901760
  %v966 = vsub.f32 %v36, %v965
  %v967 = vand.u32 %v966, 4294901760
  %968 = vmatpush1.msra.mxu0 %v967
  %969 = vmatprep.subr.mxu0 0.0
  %v970 = vand.u32 %v37, 4294901760
  %v971 = vsub.f32 %v37, %v970
  %v972 = vand.u32 %v971, 4294901760
  %973 = vmatpush1.msra.mxu0 %v972
  %974 = vmatprep.subr.mxu0 0.0
  %v975 = vand.u32 %v38, 4294901760
  %v976 = vsub.f32 %v38, %v975
  %v977 = vand.u32 %v976, 4294901760
  %978 = vmatpush1.msra.mxu0 %v977
  %979 = vmatprep.subr.mxu0 0.0
  %v980 = vand.u32 %v39, 4294901760
  %v981 = vsub.f32 %v39, %v980
  %v982 = vand.u32 %v981, 4294901760
  %983 = vmatpush1.msra.mxu0 %v982
  %984 = vmatprep.subr.mxu0 0.0
  %v985 = vand.u32 %v40, 4294901760
  %v986 = vsub.f32 %v40, %v985
  %v987 = vand.u32 %v986, 4294901760
  %988 = vmatpush1.msra.mxu0 %v987
  %989 = vmatprep.subr.mxu0 0.0
  %v990 = vand.u32 %v41, 4294901760
  %v991 = vsub.f32 %v41, %v990
  %v992 = vand.u32 %v991, 4294901760
  %993 = vmatpush1.msra.mxu0 %v992
  %994 = vmatprep.subr.mxu0 0.0
  %v995 = vand.u32 %v42, 4294901760
  %v996 = vsub.f32 %v42, %v995
  %v997 = vand.u32 %v996, 4294901760
  %998 = vmatpush1.msra.mxu0 %v997
  %999 = vmatprep.subr.mxu0 0.0
  %v1000 = vand.u32 %v43, 4294901760
  %v1001 = vsub.f32 %v43, %v1000
  %v1002 = vand.u32 %v1001, 4294901760
  %1003 = vmatpush1.msra.mxu0 %v1002
  %1004 = vmatprep.subr.mxu0 0.0
  %v1005 = vand.u32 %v44, 4294901760
  %v1006 = vsub.f32 %v44, %v1005
  %v1007 = vand.u32 %v1006, 4294901760
  %1008 = vmatpush1.msra.mxu0 %v1007
  %1009 = vmatprep.subr.mxu0 0.0
  %v1010 = vand.u32 %v45, 4294901760
  %v1011 = vsub.f32 %v45, %v1010
  %v1012 = vand.u32 %v1011, 4294901760
  %1013 = vmatpush1.msra.mxu0 %v1012
  %1014 = vmatprep.subr.mxu0 0.0
  %v1015 = vand.u32 %v46, 4294901760
  %v1016 = vsub.f32 %v46, %v1015
  %v1017 = vand.u32 %v1016, 4294901760
  %1018 = vmatpush1.msra.mxu0 %v1017
  %1019 = vmatprep.subr.mxu0 0.0
  %v1020 = vand.u32 %v47, 4294901760
  %v1021 = vsub.f32 %v47, %v1020
  %v1022 = vand.u32 %v1021, 4294901760
  %1023 = vmatpush1.msra.mxu0 %v1022
  %1024 = vmatprep.subr.mxu0 0.0
  %v1025 = vand.u32 %v48, 4294901760
  %v1026 = vsub.f32 %v48, %v1025
  %v1027 = vand.u32 %v1026, 4294901760
  %1028 = vmatpush1.msra.mxu0 %v1027
  %1029 = vmatprep.subr.mxu0 0.0
  %1030 = vmatpush1.msra.mxu0 0.0
  %1031 = vmatprep.subr.mxu0 0.0
  %1032 = vmatpush1.msra.mxu0 0.0
  %1033 = vmatprep.subr.mxu0 0.0
  %1034 = vmatpush1.msra.mxu0 0.0
  %1035 = vmatprep.subr.mxu0 0.0
  %1036 = vmatpush1.msra.mxu0 0.0
  %1037 = vmatprep.subr.mxu0 0.0
  %1038 = vmatpush1.msra.mxu0 0.0
  %1039 = vmatprep.subr.mxu0 0.0
  %1040 = vmatpush1.msra.mxu0 0.0
  %1041 = vmatprep.subr.mxu0 0.0
  %1042 = vmatpush1.msra.mxu0 0.0
  %1043 = vmatprep.subr.mxu0 0.0
  %1044 = vmatpush1.msra.mxu0 0.0
  %1045 = vmatprep.subr.mxu0 0.0
  %1046 = vmatpush1.msra.mxu0 0.0
  %1047 = vmatprep.subr.mxu0 0.0
  %1048 = vmatpush1.msra.mxu0 0.0
  %1049 = vmatprep.subr.mxu0 0.0
  %1050 = vmatpush1.msra.mxu0 0.0
  %1051 = vmatprep.subr.mxu0 0.0
  %1052 = vmatpush1.msra.mxu0 0.0
  %1053 = vmatprep.subr.mxu0 0.0
  %1054 = vmatpush1.msra.mxu0 0.0
  %1055 = vmatprep.subr.mxu0 0.0
  %1056 = vmatpush1.msra.mxu0 0.0
  %1057 = vmatprep.subr.mxu0 0.0
  %1058 = vmatpush1.msra.mxu0 0.0
  %1059 = vmatprep.subr.mxu0 0.0
  %1060 = vmatpush1.msra.mxu0 0.0
  %1061 = vmatprep.mubr.f32.mxu0 0.0
  %v1062 = vand.u32 %v17, 4294901760
  %1063 = vmatmul.mubr.f32.gmra.mrb[0].mxu0 %v1062
  %v1064 = vpop.f32.mrb[0].mxu0
  %v1065 = vadd.f32 %v826, %v1064
  %v1066 = vpop.f32.mrb[0].mxu0
  %1067 = vmatprep.mubr.f32.mxu0 0.0
  %v1068 = vand.u32 %v18, 4294901760
  %1069 = vmatmul.mubr.f32.gmra.mrb[0].mxu0 %v1068
  %v1070 = vpop.f32.mrb[0].mxu0
  %v1071 = vadd.f32 %v834, %v1070
  %v1072 = vpop.f32.mrb[0].mxu0
  %1073 = vmatprep.mubr.f32.mxu0 0.0
  %v1074 = vand.u32 %v19, 4294901760
  %1075 = vmatmul.mubr.f32.gmra.mrb[0].mxu0 %v1074
  %v1076 = vpop.f32.mrb[0].mxu0
  %v1077 = vadd.f32 %v842, %v1076
  %v1078 = vpop.f32.mrb[0].mxu0
  %1079 = vmatprep.mubr.f32.mxu0 0.0
  %v1080 = vand.u32 %v20, 4294901760
  %1081 = vmatmul.mubr.f32.gmra.mrb[0].mxu0 %v1080
  %v1082 = vpop.f32.mrb[0].mxu0
  %v1083 = vadd.f32 %v850, %v1082
  %v1084 = vpop.f32.mrb[0].mxu0
  %1085 = vmatprep.mubr.f32.mxu0 0.0
  %v1086 = vand.u32 %v21, 4294901760
  %1087 = vmatmul.mubr.f32.gmra.mrb[0].mxu0 %v1086
  %v1088 = vpop.f32.mrb[0].mxu0
  %v1089 = vadd.f32 %v858, %v1088
  %v1090 = vpop.f32.mrb[0].mxu0
  %1091 = vmatprep.mubr.f32.mxu0 0.0
  %v1092 = vand.u32 %v22, 4294901760
  %1093 = vmatmul.mubr.f32.gmra.mrb[0].mxu0 %v1092
  %v1094 = vpop.f32.mrb[0].mxu0
  %v1095 = vadd.f32 %v866, %v1094
  %v1096 = vpop.f32.mrb[0].mxu0
  %1097 = vmatprep.mubr.f32.mxu0 0.0
  %v1098 = vand.u32 %v23, 4294901760
  %1099 = vmatmul.mubr.f32.gmra.mrb[0].mxu0 %v1098
  %v1100 = vpop.f32.mrb[0].mxu0
  %v1101 = vadd.f32 %v874, %v1100
  %v1102 = vpop.f32.mrb[0].mxu0
  %1103 = vmatprep.mubr.f32.mxu0 0.0
  %v1104 = vand.u32 %v24, 4294901760
  %1105 = vmatmul.mubr.f32.gmra.mrb[0].mxu0 %v1104
  %v1106 = vpop.f32.mrb[0].mxu0
  %v1107 = vadd.f32 %v882, %v1106
  %v1108 = vpop.f32.mrb[0].mxu0
  %1109 = vmatprep.mubr.f32.mxu0 0.0
  %v1110 = vand.u32 %v25, 4294901760
  %1111 = vmatmul.mubr.f32.gmra.mrb[0].mxu0 %v1110
  %v1112 = vpop.f32.mrb[0].mxu0
  %v1113 = vadd.f32 %v890, %v1112
  %v1114 = vpop.f32.mrb[0].mxu0
  %1115 = vmatprep.mubr.f32.mxu0 0.0
  %v1116 = vand.u32 %v26, 4294901760
  %1117 = vmatmul.mubr.f32.gmra.mrb[0].mxu0 %v1116
  %v1118 = vpop.f32.mrb[0].mxu0
  %v1119 = vadd.f32 %v898, %v1118
  %v1120 = vpop.f32.mrb[0].mxu0
  %1121 = vmatprep.mubr.f32.mxu0 0.0
  %v1122 = vand.u32 %v27, 4294901760
  %1123 = vmatmul.mubr.f32.gmra.mrb[0].mxu0 %v1122
  %v1124 = vpop.f32.mrb[0].mxu0
  %v1125 = vadd.f32 %v906, %v1124
  %v1126 = vpop.f32.mrb[0].mxu0
  %1127 = vmatprep.mubr.f32.mxu0 0.0
  %v1128 = vand.u32 %v28, 4294901760
  %1129 = vmatmul.mubr.f32.gmra.mrb[0].mxu0 %v1128
  %v1130 = vpop.f32.mrb[0].mxu0
  %v1131 = vadd.f32 %v914, %v1130
  %v1132 = vpop.f32.mrb[0].mxu0
  %1133 = vmatprep.mubr.f32.mxu0 0.0
  %v1134 = vand.u32 %v29, 4294901760
  %1135 = vmatmul.mubr.f32.gmra.mrb[0].mxu0 %v1134
  %v1136 = vpop.f32.mrb[0].mxu0
  %v1137 = vadd.f32 %v922, %v1136
  %v1138 = vpop.f32.mrb[0].mxu0
  %1139 = vmatprep.mubr.f32.mxu0 0.0
  %v1140 = vand.u32 %v30, 4294901760
  %1141 = vmatmul.mubr.f32.gmra.mrb[0].mxu0 %v1140
  %v1142 = vpop.f32.mrb[0].mxu0
  %v1143 = vadd.f32 %v930, %v1142
  %v1144 = vpop.f32.mrb[0].mxu0
  %1145 = vmatprep.mubr.f32.mxu0 0.0
  %v1146 = vand.u32 %v31, 4294901760
  %1147 = vmatmul.mubr.f32.gmra.mrb[0].mxu0 %v1146
  %v1148 = vpop.f32.mrb[0].mxu0
  %v1149 = vadd.f32 %v938, %v1148
  %v1150 = vpop.f32.mrb[0].mxu0
  %1151 = vmatprep.mubr.f32.mxu0 0.0
  %v1152 = vand.u32 %v32, 4294901760
  %1153 = vmatmul.mubr.f32.gmra.mrb[0].mxu0 %v1152
  %v1154 = vpop.f32.mrb[0].mxu0
  %v1155 = vadd.f32 %v946, %v1154
  %v1156 = vpop.f32.mrb[0].mxu0
  %1157 = vdwg.mxu0
  %1158 = vmatprep.subr.mxu0 0.0
  %v1159 = vand.u32 %v33, 4294901760
  %1160 = vmatpush1.msra.mxu0 %v1159
  %1161 = vmatprep.subr.mxu0 0.0
  %v1162 = vand.u32 %v34, 4294901760
  %1163 = vmatpush1.msra.mxu0 %v1162
  %1164 = vmatprep.subr.mxu0 0.0
  %v1165 = vand.u32 %v35, 4294901760
  %1166 = vmatpush1.msra.mxu0 %v1165
  %1167 = vmatprep.subr.mxu0 0.0
  %v1168 = vand.u32 %v36, 4294901760
  %1169 = vmatpush1.msra.mxu0 %v1168
  %1170 = vmatprep.subr.mxu0 0.0
  %v1171 = vand.u32 %v37, 4294901760
  %1172 = vmatpush1.msra.mxu0 %v1171
  %1173 = vmatprep.subr.mxu0 0.0
  %v1174 = vand.u32 %v38, 4294901760
  %1175 = vmatpush1.msra.mxu0 %v1174
  %1176 = vmatprep.subr.mxu0 0.0
  %v1177 = vand.u32 %v39, 4294901760
  %1178 = vmatpush1.msra.mxu0 %v1177
  %1179 = vmatprep.subr.mxu0 0.0
  %v1180 = vand.u32 %v40, 4294901760
  %1181 = vmatpush1.msra.mxu0 %v1180
  %1182 = vmatprep.subr.mxu0 0.0
  %v1183 = vand.u32 %v41, 4294901760
  %1184 = vmatpush1.msra.mxu0 %v1183
  %1185 = vmatprep.subr.mxu0 0.0
  %v1186 = vand.u32 %v42, 4294901760
  %1187 = vmatpush1.msra.mxu0 %v1186
  %1188 = vmatprep.subr.mxu0 0.0
  %v1189 = vand.u32 %v43, 4294901760
  %1190 = vmatpush1.msra.mxu0 %v1189
  %1191 = vmatprep.subr.mxu0 0.0
  %v1192 = vand.u32 %v44, 4294901760
  %1193 = vmatpush1.msra.mxu0 %v1192
  %1194 = vmatprep.subr.mxu0 0.0
  %v1195 = vand.u32 %v45, 4294901760
  %1196 = vmatpush1.msra.mxu0 %v1195
  %1197 = vmatprep.subr.mxu0 0.0
  %v1198 = vand.u32 %v46, 4294901760
  %1199 = vmatpush1.msra.mxu0 %v1198
  %1200 = vmatprep.subr.mxu0 0.0
  %v1201 = vand.u32 %v47, 4294901760
  %1202 = vmatpush1.msra.mxu0 %v1201
  %1203 = vmatprep.subr.mxu0 0.0
  %v1204 = vand.u32 %v48, 4294901760
  %1205 = vmatpush1.msra.mxu0 %v1204
  %1206 = vmatprep.subr.mxu0 0.0
  %1207 = vmatpush1.msra.mxu0 0.0
  %1208 = vmatprep.subr.mxu0 0.0
  %1209 = vmatpush1.msra.mxu0 0.0
  %1210 = vmatprep.subr.mxu0 0.0
  %1211 = vmatpush1.msra.mxu0 0.0
  %1212 = vmatprep.subr.mxu0 0.0
  %1213 = vmatpush1.msra.mxu0 0.0
  %1214 = vmatprep.subr.mxu0 0.0
  %1215 = vmatpush1.msra.mxu0 0.0
  %1216 = vmatprep.subr.mxu0 0.0
  %1217 = vmatpush1.msra.mxu0 0.0
  %1218 = vmatprep.subr.mxu0 0.0
  %1219 = vmatpush1.msra.mxu0 0.0
  %1220 = vmatprep.subr.mxu0 0.0
  %1221 = vmatpush1.msra.mxu0 0.0
  %1222 = vmatprep.subr.mxu0 0.0
  %1223 = vmatpush1.msra.mxu0 0.0
  %1224 = vmatprep.subr.mxu0 0.0
  %1225 = vmatpush1.msra.mxu0 0.0
  %1226 = vmatprep.subr.mxu0 0.0
  %1227 = vmatpush1.msra.mxu0 0.0
  %1228 = vmatprep.subr.mxu0 0.0
  %1229 = vmatpush1.msra.mxu0 0.0
  %1230 = vmatprep.subr.mxu0 0.0
  %1231 = vmatpush1.msra.mxu0 0.0
  %1232 = vmatprep.subr.mxu0 0.0
  %1233 = vmatpush1.msra.mxu0 0.0
  %1234 = vmatprep.subr.mxu0 0.0
  %1235 = vmatpush1.msra.mxu0 0.0
  %1236 = vmatprep.subr.mxu0 0.0
  %1237 = vmatpush1.msra.mxu0 0.0
  %1238 = vmatprep.mubr.f32.mxu0 0.0
  %v1239 = vand.u32 %v17, 4294901760
  %1240 = vmatmul.mubr.f32.gmra.mrb[0].mxu0 %v1239
  %v1241 = vpop.f32.mrb[0].mxu0
  %v1242 = vadd.f32 %v1065, %v1241
  %v1243 = vpop.f32.mrb[0].mxu0
  %1244 = vmatprep.mubr.f32.mxu0 0.0
  %v1245 = vand.u32 %v18, 4294901760
  %1246 = vmatmul.mubr.f32.gmra.mrb[0].mxu0 %v1245
  %v1247 = vpop.f32.mrb[0].mxu0
  %v1248 = vadd.f32 %v1071, %v1247
  %v1249 = vpop.f32.mrb[0].mxu0
  %1250 = vmatprep.mubr.f32.mxu0 0.0
  %v1251 = vand.u32 %v19, 4294901760
  %1252 = vmatmul.mubr.f32.gmra.mrb[0].mxu0 %v1251
  %v1253 = vpop.f32.mrb[0].mxu0
  %v1254 = vadd.f32 %v1077, %v1253
  %v1255 = vpop.f32.mrb[0].mxu0
  %1256 = vmatprep.mubr.f32.mxu0 0.0
  %v1257 = vand.u32 %v20, 4294901760
  %1258 = vmatmul.mubr.f32.gmra.mrb[0].mxu0 %v1257
  %v1259 = vpop.f32.mrb[0].mxu0
  %v1260 = vadd.f32 %v1083, %v1259
  %v1261 = vpop.f32.mrb[0].mxu0
  %1262 = vmatprep.mubr.f32.mxu0 0.0
  %v1263 = vand.u32 %v21, 4294901760
  %1264 = vmatmul.mubr.f32.gmra.mrb[0].mxu0 %v1263
  %v1265 = vpop.f32.mrb[0].mxu0
  %v1266 = vadd.f32 %v1089, %v1265
  %v1267 = vpop.f32.mrb[0].mxu0
  %1268 = vmatprep.mubr.f32.mxu0 0.0
  %v1269 = vand.u32 %v22, 4294901760
  %1270 = vmatmul.mubr.f32.gmra.mrb[0].mxu0 %v1269
  %v1271 = vpop.f32.mrb[0].mxu0
  %v1272 = vadd.f32 %v1095, %v1271
  %v1273 = vpop.f32.mrb[0].mxu0
  %1274 = vmatprep.mubr.f32.mxu0 0.0
  %v1275 = vand.u32 %v23, 4294901760
  %1276 = vmatmul.mubr.f32.gmra.mrb[0].mxu0 %v1275
  %v1277 = vpop.f32.mrb[0].mxu0
  %v1278 = vadd.f32 %v1101, %v1277
  %v1279 = vpop.f32.mrb[0].mxu0
  %1280 = vmatprep.mubr.f32.mxu0 0.0
  %v1281 = vand.u32 %v24, 4294901760
  %1282 = vmatmul.mubr.f32.gmra.mrb[0].mxu0 %v1281
  %v1283 = vpop.f32.mrb[0].mxu0
  %v1284 = vadd.f32 %v1107, %v1283
  %v1285 = vpop.f32.mrb[0].mxu0
  %1286 = vmatprep.mubr.f32.mxu0 0.0
  %v1287 = vand.u32 %v25, 4294901760
  %1288 = vmatmul.mubr.f32.gmra.mrb[0].mxu0 %v1287
  %v1289 = vpop.f32.mrb[0].mxu0
  %v1290 = vadd.f32 %v1113, %v1289
  %v1291 = vpop.f32.mrb[0].mxu0
  %1292 = vmatprep.mubr.f32.mxu0 0.0
  %v1293 = vand.u32 %v26, 4294901760
  %1294 = vmatmul.mubr.f32.gmra.mrb[0].mxu0 %v1293
  %v1295 = vpop.f32.mrb[0].mxu0
  %v1296 = vadd.f32 %v1119, %v1295
  %v1297 = vpop.f32.mrb[0].mxu0
  %1298 = vmatprep.mubr.f32.mxu0 0.0
  %v1299 = vand.u32 %v27, 4294901760
  %1300 = vmatmul.mubr.f32.gmra.mrb[0].mxu0 %v1299
  %v1301 = vpop.f32.mrb[0].mxu0
  %v1302 = vadd.f32 %v1125, %v1301
  %v1303 = vpop.f32.mrb[0].mxu0
  %1304 = vmatprep.mubr.f32.mxu0 0.0
  %v1305 = vand.u32 %v28, 4294901760
  %1306 = vmatmul.mubr.f32.gmra.mrb[0].mxu0 %v1305
  %v1307 = vpop.f32.mrb[0].mxu0
  %v1308 = vadd.f32 %v1131, %v1307
  %v1309 = vpop.f32.mrb[0].mxu0
  %1310 = vmatprep.mubr.f32.mxu0 0.0
  %v1311 = vand.u32 %v29, 4294901760
  %1312 = vmatmul.mubr.f32.gmra.mrb[0].mxu0 %v1311
  %v1313 = vpop.f32.mrb[0].mxu0
  %v1314 = vadd.f32 %v1137, %v1313
  %v1315 = vpop.f32.mrb[0].mxu0
  %1316 = vmatprep.mubr.f32.mxu0 0.0
  %v1317 = vand.u32 %v30, 4294901760
  %1318 = vmatmul.mubr.f32.gmra.mrb[0].mxu0 %v1317
  %v1319 = vpop.f32.mrb[0].mxu0
  %v1320 = vadd.f32 %v1143, %v1319
  %v1321 = vpop.f32.mrb[0].mxu0
  %1322 = vmatprep.mubr.f32.mxu0 0.0
  %v1323 = vand.u32 %v31, 4294901760
  %1324 = vmatmul.mubr.f32.gmra.mrb[0].mxu0 %v1323
  %v1325 = vpop.f32.mrb[0].mxu0
  %v1326 = vadd.f32 %v1149, %v1325
  %v1327 = vpop.f32.mrb[0].mxu0
  %1328 = vmatprep.mubr.f32.mxu0 0.0
  %v1329 = vand.u32 %v32, 4294901760
  %1330 = vmatmul.mubr.f32.gmra.mrb[0].mxu0 %v1329
  %v1331 = vpop.f32.mrb[0].mxu0
  %v1332 = vadd.f32 %v1155, %v1331
  %v1333 = vpop.f32.mrb[0].mxu0
  %1334 = vdwg.mxu0
  %v1335 = vld [vmem:[%s2] sm:$0x1]
  %v1337 = vlaneseq
  %v1338 = vshrl.u32 %v1337, 7
  %v1339 = vsub.s32 0, %v1338
  %v1340 = vrot.slane %v1335, %v1339
  %v1342 = vmul.f32 %v1242, %v1340
  %v1343 = vmul.f32 %v1248, %v1340
  %v1344 = vmul.f32 %v1254, %v1340
  %v1345 = vmul.f32 %v1260, %v1340
  %v1346 = vmul.f32 %v1266, %v1340
  %v1347 = vmul.f32 %v1272, %v1340
  %v1348 = vmul.f32 %v1278, %v1340
  %v1349 = vmul.f32 %v1284, %v1340
  %v1350 = vmul.f32 %v1290, %v1340
  %v1351 = vmul.f32 %v1296, %v1340
  %v1352 = vmul.f32 %v1302, %v1340
  %v1353 = vmul.f32 %v1308, %v1340
  %v1354 = vmul.f32 %v1314, %v1340
  %v1355 = vmul.f32 %v1320, %v1340
  %v1356 = vmul.f32 %v1326, %v1340
  %v1357 = vmul.f32 %v1332, %v1340
  %v1358 = vld [vmem:[%s3] sm:$0x1]
  %v1360 = vlaneseq
  %v1361 = vshrl.u32 %v1360, 7
  %v1362 = vsub.s32 0, %v1361
  %v1363 = vrot.slane %v1358, %v1362
  %v1365 = vadd.f32 %v1342, %v1363
  %v1366 = vadd.f32 %v1343, %v1363
  %v1367 = vadd.f32 %v1344, %v1363
  %v1368 = vadd.f32 %v1345, %v1363
  %v1369 = vadd.f32 %v1346, %v1363
  %v1370 = vadd.f32 %v1347, %v1363
  %v1371 = vadd.f32 %v1348, %v1363
  %v1372 = vadd.f32 %v1349, %v1363
  %v1373 = vadd.f32 %v1350, %v1363
  %v1374 = vadd.f32 %v1351, %v1363
  %v1375 = vadd.f32 %v1352, %v1363
  %v1376 = vadd.f32 %v1353, %v1363
  %v1377 = vadd.f32 %v1354, %v1363
  %v1378 = vadd.f32 %v1355, %v1363
  %v1379 = vadd.f32 %v1356, %v1363
  %v1380 = vadd.f32 %v1357, %v1363
  %v1381 = vmax.f32 %v1365, 0.0
  %v1382 = vmax.f32 %v1366, 0.0
  %v1383 = vmax.f32 %v1367, 0.0
  %v1384 = vmax.f32 %v1368, 0.0
  %v1385 = vmax.f32 %v1369, 0.0
  %v1386 = vmax.f32 %v1370, 0.0
  %v1387 = vmax.f32 %v1371, 0.0
  %v1388 = vmax.f32 %v1372, 0.0
  %v1389 = vmax.f32 %v1373, 0.0
  %v1390 = vmax.f32 %v1374, 0.0
  %v1391 = vmax.f32 %v1375, 0.0
  %v1392 = vmax.f32 %v1376, 0.0
  %v1393 = vmax.f32 %v1377, 0.0
  %v1394 = vmax.f32 %v1378, 0.0
  %v1395 = vmax.f32 %v1379, 0.0
  %v1396 = vmax.f32 %v1380, 0.0
  %1397 = vst [vmem:[%s4] sm:$0xff] %v1381
  %1398 = vst [vmem:[%s4 + $0x8] sm:$0xff] %v1382
  %1399 = vst [vmem:[%s4 + $0x10] sm:$0xff] %v1383
  %1400 = vst [vmem:[%s4 + $0x18] sm:$0xff] %v1384
  %1401 = vst [vmem:[%s4 + $0x20] sm:$0xff] %v1385
  %1402 = vst [vmem:[%s4 + $0x28] sm:$0xff] %v1386
  %1403 = vst [vmem:[%s4 + $0x30] sm:$0xff] %v1387
  %1404 = vst [vmem:[%s4 + $0x38] sm:$0xff] %v1388
  %1405 = vst [vmem:[%s4 + $0x40] sm:$0xff] %v1389
  %1406 = vst [vmem:[%s4 + $0x48] sm:$0xff] %v1390
  %1407 = vst [vmem:[%s4 + $0x50] sm:$0xff] %v1391
  %1408 = vst [vmem:[%s4 + $0x58] sm:$0xff] %v1392
  %1409 = vst [vmem:[%s4 + $0x60] sm:$0xff] %v1393
  %1410 = vst [vmem:[%s4 + $0x68] sm:$0xff] %v1394
  %1411 = vst [vmem:[%s4 + $0x70] sm:$0xff] %v1395
  %1412 = vst [vmem:[%s4 + $0x78] sm:$0xff] %v1396
  // Predicated region
  $region18: #{network_block_apply.8} parent=0 // pred_check
    _
  $region19: #{network_block_apply.8} parent=0 // pred_check_branch
    %1414 = sbr.rel (0) target = $region21
  $region20: #{network_block_apply.8} parent=0 // pred_region
    _
  $region21: #{network_block_apply.8} parent=0 // pred_fallthru
    _
  // Predicated region
  $region22: #{network_block_apply.8} parent=0 // pred_check
    _
  $region23: #{network_block_apply.8} parent=0 // pred_check_branch
    %1416 = sbr.rel (0) target = $region25
  $region24: #{network_block_apply.8} parent=0 // pred_region
    _
  $region25: #{network_block_apply.8} parent=0 // pred_fallthru
    _

// kernel: network_block_apply.11
$region0: #{network_block_apply.11}
  #allocation0 [shape = 'u32[]', space=smem, size = 0x4, offset = 0x4, fixed_abs, tag = 'smem constant byte address 0x4 - core index']
  #allocation1 [shape = 'u32[144,128]{1,0:T(1,128)}', space=vmem, size = 0x12000, scoped, tag = 'internal scratch']
  %s0 = inlined_call_operand.vmem [shape: f32[8,128], index: 0, kind: input, shape index: {}]
  %s1 = inlined_call_operand.vmem [shape: f32[1,128], index: 1, kind: input, shape index: {}]
  %s2 = inlined_call_operand.vmem [shape: f32[1,128], index: 2, kind: input, shape index: {}]
  %s3 = inlined_call_operand.vmem [shape: f32[8,128], index: 3, kind: output, shape index: {}]
  %s4 = sld [smem:[#allocation0]]
  $region22: #{network_block_apply.11} parent=0
    _
  %s6 = ssub.s32 1, %s4
  %s7 = scalar_select 0, %s6, %s4
  // Predicated region
  $region2: #{network_block_apply.11} parent=0 // pred_check
    _
  $region3: #{network_block_apply.11} parent=0 // pred_check_branch
    %9 = sbr.rel (0) target = $region5
  $region4: #{network_block_apply.11} parent=0 // pred_region
    _
  $region5: #{network_block_apply.11} parent=0 // pred_fallthru
    _
  // Predicated region
  $region6: #{network_block_apply.11} parent=0 // pred_check
    _
  $region7: #{network_block_apply.11} parent=0 // pred_check_branch
    %11 = sbr.rel (0) target = $region9
  $region8: #{network_block_apply.11} parent=0 // pred_region
    _
  $region9: #{network_block_apply.11} parent=0 // pred_fallthru
    _
  // Predicated region
  $region10: #{network_block_apply.11} parent=0 // pred_check
    _
  $region11: #{network_block_apply.11} parent=0 // pred_check_branch
    %13 = sbr.rel (0) target = $region13
  $region12: #{network_block_apply.11} parent=0 // pred_region
    _
  $region13: #{network_block_apply.11} parent=0 // pred_fallthru
    _
  %v14 = vld [vmem:[%s0] sm:$0xff]
  %v15 = vld [vmem:[%s1] sm:$0x1]
  %v17 = vlaneseq
  %v18 = vshrl.u32 %v17, 7
  %v19 = vsub.s32 0, %v18
  %v20 = vrot.slane %v15, %v19
  %v22 = vmul.f32 %v14, %v20
  %v23 = vld [vmem:[%s2] sm:$0x1]
  %v25 = vlaneseq
  %v26 = vshrl.u32 %v25, 7
  %v27 = vsub.s32 0, %v26
  %v28 = vrot.slane %v23, %v27
  %v30 = vadd.f32 %v22, %v28
  %v31 = vmax.f32 %v30, 0.0
  %32 = vst [vmem:[%s3] sm:$0xff] %v31
  // Predicated region
  $region14: #{network_block_apply.11} parent=0 // pred_check
    _
  $region15: #{network_block_apply.11} parent=0 // pred_check_branch
    %34 = sbr.rel (0) target = $region17
  $region16: #{network_block_apply.11} parent=0 // pred_region
    _
  $region17: #{network_block_apply.11} parent=0 // pred_fallthru
    _
  // Predicated region
  $region18: #{network_block_apply.11} parent=0 // pred_check
    _
  $region19: #{network_block_apply.11} parent=0 // pred_check_branch
    %36 = sbr.rel (0) target = $region21
  $region20: #{network_block_apply.11} parent=0 // pred_region
    _
  $region21: #{network_block_apply.11} parent=0 // pred_fallthru
    _

// kernel: network_block_apply.10
$region0: #{network_block_apply.10}
  #allocation0 [shape = 'u32[]', space=smem, size = 0x4, offset = 0x4, fixed_abs, tag = 'smem constant byte address 0x4 - core index']
  #allocation1 [shape = 'u32[144,128]{1,0:T(1,128)}', space=vmem, size = 0x12000, scoped, tag = 'internal scratch']
  %s0 = inlined_call_operand.vmem [shape: f32[128,128], index: 0, kind: input, shape index: {}]
  %s1 = inlined_call_operand.vmem [shape: f32[128,128], index: 1, kind: input, shape index: {}]
  %s2 = inlined_call_operand.vmem [shape: f32[128,128], index: 2, kind: input, shape index: {}, may-alias: {2,3}]
  %s3 = inlined_call_operand.vmem [shape: f32[128,128], index: 3, kind: output, shape index: {}, may-alias: {2,3}]
  %s4 = sld [smem:[#allocation0]]
  $region22: #{network_block_apply.10} parent=0
    _
  %s6 = ssub.s32 1, %s4
  %s7 = scalar_select 0, %s6, %s4
  // Predicated region
  $region2: #{network_block_apply.10} parent=0 // pred_check
    _
  $region3: #{network_block_apply.10} parent=0 // pred_check_branch
    %9 = sbr.rel (0) target = $region5
  $region4: #{network_block_apply.10} parent=0 // pred_region
    _
  $region5: #{network_block_apply.10} parent=0 // pred_fallthru
    _
  // Predicated region
  $region6: #{network_block_apply.10} parent=0 // pred_check
    _
  $region7: #{network_block_apply.10} parent=0 // pred_check_branch
    %11 = sbr.rel (0) target = $region9
  $region8: #{network_block_apply.10} parent=0 // pred_region
    _
  $region9: #{network_block_apply.10} parent=0 // pred_fallthru
    _
  // Predicated region
  $region10: #{network_block_apply.10} parent=0 // pred_check
    _
  $region11: #{network_block_apply.10} parent=0 // pred_check_branch
    %13 = sbr.rel (0) target = $region13
  $region12: #{network_block_apply.10} parent=0 // pred_region
    _
  $region13: #{network_block_apply.10} parent=0 // pred_fallthru
    _
  %v14 = vld [vmem:[%s0] sm:$0xff]
  %v15 = vld [vmem:[%s0 + $0x8] sm:$0xff]
  %v16 = vld [vmem:[%s0 + $0x10] sm:$0xff]
  %v17 = vld [vmem:[%s0 + $0x18] sm:$0xff]
  %v18 = vld [vmem:[%s0 + $0x20] sm:$0xff]
  %v19 = vld [vmem:[%s0 + $0x28] sm:$0xff]
  %v20 = vld [vmem:[%s0 + $0x30] sm:$0xff]
  %v21 = vld [vmem:[%s0 + $0x38] sm:$0xff]
  %v22 = vld [vmem:[%s0 + $0x40] sm:$0xff]
  %v23 = vld [vmem:[%s0 + $0x48] sm:$0xff]
  %v24 = vld [vmem:[%s0 + $0x50] sm:$0xff]
  %v25 = vld [vmem:[%s0 + $0x58] sm:$0xff]
  %v26 = vld [vmem:[%s0 + $0x60] sm:$0xff]
  %v27 = vld [vmem:[%s0 + $0x68] sm:$0xff]
  %v28 = vld [vmem:[%s0 + $0x70] sm:$0xff]
  %v29 = vld [vmem:[%s0 + $0x78] sm:$0xff]
  %v30 = vld [vmem:[%s1] sm:$0xff]
  %v31 = vld [vmem:[%s1 + $0x8] sm:$0xff]
  %v32 = vld [vmem:[%s1 + $0x10] sm:$0xff]
  %v33 = vld [vmem:[%s1 + $0x18] sm:$0xff]
  %v34 = vld [vmem:[%s1 + $0x20] sm:$0xff]
  %v35 = vld [vmem:[%s1 + $0x28] sm:$0xff]
  %v36 = vld [vmem:[%s1 + $0x30] sm:$0xff]
  %v37 = vld [vmem:[%s1 + $0x38] sm:$0xff]
  %v38 = vld [vmem:[%s1 + $0x40] sm:$0xff]
  %v39 = vld [vmem:[%s1 + $0x48] sm:$0xff]
  %v40 = vld [vmem:[%s1 + $0x50] sm:$0xff]
  %v41 = vld [vmem:[%s1 + $0x58] sm:$0xff]
  %v42 = vld [vmem:[%s1 + $0x60] sm:$0xff]
  %v43 = vld [vmem:[%s1 + $0x68] sm:$0xff]
  %v44 = vld [vmem:[%s1 + $0x70] sm:$0xff]
  %v45 = vld [vmem:[%s1 + $0x78] sm:$0xff]
  %v46 = vld [vmem:[%s2] sm:$0xff]
  %v47 = vld [vmem:[%s2 + $0x8] sm:$0xff]
  %v48 = vld [vmem:[%s2 + $0x10] sm:$0xff]
  %v49 = vld [vmem:[%s2 + $0x18] sm:$0xff]
  %v50 = vld [vmem:[%s2 + $0x20] sm:$0xff]
  %v51 = vld [vmem:[%s2 + $0x28] sm:$0xff]
  %v52 = vld [vmem:[%s2 + $0x30] sm:$0xff]
  %v53 = vld [vmem:[%s2 + $0x38] sm:$0xff]
  %v54 = vld [vmem:[%s2 + $0x40] sm:$0xff]
  %v55 = vld [vmem:[%s2 + $0x48] sm:$0xff]
  %v56 = vld [vmem:[%s2 + $0x50] sm:$0xff]
  %v57 = vld [vmem:[%s2 + $0x58] sm:$0xff]
  %v58 = vld [vmem:[%s2 + $0x60] sm:$0xff]
  %v59 = vld [vmem:[%s2 + $0x68] sm:$0xff]
  %v60 = vld [vmem:[%s2 + $0x70] sm:$0xff]
  %v61 = vld [vmem:[%s2 + $0x78] sm:$0xff]
  %62 = vmatprep.subr.mxu0 0.0
  %v63 = vand.u32 %v30, 4294901760
  %64 = vmatpush1.msra.mxu0 %v63
  %65 = vmatprep.subr.mxu0 0.0
  %v66 = vand.u32 %v31, 4294901760
  %67 = vmatpush1.msra.mxu0 %v66
  %68 = vmatprep.subr.mxu0 0.0
  %v69 = vand.u32 %v32, 4294901760
  %70 = vmatpush1.msra.mxu0 %v69
  %71 = vmatprep.subr.mxu0 0.0
  %v72 = vand.u32 %v33, 4294901760
  %73 = vmatpush1.msra.mxu0 %v72
  %74 = vmatprep.subr.mxu0 0.0
  %v75 = vand.u32 %v34, 4294901760
  %76 = vmatpush1.msra.mxu0 %v75
  %77 = vmatprep.subr.mxu0 0.0
  %v78 = vand.u32 %v35, 4294901760
  %79 = vmatpush1.msra.mxu0 %v78
  %80 = vmatprep.subr.mxu0 0.0
  %v81 = vand.u32 %v36, 4294901760
  %82 = vmatpush1.msra.mxu0 %v81
  %83 = vmatprep.subr.mxu0 0.0
  %v84 = vand.u32 %v37, 4294901760
  %85 = vmatpush1.msra.mxu0 %v84
  %86 = vmatprep.subr.mxu0 0.0
  %v87 = vand.u32 %v38, 4294901760
  %88 = vmatpush1.msra.mxu0 %v87
  %89 = vmatprep.subr.mxu0 0.0
  %v90 = vand.u32 %v39, 4294901760
  %91 = vmatpush1.msra.mxu0 %v90
  %92 = vmatprep.subr.mxu0 0.0
  %v93 = vand.u32 %v40, 4294901760
  %94 = vmatpush1.msra.mxu0 %v93
  %95 = vmatprep.subr.mxu0 0.0
  %v96 = vand.u32 %v41, 4294901760
  %97 = vmatpush1.msra.mxu0 %v96
  %98 = vmatprep.subr.mxu0 0.0
  %v99 = vand.u32 %v42, 4294901760
  %100 = vmatpush1.msra.mxu0 %v99
  %101 = vmatprep.subr.mxu0 0.0
  %v102 = vand.u32 %v43, 4294901760
  %103 = vmatpush1.msra.mxu0 %v102
  %104 = vmatprep.subr.mxu0 0.0
  %v105 = vand.u32 %v44, 4294901760
  %106 = vmatpush1.msra.mxu0 %v105
  %107 = vmatprep.subr.mxu0 0.0
  %v108 = vand.u32 %v45, 4294901760
  %109 = vmatpush1.msra.mxu0 %v108
  %110 = vmatprep.subr.mxu0 0.0
  %111 = vmatpush1.msra.mxu0 0.0
  %112 = vmatprep.subr.mxu0 0.0
  %113 = vmatpush1.msra.mxu0 0.0
  %114 = vmatprep.subr.mxu0 0.0
  %115 = vmatpush1.msra.mxu0 0.0
  %116 = vmatprep.subr.mxu0 0.0
  %117 = vmatpush1.msra.mxu0 0.0
  %118 = vmatprep.subr.mxu0 0.0
  %119 = vmatpush1.msra.mxu0 0.0
  %120 = vmatprep.subr.mxu0 0.0
  %121 = vmatpush1.msra.mxu0 0.0
  %122 = vmatprep.subr.mxu0 0.0
  %123 = vmatpush1.msra.mxu0 0.0
  %124 = vmatprep.subr.mxu0 0.0
  %125 = vmatpush1.msra.mxu0 0.0
  %126 = vmatprep.subr.mxu0 0.0
  %127 = vmatpush1.msra.mxu0 0.0
  %128 = vmatprep.subr.mxu0 0.0
  %129 = vmatpush1.msra.mxu0 0.0
  %130 = vmatprep.subr.mxu0 0.0
  %131 = vmatpush1.msra.mxu0 0.0
  %132 = vmatprep.subr.mxu0 0.0
  %133 = vmatpush1.msra.mxu0 0.0
  %134 = vmatprep.subr.mxu0 0.0
  %135 = vmatpush1.msra.mxu0 0.0
  %136 = vmatprep.subr.mxu0 0.0
  %137 = vmatpush1.msra.mxu0 0.0
  %138 = vmatprep.subr.mxu0 0.0
  %139 = vmatpush1.msra.mxu0 0.0
  %140 = vmatprep.subr.mxu0 0.0
  %141 = vmatpush1.msra.mxu0 0.0
  %142 = vmatprep.mubr.f32.mxu0 0.0
  %v143 = vand.u32 %v14, 4294901760
  %v144 = vsub.f32 %v14, %v143
  %v145 = vand.u32 %v144, 4294901760
  %v146 = vsub.f32 %v144, %v145
  %v147 = vand.u32 %v146, 4294901760
  %148 = vmatmul.mubr.f32.gmra.mrb[0].mxu0 %v147
  %v149 = vpop.f32.mrb[0].mxu0
  %v150 = vadd.f32 %v46, %v149
  %v151 = vpop.f32.mrb[0].mxu0
  %152 = vmatprep.mubr.f32.mxu0 0.0
  %v153 = vand.u32 %v15, 4294901760
  %v154 = vsub.f32 %v15, %v153
  %v155 = vand.u32 %v154, 4294901760
  %v156 = vsub.f32 %v154, %v155
  %v157 = vand.u32 %v156, 4294901760
  %158 = vmatmul.mubr.f32.gmra.mrb[0].mxu0 %v157
  %v159 = vpop.f32.mrb[0].mxu0
  %v160 = vadd.f32 %v47, %v159
  %v161 = vpop.f32.mrb[0].mxu0
  %162 = vmatprep.mubr.f32.mxu0 0.0
  %v163 = vand.u32 %v16, 4294901760
  %v164 = vsub.f32 %v16, %v163
  %v165 = vand.u32 %v164, 4294901760
  %v166 = vsub.f32 %v164, %v165
  %v167 = vand.u32 %v166, 4294901760
  %168 = vmatmul.mubr.f32.gmra.mrb[0].mxu0 %v167
  %v169 = vpop.f32.mrb[0].mxu0
  %v170 = vadd.f32 %v48, %v169
  %v171 = vpop.f32.mrb[0].mxu0
  %172 = vmatprep.mubr.f32.mxu0 0.0
  %v173 = vand.u32 %v17, 4294901760
  %v174 = vsub.f32 %v17, %v173
  %v175 = vand.u32 %v174, 4294901760
  %v176 = vsub.f32 %v174, %v175
  %v177 = vand.u32 %v176, 4294901760
  %178 = vmatmul.mubr.f32.gmra.mrb[0].mxu0 %v177
  %v179 = vpop.f32.mrb[0].mxu0
  %v180 = vadd.f32 %v49, %v179
  %v181 = vpop.f32.mrb[0].mxu0
  %182 = vmatprep.mubr.f32.mxu0 0.0
  %v183 = vand.u32 %v18, 4294901760
  %v184 = vsub.f32 %v18, %v183
  %v185 = vand.u32 %v184, 4294901760
  %v186 = vsub.f32 %v184, %v185
  %v187 = vand.u32 %v186, 4294901760
  %188 = vmatmul.mubr.f32.gmra.mrb[0].mxu0 %v187
  %v189 = vpop.f32.mrb[0].mxu0
  %v190 = vadd.f32 %v50, %v189
  %v191 = vpop.f32.mrb[0].mxu0
  %192 = vmatprep.mubr.f32.mxu0 0.0
  %v193 = vand.u32 %v19, 4294901760
  %v194 = vsub.f32 %v19, %v193
  %v195 = vand.u32 %v194, 4294901760
  %v196 = vsub.f32 %v194, %v195
  %v197 = vand.u32 %v196, 4294901760
  %198 = vmatmul.mubr.f32.gmra.mrb[0].mxu0 %v197
  %v199 = vpop.f32.mrb[0].mxu0
  %v200 = vadd.f32 %v51, %v199
  %v201 = vpop.f32.mrb[0].mxu0
  %202 = vmatprep.mubr.f32.mxu0 0.0
  %v203 = vand.u32 %v20, 4294901760
  %v204 = vsub.f32 %v20, %v203
  %v205 = vand.u32 %v204, 4294901760
  %v206 = vsub.f32 %v204, %v205
  %v207 = vand.u32 %v206, 4294901760
  %208 = vmatmul.mubr.f32.gmra.mrb[0].mxu0 %v207
  %v209 = vpop.f32.mrb[0].mxu0
  %v210 = vadd.f32 %v52, %v209
  %v211 = vpop.f32.mrb[0].mxu0
  %212 = vmatprep.mubr.f32.mxu0 0.0
  %v213 = vand.u32 %v21, 4294901760
  %v214 = vsub.f32 %v21, %v213
  %v215 = vand.u32 %v214, 4294901760
  %v216 = vsub.f32 %v214, %v215
  %v217 = vand.u32 %v216, 4294901760
  %218 = vmatmul.mubr.f32.gmra.mrb[0].mxu0 %v217
  %v219 = vpop.f32.mrb[0].mxu0
  %v220 = vadd.f32 %v53, %v219
  %v221 = vpop.f32.mrb[0].mxu0
  %222 = vmatprep.mubr.f32.mxu0 0.0
  %v223 = vand.u32 %v22, 4294901760
  %v224 = vsub.f32 %v22, %v223
  %v225 = vand.u32 %v224, 4294901760
  %v226 = vsub.f32 %v224, %v225
  %v227 = vand.u32 %v226, 4294901760
  %228 = vmatmul.mubr.f32.gmra.mrb[0].mxu0 %v227
  %v229 = vpop.f32.mrb[0].mxu0
  %v230 = vadd.f32 %v54, %v229
  %v231 = vpop.f32.mrb[0].mxu0
  %232 = vmatprep.mubr.f32.mxu0 0.0
  %v233 = vand.u32 %v23, 4294901760
  %v234 = vsub.f32 %v23, %v233
  %v235 = vand.u32 %v234, 4294901760
  %v236 = vsub.f32 %v234, %v235
  %v237 = vand.u32 %v236, 4294901760
  %238 = vmatmul.mubr.f32.gmra.mrb[0].mxu0 %v237
  %v239 = vpop.f32.mrb[0].mxu0
  %v240 = vadd.f32 %v55, %v239
  %v241 = vpop.f32.mrb[0].mxu0
  %242 = vmatprep.mubr.f32.mxu0 0.0
  %v243 = vand.u32 %v24, 4294901760
  %v244 = vsub.f32 %v24, %v243
  %v245 = vand.u32 %v244, 4294901760
  %v246 = vsub.f32 %v244, %v245
  %v247 = vand.u32 %v246, 4294901760
  %248 = vmatmul.mubr.f32.gmra.mrb[0].mxu0 %v247
  %v249 = vpop.f32.mrb[0].mxu0
  %v250 = vadd.f32 %v56, %v249
  %v251 = vpop.f32.mrb[0].mxu0
  %252 = vmatprep.mubr.f32.mxu0 0.0
  %v253 = vand.u32 %v25, 4294901760
  %v254 = vsub.f32 %v25, %v253
  %v255 = vand.u32 %v254, 4294901760
  %v256 = vsub.f32 %v254, %v255
  %v257 = vand.u32 %v256, 4294901760
  %258 = vmatmul.mubr.f32.gmra.mrb[0].mxu0 %v257
  %v259 = vpop.f32.mrb[0].mxu0
  %v260 = vadd.f32 %v57, %v259
  %v261 = vpop.f32.mrb[0].mxu0
  %262 = vmatprep.mubr.f32.mxu0 0.0
  %v263 = vand.u32 %v26, 4294901760
  %v264 = vsub.f32 %v26, %v263
  %v265 = vand.u32 %v264, 4294901760
  %v266 = vsub.f32 %v264, %v265
  %v267 = vand.u32 %v266, 4294901760
  %268 = vmatmul.mubr.f32.gmra.mrb[0].mxu0 %v267
  %v269 = vpop.f32.mrb[0].mxu0
  %v270 = vadd.f32 %v58, %v269
  %v271 = vpop.f32.mrb[0].mxu0
  %272 = vmatprep.mubr.f32.mxu0 0.0
  %v273 = vand.u32 %v27, 4294901760
  %v274 = vsub.f32 %v27, %v273
  %v275 = vand.u32 %v274, 4294901760
  %v276 = vsub.f32 %v274, %v275
  %v277 = vand.u32 %v276, 4294901760
  %278 = vmatmul.mubr.f32.gmra.mrb[0].mxu0 %v277
  %v279 = vpop.f32.mrb[0].mxu0
  %v280 = vadd.f32 %v59, %v279
  %v281 = vpop.f32.mrb[0].mxu0
  %282 = vmatprep.mubr.f32.mxu0 0.0
  %v283 = vand.u32 %v28, 4294901760
  %v284 = vsub.f32 %v28, %v283
  %v285 = vand.u32 %v284, 4294901760
  %v286 = vsub.f32 %v284, %v285
  %v287 = vand.u32 %v286, 4294901760
  %288 = vmatmul.mubr.f32.gmra.mrb[0].mxu0 %v287
  %v289 = vpop.f32.mrb[0].mxu0
  %v290 = vadd.f32 %v60, %v289
  %v291 = vpop.f32.mrb[0].mxu0
  %292 = vmatprep.mubr.f32.mxu0 0.0
  %v293 = vand.u32 %v29, 4294901760
  %v294 = vsub.f32 %v29, %v293
  %v295 = vand.u32 %v294, 4294901760
  %v296 = vsub.f32 %v294, %v295
  %v297 = vand.u32 %v296, 4294901760
  %298 = vmatmul.mubr.f32.gmra.mrb[0].mxu0 %v297
  %v299 = vpop.f32.mrb[0].mxu0
  %v300 = vadd.f32 %v61, %v299
  %v301 = vpop.f32.mrb[0].mxu0
  %302 = vdwg.mxu0
  %303 = vmatprep.subr.mxu0 0.0
  %v304 = vand.u32 %v30, 4294901760
  %v305 = vsub.f32 %v30, %v304
  %v306 = vand.u32 %v305, 4294901760
  %v307 = vsub.f32 %v305, %v306
  %v308 = vand.u32 %v307, 4294901760
  %309 = vmatpush1.msra.mxu0 %v308
  %310 = vmatprep.subr.mxu0 0.0
  %v311 = vand.u32 %v31, 4294901760
  %v312 = vsub.f32 %v31, %v311
  %v313 = vand.u32 %v312, 4294901760
  %v314 = vsub.f32 %v312, %v313
  %v315 = vand.u32 %v314, 4294901760
  %316 = vmatpush1.msra.mxu0 %v315
  %317 = vmatprep.subr.mxu0 0.0
  %v318 = vand.u32 %v32, 4294901760
  %v319 = vsub.f32 %v32, %v318
  %v320 = vand.u32 %v319, 4294901760
  %v321 = vsub.f32 %v319, %v320
  %v322 = vand.u32 %v321, 4294901760
  %323 = vmatpush1.msra.mxu0 %v322
  %324 = vmatprep.subr.mxu0 0.0
  %v325 = vand.u32 %v33, 4294901760
  %v326 = vsub.f32 %v33, %v325
  %v327 = vand.u32 %v326, 4294901760
  %v328 = vsub.f32 %v326, %v327
  %v329 = vand.u32 %v328, 4294901760
  %330 = vmatpush1.msra.mxu0 %v329
  %331 = vmatprep.subr.mxu0 0.0
  %v332 = vand.u32 %v34, 4294901760
  %v333 = vsub.f32 %v34, %v332
  %v334 = vand.u32 %v333, 4294901760
  %v335 = vsub.f32 %v333, %v334
  %v336 = vand.u32 %v335, 4294901760
  %337 = vmatpush1.msra.mxu0 %v336
  %338 = vmatprep.subr.mxu0 0.0
  %v339 = vand.u32 %v35, 4294901760
  %v340 = vsub.f32 %v35, %v339
  %v341 = vand.u32 %v340, 4294901760
  %v342 = vsub.f32 %v340, %v341
  %v343 = vand.u32 %v342, 4294901760
  %344 = vmatpush1.msra.mxu0 %v343
  %345 = vmatprep.subr.mxu0 0.0
  %v346 = vand.u32 %v36, 4294901760
  %v347 = vsub.f32 %v36, %v346
  %v348 = vand.u32 %v347, 4294901760
  %v349 = vsub.f32 %v347, %v348
  %v350 = vand.u32 %v349, 4294901760
  %351 = vmatpush1.msra.mxu0 %v350
  %352 = vmatprep.subr.mxu0 0.0
  %v353 = vand.u32 %v37, 4294901760
  %v354 = vsub.f32 %v37, %v353
  %v355 = vand.u32 %v354, 4294901760
  %v356 = vsub.f32 %v354, %v355
  %v357 = vand.u32 %v356, 4294901760
  %358 = vmatpush1.msra.mxu0 %v357
  %359 = vmatprep.subr.mxu0 0.0
  %v360 = vand.u32 %v38, 4294901760
  %v361 = vsub.f32 %v38, %v360
  %v362 = vand.u32 %v361, 4294901760
  %v363 = vsub.f32 %v361, %v362
  %v364 = vand.u32 %v363, 4294901760
  %365 = vmatpush1.msra.mxu0 %v364
  %366 = vmatprep.subr.mxu0 0.0
  %v367 = vand.u32 %v39, 4294901760
  %v368 = vsub.f32 %v39, %v367
  %v369 = vand.u32 %v368, 4294901760
  %v370 = vsub.f32 %v368, %v369
  %v371 = vand.u32 %v370, 4294901760
  %372 = vmatpush1.msra.mxu0 %v371
  %373 = vmatprep.subr.mxu0 0.0
  %v374 = vand.u32 %v40, 4294901760
  %v375 = vsub.f32 %v40, %v374
  %v376 = vand.u32 %v375, 4294901760
  %v377 = vsub.f32 %v375, %v376
  %v378 = vand.u32 %v377, 4294901760
  %379 = vmatpush1.msra.mxu0 %v378
  %380 = vmatprep.subr.mxu0 0.0
  %v381 = vand.u32 %v41, 4294901760
  %v382 = vsub.f32 %v41, %v381
  %v383 = vand.u32 %v382, 4294901760
  %v384 = vsub.f32 %v382, %v383
  %v385 = vand.u32 %v384, 4294901760
  %386 = vmatpush1.msra.mxu0 %v385
  %387 = vmatprep.subr.mxu0 0.0
  %v388 = vand.u32 %v42, 4294901760
  %v389 = vsub.f32 %v42, %v388
  %v390 = vand.u32 %v389, 4294901760
  %v391 = vsub.f32 %v389, %v390
  %v392 = vand.u32 %v391, 4294901760
  %393 = vmatpush1.msra.mxu0 %v392
  %394 = vmatprep.subr.mxu0 0.0
  %v395 = vand.u32 %v43, 4294901760
  %v396 = vsub.f32 %v43, %v395
  %v397 = vand.u32 %v396, 4294901760
  %v398 = vsub.f32 %v396, %v397
  %v399 = vand.u32 %v398, 4294901760
  %400 = vmatpush1.msra.mxu0 %v399
  %401 = vmatprep.subr.mxu0 0.0
  %v402 = vand.u32 %v44, 4294901760
  %v403 = vsub.f32 %v44, %v402
  %v404 = vand.u32 %v403, 4294901760
  %v405 = vsub.f32 %v403, %v404
  %v406 = vand.u32 %v405, 4294901760
  %407 = vmatpush1.msra.mxu0 %v406
  %408 = vmatprep.subr.mxu0 0.0
  %v409 = vand.u32 %v45, 4294901760
  %v410 = vsub.f32 %v45, %v409
  %v411 = vand.u32 %v410, 4294901760
  %v412 = vsub.f32 %v410, %v411
  %v413 = vand.u32 %v412, 4294901760
  %414 = vmatpush1.msra.mxu0 %v413
  %415 = vmatprep.subr.mxu0 0.0
  %416 = vmatpush1.msra.mxu0 0.0
  %417 = vmatprep.subr.mxu0 0.0
  %418 = vmatpush1.msra.mxu0 0.0
  %419 = vmatprep.subr.mxu0 0.0
  %420 = vmatpush1.msra.mxu0 0.0
  %421 = vmatprep.subr.mxu0 0.0
  %422 = vmatpush1.msra.mxu0 0.0
  %423 = vmatprep.subr.mxu0 0.0
  %424 = vmatpush1.msra.mxu0 0.0
  %425 = vmatprep.subr.mxu0 0.0
  %426 = vmatpush1.msra.mxu0 0.0
  %427 = vmatprep.subr.mxu0 0.0
  %428 = vmatpush1.msra.mxu0 0.0
  %429 = vmatprep.subr.mxu0 0.0
  %430 = vmatpush1.msra.mxu0 0.0
  %431 = vmatprep.subr.mxu0 0.0
  %432 = vmatpush1.msra.mxu0 0.0
  %433 = vmatprep.subr.mxu0 0.0
  %434 = vmatpush1.msra.mxu0 0.0
  %435 = vmatprep.subr.mxu0 0.0
  %436 = vmatpush1.msra.mxu0 0.0
  %437 = vmatprep.subr.mxu0 0.0
  %438 = vmatpush1.msra.mxu0 0.0
  %439 = vmatprep.subr.mxu0 0.0
  %440 = vmatpush1.msra.mxu0 0.0
  %441 = vmatprep.subr.mxu0 0.0
  %442 = vmatpush1.msra.mxu0 0.0
  %443 = vmatprep.subr.mxu0 0.0
  %444 = vmatpush1.msra.mxu0 0.0
  %445 = vmatprep.subr.mxu0 0.0
  %446 = vmatpush1.msra.mxu0 0.0
  %447 = vmatprep.mubr.f32.mxu0 0.0
  %v448 = vand.u32 %v14, 4294901760
  %449 = vmatmul.mubr.f32.gmra.mrb[0].mxu0 %v448
  %v450 = vpop.f32.mrb[0].mxu0
  %v451 = vadd.f32 %v150, %v450
  %v452 = vpop.f32.mrb[0].mxu0
  %453 = vmatprep.mubr.f32.mxu0 0.0
  %v454 = vand.u32 %v15, 4294901760
  %455 = vmatmul.mubr.f32.gmra.mrb[0].mxu0 %v454
  %v456 = vpop.f32.mrb[0].mxu0
  %v457 = vadd.f32 %v160, %v456
  %v458 = vpop.f32.mrb[0].mxu0
  %459 = vmatprep.mubr.f32.mxu0 0.0
  %v460 = vand.u32 %v16, 4294901760
  %461 = vmatmul.mubr.f32.gmra.mrb[0].mxu0 %v460
  %v462 = vpop.f32.mrb[0].mxu0
  %v463 = vadd.f32 %v170, %v462
  %v464 = vpop.f32.mrb[0].mxu0
  %465 = vmatprep.mubr.f32.mxu0 0.0
  %v466 = vand.u32 %v17, 4294901760
  %467 = vmatmul.mubr.f32.gmra.mrb[0].mxu0 %v466
  %v468 = vpop.f32.mrb[0].mxu0
  %v469 = vadd.f32 %v180, %v468
  %v470 = vpop.f32.mrb[0].mxu0
  %471 = vmatprep.mubr.f32.mxu0 0.0
  %v472 = vand.u32 %v18, 4294901760
  %473 = vmatmul.mubr.f32.gmra.mrb[0].mxu0 %v472
  %v474 = vpop.f32.mrb[0].mxu0
  %v475 = vadd.f32 %v190, %v474
  %v476 = vpop.f32.mrb[0].mxu0
  %477 = vmatprep.mubr.f32.mxu0 0.0
  %v478 = vand.u32 %v19, 4294901760
  %479 = vmatmul.mubr.f32.gmra.mrb[0].mxu0 %v478
  %v480 = vpop.f32.mrb[0].mxu0
  %v481 = vadd.f32 %v200, %v480
  %v482 = vpop.f32.mrb[0].mxu0
  %483 = vmatprep.mubr.f32.mxu0 0.0
  %v484 = vand.u32 %v20, 4294901760
  %485 = vmatmul.mubr.f32.gmra.mrb[0].mxu0 %v484
  %v486 = vpop.f32.mrb[0].mxu0
  %v487 = vadd.f32 %v210, %v486
  %v488 = vpop.f32.mrb[0].mxu0
  %489 = vmatprep.mubr.f32.mxu0 0.0
  %v490 = vand.u32 %v21, 4294901760
  %491 = vmatmul.mubr.f32.gmra.mrb[0].mxu0 %v490
  %v492 = vpop.f32.mrb[0].mxu0
  %v493 = vadd.f32 %v220, %v492
  %v494 = vpop.f32.mrb[0].mxu0
  %495 = vmatprep.mubr.f32.mxu0 0.0
  %v496 = vand.u32 %v22, 4294901760
  %497 = vmatmul.mubr.f32.gmra.mrb[0].mxu0 %v496
  %v498 = vpop.f32.mrb[0].mxu0
  %v499 = vadd.f32 %v230, %v498
  %v500 = vpop.f32.mrb[0].mxu0
  %501 = vmatprep.mubr.f32.mxu0 0.0
  %v502 = vand.u32 %v23, 4294901760
  %503 = vmatmul.mubr.f32.gmra.mrb[0].mxu0 %v502
  %v504 = vpop.f32.mrb[0].mxu0
  %v505 = vadd.f32 %v240, %v504
  %v506 = vpop.f32.mrb[0].mxu0
  %507 = vmatprep.mubr.f32.mxu0 0.0
  %v508 = vand.u32 %v24, 4294901760
  %509 = vmatmul.mubr.f32.gmra.mrb[0].mxu0 %v508
  %v510 = vpop.f32.mrb[0].mxu0
  %v511 = vadd.f32 %v250, %v510
  %v512 = vpop.f32.mrb[0].mxu0
  %513 = vmatprep.mubr.f32.mxu0 0.0
  %v514 = vand.u32 %v25, 4294901760
  %515 = vmatmul.mubr.f32.gmra.mrb[0].mxu0 %v514
  %v516 = vpop.f32.mrb[0].mxu0
  %v517 = vadd.f32 %v260, %v516
  %v518 = vpop.f32.mrb[0].mxu0
  %519 = vmatprep.mubr.f32.mxu0 0.0
  %v520 = vand.u32 %v26, 4294901760
  %521 = vmatmul.mubr.f32.gmra.mrb[0].mxu0 %v520
  %v522 = vpop.f32.mrb[0].mxu0
  %v523 = vadd.f32 %v270, %v522
  %v524 = vpop.f32.mrb[0].mxu0
  %525 = vmatprep.mubr.f32.mxu0 0.0
  %v526 = vand.u32 %v27, 4294901760
  %527 = vmatmul.mubr.f32.gmra.mrb[0].mxu0 %v526
  %v528 = vpop.f32.mrb[0].mxu0
  %v529 = vadd.f32 %v280, %v528
  %v530 = vpop.f32.mrb[0].mxu0
  %531 = vmatprep.mubr.f32.mxu0 0.0
  %v532 = vand.u32 %v28, 4294901760
  %533 = vmatmul.mubr.f32.gmra.mrb[0].mxu0 %v532
  %v534 = vpop.f32.mrb[0].mxu0
  %v535 = vadd.f32 %v290, %v534
  %v536 = vpop.f32.mrb[0].mxu0
  %537 = vmatprep.mubr.f32.mxu0 0.0
  %v538 = vand.u32 %v29, 4294901760
  %539 = vmatmul.mubr.f32.gmra.mrb[0].mxu0 %v538
  %v540 = vpop.f32.mrb[0].mxu0
  %v541 = vadd.f32 %v300, %v540
  %v542 = vpop.f32.mrb[0].mxu0
  %543 = vdwg.mxu0
  %544 = vmatprep.subr.mxu0 0.0
  %v545 = vand.u32 %v30, 4294901760
  %v546 = vsub.f32 %v30, %v545
  %547 = vmatpush1.msra.mxu0 %v546
  %548 = vmatprep.subr.mxu0 0.0
  %v549 = vand.u32 %v31, 4294901760
  %v550 = vsub.f32 %v31, %v549
  %551 = vmatpush1.msra.mxu0 %v550
  %552 = vmatprep.subr.mxu0 0.0
  %v553 = vand.u32 %v32, 4294901760
  %v554 = vsub.f32 %v32, %v553
  %555 = vmatpush1.msra.mxu0 %v554
  %556 = vmatprep.subr.mxu0 0.0
  %v557 = vand.u32 %v33, 4294901760
  %v558 = vsub.f32 %v33, %v557
  %559 = vmatpush1.msra.mxu0 %v558
  %560 = vmatprep.subr.mxu0 0.0
  %v561 = vand.u32 %v34, 4294901760
  %v562 = vsub.f32 %v34, %v561
  %563 = vmatpush1.msra.mxu0 %v562
  %564 = vmatprep.subr.mxu0 0.0
  %v565 = vand.u32 %v35, 4294901760
  %v566 = vsub.f32 %v35, %v565
  %567 = vmatpush1.msra.mxu0 %v566
  %568 = vmatprep.subr.mxu0 0.0
  %v569 = vand.u32 %v36, 4294901760
  %v570 = vsub.f32 %v36, %v569
  %571 = vmatpush1.msra.mxu0 %v570
  %572 = vmatprep.subr.mxu0 0.0
  %v573 = vand.u32 %v37, 4294901760
  %v574 = vsub.f32 %v37, %v573
  %575 = vmatpush1.msra.mxu0 %v574
  %576 = vmatprep.subr.mxu0 0.0
  %v577 = vand.u32 %v38, 4294901760
  %v578 = vsub.f32 %v38, %v577
  %579 = vmatpush1.msra.mxu0 %v578
  %580 = vmatprep.subr.mxu0 0.0
  %v581 = vand.u32 %v39, 4294901760
  %v582 = vsub.f32 %v39, %v581
  %583 = vmatpush1.msra.mxu0 %v582
  %584 = vmatprep.subr.mxu0 0.0
  %v585 = vand.u32 %v40, 4294901760
  %v586 = vsub.f32 %v40, %v585
  %587 = vmatpush1.msra.mxu0 %v586
  %588 = vmatprep.subr.mxu0 0.0
  %v589 = vand.u32 %v41, 4294901760
  %v590 = vsub.f32 %v41, %v589
  %591 = vmatpush1.msra.mxu0 %v590
  %592 = vmatprep.subr.mxu0 0.0
  %v593 = vand.u32 %v42, 4294901760
  %v594 = vsub.f32 %v42, %v593
  %595 = vmatpush1.msra.mxu0 %v594
  %596 = vmatprep.subr.mxu0 0.0
  %v597 = vand.u32 %v43, 4294901760
  %v598 = vsub.f32 %v43, %v597
  %599 = vmatpush1.msra.mxu0 %v598
  %600 = vmatprep.subr.mxu0 0.0
  %v601 = vand.u32 %v44, 4294901760
  %v602 = vsub.f32 %v44, %v601
  %603 = vmatpush1.msra.mxu0 %v602
  %604 = vmatprep.subr.mxu0 0.0
  %v605 = vand.u32 %v45, 4294901760
  %v606 = vsub.f32 %v45, %v605
  %607 = vmatpush1.msra.mxu0 %v606
  %608 = vmatprep.subr.mxu0 0.0
  %609 = vmatpush1.msra.mxu0 0.0
  %610 = vmatprep.subr.mxu0 0.0
  %611 = vmatpush1.msra.mxu0 0.0
  %612 = vmatprep.subr.mxu0 0.0
  %613 = vmatpush1.msra.mxu0 0.0
  %614 = vmatprep.subr.mxu0 0.0
  %615 = vmatpush1.msra.mxu0 0.0
  %616 = vmatprep.subr.mxu0 0.0
  %617 = vmatpush1.msra.mxu0 0.0
  %618 = vmatprep.subr.mxu0 0.0
  %619 = vmatpush1.msra.mxu0 0.0
  %620 = vmatprep.subr.mxu0 0.0
  %621 = vmatpush1.msra.mxu0 0.0
  %622 = vmatprep.subr.mxu0 0.0
  %623 = vmatpush1.msra.mxu0 0.0
  %624 = vmatprep.subr.mxu0 0.0
  %625 = vmatpush1.msra.mxu0 0.0
  %626 = vmatprep.subr.mxu0 0.0
  %627 = vmatpush1.msra.mxu0 0.0
  %628 = vmatprep.subr.mxu0 0.0
  %629 = vmatpush1.msra.mxu0 0.0
  %630 = vmatprep.subr.mxu0 0.0
  %631 = vmatpush1.msra.mxu0 0.0
  %632 = vmatprep.subr.mxu0 0.0
  %633 = vmatpush1.msra.mxu0 0.0
  %634 = vmatprep.subr.mxu0 0.0
  %635 = vmatpush1.msra.mxu0 0.0
  %636 = vmatprep.subr.mxu0 0.0
  %637 = vmatpush1.msra.mxu0 0.0
  %638 = vmatprep.subr.mxu0 0.0
  %639 = vmatpush1.msra.mxu0 0.0
  %640 = vmatprep.mubr.f32.mxu0 0.0
  %v641 = vand.u32 %v14, 4294901760
  %v642 = vsub.f32 %v14, %v641
  %643 = vmatmul.mubr.f32.gmra.mrb[0].mxu0 %v642
  %v644 = vpop.f32.mrb[0].mxu0
  %v645 = vadd.f32 %v451, %v644
  %v646 = vpop.f32.mrb[0].mxu0
  %647 = vmatprep.mubr.f32.mxu0 0.0
  %v648 = vand.u32 %v15, 4294901760
  %v649 = vsub.f32 %v15, %v648
  %650 = vmatmul.mubr.f32.gmra.mrb[0].mxu0 %v649
  %v651 = vpop.f32.mrb[0].mxu0
  %v652 = vadd.f32 %v457, %v651
  %v653 = vpop.f32.mrb[0].mxu0
  %654 = vmatprep.mubr.f32.mxu0 0.0
  %v655 = vand.u32 %v16, 4294901760
  %v656 = vsub.f32 %v16, %v655
  %657 = vmatmul.mubr.f32.gmra.mrb[0].mxu0 %v656
  %v658 = vpop.f32.mrb[0].mxu0
  %v659 = vadd.f32 %v463, %v658
  %v660 = vpop.f32.mrb[0].mxu0
  %661 = vmatprep.mubr.f32.mxu0 0.0
  %v662 = vand.u32 %v17, 4294901760
  %v663 = vsub.f32 %v17, %v662
  %664 = vmatmul.mubr.f32.gmra.mrb[0].mxu0 %v663
  %v665 = vpop.f32.mrb[0].mxu0
  %v666 = vadd.f32 %v469, %v665
  %v667 = vpop.f32.mrb[0].mxu0
  %668 = vmatprep.mubr.f32.mxu0 0.0
  %v669 = vand.u32 %v18, 4294901760
  %v670 = vsub.f32 %v18, %v669
  %671 = vmatmul.mubr.f32.gmra.mrb[0].mxu0 %v670
  %v672 = vpop.f32.mrb[0].mxu0
  %v673 = vadd.f32 %v475, %v672
  %v674 = vpop.f32.mrb[0].mxu0
  %675 = vmatprep.mubr.f32.mxu0 0.0
  %v676 = vand.u32 %v19, 4294901760
  %v677 = vsub.f32 %v19, %v676
  %678 = vmatmul.mubr.f32.gmra.mrb[0].mxu0 %v677
  %v679 = vpop.f32.mrb[0].mxu0
  %v680 = vadd.f32 %v481, %v679
  %v681 = vpop.f32.mrb[0].mxu0
  %682 = vmatprep.mubr.f32.mxu0 0.0
  %v683 = vand.u32 %v20, 4294901760
  %v684 = vsub.f32 %v20, %v683
  %685 = vmatmul.mubr.f32.gmra.mrb[0].mxu0 %v684
  %v686 = vpop.f32.mrb[0].mxu0
  %v687 = vadd.f32 %v487, %v686
  %v688 = vpop.f32.mrb[0].mxu0
  %689 = vmatprep.mubr.f32.mxu0 0.0
  %v690 = vand.u32 %v21, 4294901760
  %v691 = vsub.f32 %v21, %v690
  %692 = vmatmul.mubr.f32.gmra.mrb[0].mxu0 %v691
  %v693 = vpop.f32.mrb[0].mxu0
  %v694 = vadd.f32 %v493, %v693
  %v695 = vpop.f32.mrb[0].mxu0
  %696 = vmatprep.mubr.f32.mxu0 0.0
  %v697 = vand.u32 %v22, 4294901760
  %v698 = vsub.f32 %v22, %v697
  %699 = vmatmul.mubr.f32.gmra.mrb[0].mxu0 %v698
  %v700 = vpop.f32.mrb[0].mxu0
  %v701 = vadd.f32 %v499, %v700
  %v702 = vpop.f32.mrb[0].mxu0
  %703 = vmatprep.mubr.f32.mxu0 0.0
  %v704 = vand.u32 %v23, 4294901760
  %v705 = vsub.f32 %v23, %v704
  %706 = vmatmul.mubr.f32.gmra.mrb[0].mxu0 %v705
  %v707 = vpop.f32.mrb[0].mxu0
  %v708 = vadd.f32 %v505, %v707
  %v709 = vpop.f32.mrb[0].mxu0
  %710 = vmatprep.mubr.f32.mxu0 0.0
  %v711 = vand.u32 %v24, 4294901760
  %v712 = vsub.f32 %v24, %v711
  %713 = vmatmul.mubr.f32.gmra.mrb[0].mxu0 %v712
  %v714 = vpop.f32.mrb[0].mxu0
  %v715 = vadd.f32 %v511, %v714
  %v716 = vpop.f32.mrb[0].mxu0
  %717 = vmatprep.mubr.f32.mxu0 0.0
  %v718 = vand.u32 %v25, 4294901760
  %v719 = vsub.f32 %v25, %v718
  %720 = vmatmul.mubr.f32.gmra.mrb[0].mxu0 %v719
  %v721 = vpop.f32.mrb[0].mxu0
  %v722 = vadd.f32 %v517, %v721
  %v723 = vpop.f32.mrb[0].mxu0
  %724 = vmatprep.mubr.f32.mxu0 0.0
  %v725 = vand.u32 %v26, 4294901760
  %v726 = vsub.f32 %v26, %v725
  %727 = vmatmul.mubr.f32.gmra.mrb[0].mxu0 %v726
  %v728 = vpop.f32.mrb[0].mxu0
  %v729 = vadd.f32 %v523, %v728
  %v730 = vpop.f32.mrb[0].mxu0
  %731 = vmatprep.mubr.f32.mxu0 0.0
  %v732 = vand.u32 %v27, 4294901760
  %v733 = vsub.f32 %v27, %v732
  %734 = vmatmul.mubr.f32.gmra.mrb[0].mxu0 %v733
  %v735 = vpop.f32.mrb[0].mxu0
  %v736 = vadd.f32 %v529, %v735
  %v737 = vpop.f32.mrb[0].mxu0
  %738 = vmatprep.mubr.f32.mxu0 0.0
  %v739 = vand.u32 %v28, 4294901760
  %v740 = vsub.f32 %v28, %v739
  %741 = vmatmul.mubr.f32.gmra.mrb[0].mxu0 %v740
  %v742 = vpop.f32.mrb[0].mxu0
  %v743 = vadd.f32 %v535, %v742
  %v744 = vpop.f32.mrb[0].mxu0
  %745 = vmatprep.mubr.f32.mxu0 0.0
  %v746 = vand.u32 %v29, 4294901760
  %v747 = vsub.f32 %v29, %v746
  %748 = vmatmul.mubr.f32.gmra.mrb[0].mxu0 %v747
  %v749 = vpop.f32.mrb[0].mxu0
  %v750 = vadd.f32 %v541, %v749
  %v751 = vpop.f32.mrb[0].mxu0
  %752 = vdwg.mxu0
  %753 = vmatprep.subr.mxu0 0.0
  %v754 = vand.u32 %v30, 4294901760
  %755 = vmatpush1.msra.mxu0 %v754
  %756 = vmatprep.subr.mxu0 0.0
  %v757 = vand.u32 %v31, 4294901760
  %758 = vmatpush1.msra.mxu0 %v757
  %759 = vmatprep.subr.mxu0 0.0
  %v760 = vand.u32 %v32, 4294901760
  %761 = vmatpush1.msra.mxu0 %v760
  %762 = vmatprep.subr.mxu0 0.0
  %v763 = vand.u32 %v33, 4294901760
  %764 = vmatpush1.msra.mxu0 %v763
  %765 = vmatprep.subr.mxu0 0.0
  %v766 = vand.u32 %v34, 4294901760
  %767 = vmatpush1.msra.mxu0 %v766
  %768 = vmatprep.subr.mxu0 0.0
  %v769 = vand.u32 %v35, 4294901760
  %770 = vmatpush1.msra.mxu0 %v769
  %771 = vmatprep.subr.mxu0 0.0
  %v772 = vand.u32 %v36, 4294901760
  %773 = vmatpush1.msra.mxu0 %v772
  %774 = vmatprep.subr.mxu0 0.0
  %v775 = vand.u32 %v37, 4294901760
  %776 = vmatpush1.msra.mxu0 %v775
  %777 = vmatprep.subr.mxu0 0.0
  %v778 = vand.u32 %v38, 4294901760
  %779 = vmatpush1.msra.mxu0 %v778
  %780 = vmatprep.subr.mxu0 0.0
  %v781 = vand.u32 %v39, 4294901760
  %782 = vmatpush1.msra.mxu0 %v781
  %783 = vmatprep.subr.mxu0 0.0
  %v784 = vand.u32 %v40, 4294901760
  %785 = vmatpush1.msra.mxu0 %v784
  %786 = vmatprep.subr.mxu0 0.0
  %v787 = vand.u32 %v41, 4294901760
  %788 = vmatpush1.msra.mxu0 %v787
  %789 = vmatprep.subr.mxu0 0.0
  %v790 = vand.u32 %v42, 4294901760
  %791 = vmatpush1.msra.mxu0 %v790
  %792 = vmatprep.subr.mxu0 0.0
  %v793 = vand.u32 %v43, 4294901760
  %794 = vmatpush1.msra.mxu0 %v793
  %795 = vmatprep.subr.mxu0 0.0
  %v796 = vand.u32 %v44, 4294901760
  %797 = vmatpush1.msra.mxu0 %v796
  %798 = vmatprep.subr.mxu0 0.0
  %v799 = vand.u32 %v45, 4294901760
  %800 = vmatpush1.msra.mxu0 %v799
  %801 = vmatprep.subr.mxu0 0.0
  %802 = vmatpush1.msra.mxu0 0.0
  %803 = vmatprep.subr.mxu0 0.0
  %804 = vmatpush1.msra.mxu0 0.0
  %805 = vmatprep.subr.mxu0 0.0
  %806 = vmatpush1.msra.mxu0 0.0
  %807 = vmatprep.subr.mxu0 0.0
  %808 = vmatpush1.msra.mxu0 0.0
  %809 = vmatprep.subr.mxu0 0.0
  %810 = vmatpush1.msra.mxu0 0.0
  %811 = vmatprep.subr.mxu0 0.0
  %812 = vmatpush1.msra.mxu0 0.0
  %813 = vmatprep.subr.mxu0 0.0
  %814 = vmatpush1.msra.mxu0 0.0
  %815 = vmatprep.subr.mxu0 0.0
  %816 = vmatpush1.msra.mxu0 0.0
  %817 = vmatprep.subr.mxu0 0.0
  %818 = vmatpush1.msra.mxu0 0.0
  %819 = vmatprep.subr.mxu0 0.0
  %820 = vmatpush1.msra.mxu0 0.0
  %821 = vmatprep.subr.mxu0 0.0
  %822 = vmatpush1.msra.mxu0 0.0
  %823 = vmatprep.subr.mxu0 0.0
  %824 = vmatpush1.msra.mxu0 0.0
  %825 = vmatprep.subr.mxu0 0.0
  %826 = vmatpush1.msra.mxu0 0.0
  %827 = vmatprep.subr.mxu0 0.0
  %828 = vmatpush1.msra.mxu0 0.0
  %829 = vmatprep.subr.mxu0 0.0
  %830 = vmatpush1.msra.mxu0 0.0
  %831 = vmatprep.subr.mxu0 0.0
  %832 = vmatpush1.msra.mxu0 0.0
  %833 = vmatprep.mubr.f32.mxu0 0.0
  %v834 = vand.u32 %v14, 4294901760
  %v835 = vsub.f32 %v14, %v834
  %v836 = vand.u32 %v835, 4294901760
  %837 = vmatmul.mubr.f32.gmra.mrb[0].mxu0 %v836
  %v838 = vpop.f32.mrb[0].mxu0
  %v839 = vadd.f32 %v645, %v838
  %v840 = vpop.f32.mrb[0].mxu0
  %841 = vmatprep.mubr.f32.mxu0 0.0
  %v842 = vand.u32 %v15, 4294901760
  %v843 = vsub.f32 %v15, %v842
  %v844 = vand.u32 %v843, 4294901760
  %845 = vmatmul.mubr.f32.gmra.mrb[0].mxu0 %v844
  %v846 = vpop.f32.mrb[0].mxu0
  %v847 = vadd.f32 %v652, %v846
  %v848 = vpop.f32.mrb[0].mxu0
  %849 = vmatprep.mubr.f32.mxu0 0.0
  %v850 = vand.u32 %v16, 4294901760
  %v851 = vsub.f32 %v16, %v850
  %v852 = vand.u32 %v851, 4294901760
  %853 = vmatmul.mubr.f32.gmra.mrb[0].mxu0 %v852
  %v854 = vpop.f32.mrb[0].mxu0
  %v855 = vadd.f32 %v659, %v854
  %v856 = vpop.f32.mrb[0].mxu0
  %857 = vmatprep.mubr.f32.mxu0 0.0
  %v858 = vand.u32 %v17, 4294901760
  %v859 = vsub.f32 %v17, %v858
  %v860 = vand.u32 %v859, 4294901760
  %861 = vmatmul.mubr.f32.gmra.mrb[0].mxu0 %v860
  %v862 = vpop.f32.mrb[0].mxu0
  %v863 = vadd.f32 %v666, %v862
  %v864 = vpop.f32.mrb[0].mxu0
  %865 = vmatprep.mubr.f32.mxu0 0.0
  %v866 = vand.u32 %v18, 4294901760
  %v867 = vsub.f32 %v18, %v866
  %v868 = vand.u32 %v867, 4294901760
  %869 = vmatmul.mubr.f32.gmra.mrb[0].mxu0 %v868
  %v870 = vpop.f32.mrb[0].mxu0
  %v871 = vadd.f32 %v673, %v870
  %v872 = vpop.f32.mrb[0].mxu0
  %873 = vmatprep.mubr.f32.mxu0 0.0
  %v874 = vand.u32 %v19, 4294901760
  %v875 = vsub.f32 %v19, %v874
  %v876 = vand.u32 %v875, 4294901760
  %877 = vmatmul.mubr.f32.gmra.mrb[0].mxu0 %v876
  %v878 = vpop.f32.mrb[0].mxu0
  %v879 = vadd.f32 %v680, %v878
  %v880 = vpop.f32.mrb[0].mxu0
  %881 = vmatprep.mubr.f32.mxu0 0.0
  %v882 = vand.u32 %v20, 4294901760
  %v883 = vsub.f32 %v20, %v882
  %v884 = vand.u32 %v883, 4294901760
  %885 = vmatmul.mubr.f32.gmra.mrb[0].mxu0 %v884
  %v886 = vpop.f32.mrb[0].mxu0
  %v887 = vadd.f32 %v687, %v886
  %v888 = vpop.f32.mrb[0].mxu0
  %889 = vmatprep.mubr.f32.mxu0 0.0
  %v890 = vand.u32 %v21, 4294901760
  %v891 = vsub.f32 %v21, %v890
  %v892 = vand.u32 %v891, 4294901760
  %893 = vmatmul.mubr.f32.gmra.mrb[0].mxu0 %v892
  %v894 = vpop.f32.mrb[0].mxu0
  %v895 = vadd.f32 %v694, %v894
  %v896 = vpop.f32.mrb[0].mxu0
  %897 = vmatprep.mubr.f32.mxu0 0.0
  %v898 = vand.u32 %v22, 4294901760
  %v899 = vsub.f32 %v22, %v898
  %v900 = vand.u32 %v899, 4294901760
  %901 = vmatmul.mubr.f32.gmra.mrb[0].mxu0 %v900
  %v902 = vpop.f32.mrb[0].mxu0
  %v903 = vadd.f32 %v701, %v902
  %v904 = vpop.f32.mrb[0].mxu0
  %905 = vmatprep.mubr.f32.mxu0 0.0
  %v906 = vand.u32 %v23, 4294901760
  %v907 = vsub.f32 %v23, %v906
  %v908 = vand.u32 %v907, 4294901760
  %909 = vmatmul.mubr.f32.gmra.mrb[0].mxu0 %v908
  %v910 = vpop.f32.mrb[0].mxu0
  %v911 = vadd.f32 %v708, %v910
  %v912 = vpop.f32.mrb[0].mxu0
  %913 = vmatprep.mubr.f32.mxu0 0.0
  %v914 = vand.u32 %v24, 4294901760
  %v915 = vsub.f32 %v24, %v914
  %v916 = vand.u32 %v915, 4294901760
  %917 = vmatmul.mubr.f32.gmra.mrb[0].mxu0 %v916
  %v918 = vpop.f32.mrb[0].mxu0
  %v919 = vadd.f32 %v715, %v918
  %v920 = vpop.f32.mrb[0].mxu0
  %921 = vmatprep.mubr.f32.mxu0 0.0
  %v922 = vand.u32 %v25, 4294901760
  %v923 = vsub.f32 %v25, %v922
  %v924 = vand.u32 %v923, 4294901760
  %925 = vmatmul.mubr.f32.gmra.mrb[0].mxu0 %v924
  %v926 = vpop.f32.mrb[0].mxu0
  %v927 = vadd.f32 %v722, %v926
  %v928 = vpop.f32.mrb[0].mxu0
  %929 = vmatprep.mubr.f32.mxu0 0.0
  %v930 = vand.u32 %v26, 4294901760
  %v931 = vsub.f32 %v26, %v930
  %v932 = vand.u32 %v931, 4294901760
  %933 = vmatmul.mubr.f32.gmra.mrb[0].mxu0 %v932
  %v934 = vpop.f32.mrb[0].mxu0
  %v935 = vadd.f32 %v729, %v934
  %v936 = vpop.f32.mrb[0].mxu0
  %937 = vmatprep.mubr.f32.mxu0 0.0
  %v938 = vand.u32 %v27, 4294901760
  %v939 = vsub.f32 %v27, %v938
  %v940 = vand.u32 %v939, 4294901760
  %941 = vmatmul.mubr.f32.gmra.mrb[0].mxu0 %v940
  %v942 = vpop.f32.mrb[0].mxu0
  %v943 = vadd.f32 %v736, %v942
  %v944 = vpop.f32.mrb[0].mxu0
  %945 = vmatprep.mubr.f32.mxu0 0.0
  %v946 = vand.u32 %v28, 4294901760
  %v947 = vsub.f32 %v28, %v946
  %v948 = vand.u32 %v947, 4294901760
  %949 = vmatmul.mubr.f32.gmra.mrb[0].mxu0 %v948
  %v950 = vpop.f32.mrb[0].mxu0
  %v951 = vadd.f32 %v743, %v950
  %v952 = vpop.f32.mrb[0].mxu0
  %953 = vmatprep.mubr.f32.mxu0 0.0
  %v954 = vand.u32 %v29, 4294901760
  %v955 = vsub.f32 %v29, %v954
  %v956 = vand.u32 %v955, 4294901760
  %957 = vmatmul.mubr.f32.gmra.mrb[0].mxu0 %v956
  %v958 = vpop.f32.mrb[0].mxu0
  %v959 = vadd.f32 %v750, %v958
  %v960 = vpop.f32.mrb[0].mxu0
  %961 = vdwg.mxu0
  %962 = vmatprep.subr.mxu0 0.0
  %v963 = vand.u32 %v30, 4294901760
  %v964 = vsub.f32 %v30, %v963
  %v965 = vand.u32 %v964, 4294901760
  %966 = vmatpush1.msra.mxu0 %v965
  %967 = vmatprep.subr.mxu0 0.0
  %v968 = vand.u32 %v31, 4294901760
  %v969 = vsub.f32 %v31, %v968
  %v970 = vand.u32 %v969, 4294901760
  %971 = vmatpush1.msra.mxu0 %v970
  %972 = vmatprep.subr.mxu0 0.0
  %v973 = vand.u32 %v32, 4294901760
  %v974 = vsub.f32 %v32, %v973
  %v975 = vand.u32 %v974, 4294901760
  %976 = vmatpush1.msra.mxu0 %v975
  %977 = vmatprep.subr.mxu0 0.0
  %v978 = vand.u32 %v33, 4294901760
  %v979 = vsub.f32 %v33, %v978
  %v980 = vand.u32 %v979, 4294901760
  %981 = vmatpush1.msra.mxu0 %v980
  %982 = vmatprep.subr.mxu0 0.0
  %v983 = vand.u32 %v34, 4294901760
  %v984 = vsub.f32 %v34, %v983
  %v985 = vand.u32 %v984, 4294901760
  %986 = vmatpush1.msra.mxu0 %v985
  %987 = vmatprep.subr.mxu0 0.0
  %v988 = vand.u32 %v35, 4294901760
  %v989 = vsub.f32 %v35, %v988
  %v990 = vand.u32 %v989, 4294901760
  %991 = vmatpush1.msra.mxu0 %v990
  %992 = vmatprep.subr.mxu0 0.0
  %v993 = vand.u32 %v36, 4294901760
  %v994 = vsub.f32 %v36, %v993
  %v995 = vand.u32 %v994, 4294901760
  %996 = vmatpush1.msra.mxu0 %v995
  %997 = vmatprep.subr.mxu0 0.0
  %v998 = vand.u32 %v37, 4294901760
  %v999 = vsub.f32 %v37, %v998
  %v1000 = vand.u32 %v999, 4294901760
  %1001 = vmatpush1.msra.mxu0 %v1000
  %1002 = vmatprep.subr.mxu0 0.0
  %v1003 = vand.u32 %v38, 4294901760
  %v1004 = vsub.f32 %v38, %v1003
  %v1005 = vand.u32 %v1004, 4294901760
  %1006 = vmatpush1.msra.mxu0 %v1005
  %1007 = vmatprep.subr.mxu0 0.0
  %v1008 = vand.u32 %v39, 4294901760
  %v1009 = vsub.f32 %v39, %v1008
  %v1010 = vand.u32 %v1009, 4294901760
  %1011 = vmatpush1.msra.mxu0 %v1010
  %1012 = vmatprep.subr.mxu0 0.0
  %v1013 = vand.u32 %v40, 4294901760
  %v1014 = vsub.f32 %v40, %v1013
  %v1015 = vand.u32 %v1014, 4294901760
  %1016 = vmatpush1.msra.mxu0 %v1015
  %1017 = vmatprep.subr.mxu0 0.0
  %v1018 = vand.u32 %v41, 4294901760
  %v1019 = vsub.f32 %v41, %v1018
  %v1020 = vand.u32 %v1019, 4294901760
  %1021 = vmatpush1.msra.mxu0 %v1020
  %1022 = vmatprep.subr.mxu0 0.0
  %v1023 = vand.u32 %v42, 4294901760
  %v1024 = vsub.f32 %v42, %v1023
  %v1025 = vand.u32 %v1024, 4294901760
  %1026 = vmatpush1.msra.mxu0 %v1025
  %1027 = vmatprep.subr.mxu0 0.0
  %v1028 = vand.u32 %v43, 4294901760
  %v1029 = vsub.f32 %v43, %v1028
  %v1030 = vand.u32 %v1029, 4294901760
  %1031 = vmatpush1.msra.mxu0 %v1030
  %1032 = vmatprep.subr.mxu0 0.0
  %v1033 = vand.u32 %v44, 4294901760
  %v1034 = vsub.f32 %v44, %v1033
  %v1035 = vand.u32 %v1034, 4294901760
  %1036 = vmatpush1.msra.mxu0 %v1035
  %1037 = vmatprep.subr.mxu0 0.0
  %v1038 = vand.u32 %v45, 4294901760
  %v1039 = vsub.f32 %v45, %v1038
  %v1040 = vand.u32 %v1039, 4294901760
  %1041 = vmatpush1.msra.mxu0 %v1040
  %1042 = vmatprep.subr.mxu0 0.0
  %1043 = vmatpush1.msra.mxu0 0.0
  %1044 = vmatprep.subr.mxu0 0.0
  %1045 = vmatpush1.msra.mxu0 0.0
  %1046 = vmatprep.subr.mxu0 0.0
  %1047 = vmatpush1.msra.mxu0 0.0
  %1048 = vmatprep.subr.mxu0 0.0
  %1049 = vmatpush1.msra.mxu0 0.0
  %1050 = vmatprep.subr.mxu0 0.0
  %1051 = vmatpush1.msra.mxu0 0.0
  %1052 = vmatprep.subr.mxu0 0.0
  %1053 = vmatpush1.msra.mxu0 0.0
  %1054 = vmatprep.subr.mxu0 0.0
  %1055 = vmatpush1.msra.mxu0 0.0
  %1056 = vmatprep.subr.mxu0 0.0
  %1057 = vmatpush1.msra.mxu0 0.0
  %1058 = vmatprep.subr.mxu0 0.0
  %1059 = vmatpush1.msra.mxu0 0.0
  %1060 = vmatprep.subr.mxu0 0.0
  %1061 = vmatpush1.msra.mxu0 0.0
  %1062 = vmatprep.subr.mxu0 0.0
  %1063 = vmatpush1.msra.mxu0 0.0
  %1064 = vmatprep.subr.mxu0 0.0
  %1065 = vmatpush1.msra.mxu0 0.0
  %1066 = vmatprep.subr.mxu0 0.0
  %1067 = vmatpush1.msra.mxu0 0.0
  %1068 = vmatprep.subr.mxu0 0.0
  %1069 = vmatpush1.msra.mxu0 0.0
  %1070 = vmatprep.subr.mxu0 0.0
  %1071 = vmatpush1.msra.mxu0 0.0
  %1072 = vmatprep.subr.mxu0 0.0
  %1073 = vmatpush1.msra.mxu0 0.0
  %1074 = vmatprep.mubr.f32.mxu0 0.0
  %v1075 = vand.u32 %v14, 4294901760
  %1076 = vmatmul.mubr.f32.gmra.mrb[0].mxu0 %v1075
  %v1077 = vpop.f32.mrb[0].mxu0
  %v1078 = vadd.f32 %v839, %v1077
  %v1079 = vpop.f32.mrb[0].mxu0
  %1080 = vmatprep.mubr.f32.mxu0 0.0
  %v1081 = vand.u32 %v15, 4294901760
  %1082 = vmatmul.mubr.f32.gmra.mrb[0].mxu0 %v1081
  %v1083 = vpop.f32.mrb[0].mxu0
  %v1084 = vadd.f32 %v847, %v1083
  %v1085 = vpop.f32.mrb[0].mxu0
  %1086 = vmatprep.mubr.f32.mxu0 0.0
  %v1087 = vand.u32 %v16, 4294901760
  %1088 = vmatmul.mubr.f32.gmra.mrb[0].mxu0 %v1087
  %v1089 = vpop.f32.mrb[0].mxu0
  %v1090 = vadd.f32 %v855, %v1089
  %v1091 = vpop.f32.mrb[0].mxu0
  %1092 = vmatprep.mubr.f32.mxu0 0.0
  %v1093 = vand.u32 %v17, 4294901760
  %1094 = vmatmul.mubr.f32.gmra.mrb[0].mxu0 %v1093
  %v1095 = vpop.f32.mrb[0].mxu0
  %v1096 = vadd.f32 %v863, %v1095
  %v1097 = vpop.f32.mrb[0].mxu0
  %1098 = vmatprep.mubr.f32.mxu0 0.0
  %v1099 = vand.u32 %v18, 4294901760
  %1100 = vmatmul.mubr.f32.gmra.mrb[0].mxu0 %v1099
  %v1101 = vpop.f32.mrb[0].mxu0
  %v1102 = vadd.f32 %v871, %v1101
  %v1103 = vpop.f32.mrb[0].mxu0
  %1104 = vmatprep.mubr.f32.mxu0 0.0
  %v1105 = vand.u32 %v19, 4294901760
  %1106 = vmatmul.mubr.f32.gmra.mrb[0].mxu0 %v1105
  %v1107 = vpop.f32.mrb[0].mxu0
  %v1108 = vadd.f32 %v879, %v1107
  %v1109 = vpop.f32.mrb[0].mxu0
  %1110 = vmatprep.mubr.f32.mxu0 0.0
  %v1111 = vand.u32 %v20, 4294901760
  %1112 = vmatmul.mubr.f32.gmra.mrb[0].mxu0 %v1111
  %v1113 = vpop.f32.mrb[0].mxu0
  %v1114 = vadd.f32 %v887, %v1113
  %v1115 = vpop.f32.mrb[0].mxu0
  %1116 = vmatprep.mubr.f32.mxu0 0.0
  %v1117 = vand.u32 %v21, 4294901760
  %1118 = vmatmul.mubr.f32.gmra.mrb[0].mxu0 %v1117
  %v1119 = vpop.f32.mrb[0].mxu0
  %v1120 = vadd.f32 %v895, %v1119
  %v1121 = vpop.f32.mrb[0].mxu0
  %1122 = vmatprep.mubr.f32.mxu0 0.0
  %v1123 = vand.u32 %v22, 4294901760
  %1124 = vmatmul.mubr.f32.gmra.mrb[0].mxu0 %v1123
  %v1125 = vpop.f32.mrb[0].mxu0
  %v1126 = vadd.f32 %v903, %v1125
  %v1127 = vpop.f32.mrb[0].mxu0
  %1128 = vmatprep.mubr.f32.mxu0 0.0
  %v1129 = vand.u32 %v23, 4294901760
  %1130 = vmatmul.mubr.f32.gmra.mrb[0].mxu0 %v1129
  %v1131 = vpop.f32.mrb[0].mxu0
  %v1132 = vadd.f32 %v911, %v1131
  %v1133 = vpop.f32.mrb[0].mxu0
  %1134 = vmatprep.mubr.f32.mxu0 0.0
  %v1135 = vand.u32 %v24, 4294901760
  %1136 = vmatmul.mubr.f32.gmra.mrb[0].mxu0 %v1135
  %v1137 = vpop.f32.mrb[0].mxu0
  %v1138 = vadd.f32 %v919, %v1137
  %v1139 = vpop.f32.mrb[0].mxu0
  %1140 = vmatprep.mubr.f32.mxu0 0.0
  %v1141 = vand.u32 %v25, 4294901760
  %1142 = vmatmul.mubr.f32.gmra.mrb[0].mxu0 %v1141
  %v1143 = vpop.f32.mrb[0].mxu0
  %v1144 = vadd.f32 %v927, %v1143
  %v1145 = vpop.f32.mrb[0].mxu0
  %1146 = vmatprep.mubr.f32.mxu0 0.0
  %v1147 = vand.u32 %v26, 4294901760
  %1148 = vmatmul.mubr.f32.gmra.mrb[0].mxu0 %v1147
  %v1149 = vpop.f32.mrb[0].mxu0
  %v1150 = vadd.f32 %v935, %v1149
  %v1151 = vpop.f32.mrb[0].mxu0
  %1152 = vmatprep.mubr.f32.mxu0 0.0
  %v1153 = vand.u32 %v27, 4294901760
  %1154 = vmatmul.mubr.f32.gmra.mrb[0].mxu0 %v1153
  %v1155 = vpop.f32.mrb[0].mxu0
  %v1156 = vadd.f32 %v943, %v1155
  %v1157 = vpop.f32.mrb[0].mxu0
  %1158 = vmatprep.mubr.f32.mxu0 0.0
  %v1159 = vand.u32 %v28, 4294901760
  %1160 = vmatmul.mubr.f32.gmra.mrb[0].mxu0 %v1159
  %v1161 = vpop.f32.mrb[0].mxu0
  %v1162 = vadd.f32 %v951, %v1161
  %v1163 = vpop.f32.mrb[0].mxu0
  %1164 = vmatprep.mubr.f32.mxu0 0.0
  %v1165 = vand.u32 %v29, 4294901760
  %1166 = vmatmul.mubr.f32.gmra.mrb[0].mxu0 %v1165
  %v1167 = vpop.f32.mrb[0].mxu0
  %v1168 = vadd.f32 %v959, %v1167
  %v1169 = vpop.f32.mrb[0].mxu0
  %1170 = vdwg.mxu0
  %1171 = vmatprep.subr.mxu0 0.0
  %v1172 = vand.u32 %v30, 4294901760
  %1173 = vmatpush1.msra.mxu0 %v1172
  %1174 = vmatprep.subr.mxu0 0.0
  %v1175 = vand.u32 %v31, 4294901760
  %1176 = vmatpush1.msra.mxu0 %v1175
  %1177 = vmatprep.subr.mxu0 0.0
  %v1178 = vand.u32 %v32, 4294901760
  %1179 = vmatpush1.msra.mxu0 %v1178
  %1180 = vmatprep.subr.mxu0 0.0
  %v1181 = vand.u32 %v33, 4294901760
  %1182 = vmatpush1.msra.mxu0 %v1181
  %1183 = vmatprep.subr.mxu0 0.0
  %v1184 = vand.u32 %v34, 4294901760
  %1185 = vmatpush1.msra.mxu0 %v1184
  %1186 = vmatprep.subr.mxu0 0.0
  %v1187 = vand.u32 %v35, 4294901760
  %1188 = vmatpush1.msra.mxu0 %v1187
  %1189 = vmatprep.subr.mxu0 0.0
  %v1190 = vand.u32 %v36, 4294901760
  %1191 = vmatpush1.msra.mxu0 %v1190
  %1192 = vmatprep.subr.mxu0 0.0
  %v1193 = vand.u32 %v37, 4294901760
  %1194 = vmatpush1.msra.mxu0 %v1193
  %1195 = vmatprep.subr.mxu0 0.0
  %v1196 = vand.u32 %v38, 4294901760
  %1197 = vmatpush1.msra.mxu0 %v1196
  %1198 = vmatprep.subr.mxu0 0.0
  %v1199 = vand.u32 %v39, 4294901760
  %1200 = vmatpush1.msra.mxu0 %v1199
  %1201 = vmatprep.subr.mxu0 0.0
  %v1202 = vand.u32 %v40, 4294901760
  %1203 = vmatpush1.msra.mxu0 %v1202
  %1204 = vmatprep.subr.mxu0 0.0
  %v1205 = vand.u32 %v41, 4294901760
  %1206 = vmatpush1.msra.mxu0 %v1205
  %1207 = vmatprep.subr.mxu0 0.0
  %v1208 = vand.u32 %v42, 4294901760
  %1209 = vmatpush1.msra.mxu0 %v1208
  %1210 = vmatprep.subr.mxu0 0.0
  %v1211 = vand.u32 %v43, 4294901760
  %1212 = vmatpush1.msra.mxu0 %v1211
  %1213 = vmatprep.subr.mxu0 0.0
  %v1214 = vand.u32 %v44, 4294901760
  %1215 = vmatpush1.msra.mxu0 %v1214
  %1216 = vmatprep.subr.mxu0 0.0
  %v1217 = vand.u32 %v45, 4294901760
  %1218 = vmatpush1.msra.mxu0 %v1217
  %1219 = vmatprep.subr.mxu0 0.0
  %1220 = vmatpush1.msra.mxu0 0.0
  %1221 = vmatprep.subr.mxu0 0.0
  %1222 = vmatpush1.msra.mxu0 0.0
  %1223 = vmatprep.subr.mxu0 0.0
  %1224 = vmatpush1.msra.mxu0 0.0
  %1225 = vmatprep.subr.mxu0 0.0
  %1226 = vmatpush1.msra.mxu0 0.0
  %1227 = vmatprep.subr.mxu0 0.0
  %1228 = vmatpush1.msra.mxu0 0.0
  %1229 = vmatprep.subr.mxu0 0.0
  %1230 = vmatpush1.msra.mxu0 0.0
  %1231 = vmatprep.subr.mxu0 0.0
  %1232 = vmatpush1.msra.mxu0 0.0
  %1233 = vmatprep.subr.mxu0 0.0
  %1234 = vmatpush1.msra.mxu0 0.0
  %1235 = vmatprep.subr.mxu0 0.0
  %1236 = vmatpush1.msra.mxu0 0.0
  %1237 = vmatprep.subr.mxu0 0.0
  %1238 = vmatpush1.msra.mxu0 0.0
  %1239 = vmatprep.subr.mxu0 0.0
  %1240 = vmatpush1.msra.mxu0 0.0
  %1241 = vmatprep.subr.mxu0 0.0
  %1242 = vmatpush1.msra.mxu0 0.0
  %1243 = vmatprep.subr.mxu0 0.0
  %1244 = vmatpush1.msra.mxu0 0.0
  %1245 = vmatprep.subr.mxu0 0.0
  %1246 = vmatpush1.msra.mxu0 0.0
  %1247 = vmatprep.subr.mxu0 0.0
  %1248 = vmatpush1.msra.mxu0 0.0
  %1249 = vmatprep.subr.mxu0 0.0
  %1250 = vmatpush1.msra.mxu0 0.0
  %1251 = vmatprep.mubr.f32.mxu0 0.0
  %v1252 = vand.u32 %v14, 4294901760
  %1253 = vmatmul.mubr.f32.gmra.mrb[0].mxu0 %v1252
  %v1254 = vpop.f32.mrb[0].mxu0
  %v1255 = vadd.f32 %v1078, %v1254
  %v1256 = vpop.f32.mrb[0].mxu0
  %1257 = vmatprep.mubr.f32.mxu0 0.0
  %v1258 = vand.u32 %v15, 4294901760
  %1259 = vmatmul.mubr.f32.gmra.mrb[0].mxu0 %v1258
  %v1260 = vpop.f32.mrb[0].mxu0
  %v1261 = vadd.f32 %v1084, %v1260
  %v1262 = vpop.f32.mrb[0].mxu0
  %1263 = vmatprep.mubr.f32.mxu0 0.0
  %v1264 = vand.u32 %v16, 4294901760
  %1265 = vmatmul.mubr.f32.gmra.mrb[0].mxu0 %v1264
  %v1266 = vpop.f32.mrb[0].mxu0
  %v1267 = vadd.f32 %v1090, %v1266
  %v1268 = vpop.f32.mrb[0].mxu0
  %1269 = vmatprep.mubr.f32.mxu0 0.0
  %v1270 = vand.u32 %v17, 4294901760
  %1271 = vmatmul.mubr.f32.gmra.mrb[0].mxu0 %v1270
  %v1272 = vpop.f32.mrb[0].mxu0
  %v1273 = vadd.f32 %v1096, %v1272
  %v1274 = vpop.f32.mrb[0].mxu0
  %1275 = vmatprep.mubr.f32.mxu0 0.0
  %v1276 = vand.u32 %v18, 4294901760
  %1277 = vmatmul.mubr.f32.gmra.mrb[0].mxu0 %v1276
  %v1278 = vpop.f32.mrb[0].mxu0
  %v1279 = vadd.f32 %v1102, %v1278
  %v1280 = vpop.f32.mrb[0].mxu0
  %1281 = vmatprep.mubr.f32.mxu0 0.0
  %v1282 = vand.u32 %v19, 4294901760
  %1283 = vmatmul.mubr.f32.gmra.mrb[0].mxu0 %v1282
  %v1284 = vpop.f32.mrb[0].mxu0
  %v1285 = vadd.f32 %v1108, %v1284
  %v1286 = vpop.f32.mrb[0].mxu0
  %1287 = vmatprep.mubr.f32.mxu0 0.0
  %v1288 = vand.u32 %v20, 4294901760
  %1289 = vmatmul.mubr.f32.gmra.mrb[0].mxu0 %v1288
  %v1290 = vpop.f32.mrb[0].mxu0
  %v1291 = vadd.f32 %v1114, %v1290
  %v1292 = vpop.f32.mrb[0].mxu0
  %1293 = vmatprep.mubr.f32.mxu0 0.0
  %v1294 = vand.u32 %v21, 4294901760
  %1295 = vmatmul.mubr.f32.gmra.mrb[0].mxu0 %v1294
  %v1296 = vpop.f32.mrb[0].mxu0
  %v1297 = vadd.f32 %v1120, %v1296
  %v1298 = vpop.f32.mrb[0].mxu0
  %1299 = vmatprep.mubr.f32.mxu0 0.0
  %v1300 = vand.u32 %v22, 4294901760
  %1301 = vmatmul.mubr.f32.gmra.mrb[0].mxu0 %v1300
  %v1302 = vpop.f32.mrb[0].mxu0
  %v1303 = vadd.f32 %v1126, %v1302
  %v1304 = vpop.f32.mrb[0].mxu0
  %1305 = vmatprep.mubr.f32.mxu0 0.0
  %v1306 = vand.u32 %v23, 4294901760
  %1307 = vmatmul.mubr.f32.gmra.mrb[0].mxu0 %v1306
  %v1308 = vpop.f32.mrb[0].mxu0
  %v1309 = vadd.f32 %v1132, %v1308
  %v1310 = vpop.f32.mrb[0].mxu0
  %1311 = vmatprep.mubr.f32.mxu0 0.0
  %v1312 = vand.u32 %v24, 4294901760
  %1313 = vmatmul.mubr.f32.gmra.mrb[0].mxu0 %v1312
  %v1314 = vpop.f32.mrb[0].mxu0
  %v1315 = vadd.f32 %v1138, %v1314
  %v1316 = vpop.f32.mrb[0].mxu0
  %1317 = vmatprep.mubr.f32.mxu0 0.0
  %v1318 = vand.u32 %v25, 4294901760
  %1319 = vmatmul.mubr.f32.gmra.mrb[0].mxu0 %v1318
  %v1320 = vpop.f32.mrb[0].mxu0
  %v1321 = vadd.f32 %v1144, %v1320
  %v1322 = vpop.f32.mrb[0].mxu0
  %1323 = vmatprep.mubr.f32.mxu0 0.0
  %v1324 = vand.u32 %v26, 4294901760
  %1325 = vmatmul.mubr.f32.gmra.mrb[0].mxu0 %v1324
  %v1326 = vpop.f32.mrb[0].mxu0
  %v1327 = vadd.f32 %v1150, %v1326
  %v1328 = vpop.f32.mrb[0].mxu0
  %1329 = vmatprep.mubr.f32.mxu0 0.0
  %v1330 = vand.u32 %v27, 4294901760
  %1331 = vmatmul.mubr.f32.gmra.mrb[0].mxu0 %v1330
  %v1332 = vpop.f32.mrb[0].mxu0
  %v1333 = vadd.f32 %v1156, %v1332
  %v1334 = vpop.f32.mrb[0].mxu0
  %1335 = vmatprep.mubr.f32.mxu0 0.0
  %v1336 = vand.u32 %v28, 4294901760
  %1337 = vmatmul.mubr.f32.gmra.mrb[0].mxu0 %v1336
  %v1338 = vpop.f32.mrb[0].mxu0
  %v1339 = vadd.f32 %v1162, %v1338
  %v1340 = vpop.f32.mrb[0].mxu0
  %1341 = vmatprep.mubr.f32.mxu0 0.0
  %v1342 = vand.u32 %v29, 4294901760
  %1343 = vmatmul.mubr.f32.gmra.mrb[0].mxu0 %v1342
  %v1344 = vpop.f32.mrb[0].mxu0
  %v1345 = vadd.f32 %v1168, %v1344
  %v1346 = vpop.f32.mrb[0].mxu0
  %1347 = vdwg.mxu0
  %1348 = vst [vmem:[%s3] sm:$0xff] %v1255
  %1349 = vst [vmem:[%s3 + $0x8] sm:$0xff] %v1261
  %1350 = vst [vmem:[%s3 + $0x10] sm:$0xff] %v1267
  %1351 = vst [vmem:[%s3 + $0x18] sm:$0xff] %v1273
  %1352 = vst [vmem:[%s3 + $0x20] sm:$0xff] %v1279
  %1353 = vst [vmem:[%s3 + $0x28] sm:$0xff] %v1285
  %1354 = vst [vmem:[%s3 + $0x30] sm:$0xff] %v1291
  %1355 = vst [vmem:[%s3 + $0x38] sm:$0xff] %v1297
  %1356 = vst [vmem:[%s3 + $0x40] sm:$0xff] %v1303
  %1357 = vst [vmem:[%s3 + $0x48] sm:$0xff] %v1309
  %1358 = vst [vmem:[%s3 + $0x50] sm:$0xff] %v1315
  %1359 = vst [vmem:[%s3 + $0x58] sm:$0xff] %v1321
  %1360 = vst [vmem:[%s3 + $0x60] sm:$0xff] %v1327
  %1361 = vst [vmem:[%s3 + $0x68] sm:$0xff] %v1333
  %1362 = vst [vmem:[%s3 + $0x70] sm:$0xff] %v1339
  %1363 = vst [vmem:[%s3 + $0x78] sm:$0xff] %v1345
  // Predicated region
  $region14: #{network_block_apply.10} parent=0 // pred_check
    _
  $region15: #{network_block_apply.10} parent=0 // pred_check_branch
    %1365 = sbr.rel (0) target = $region17
  $region16: #{network_block_apply.10} parent=0 // pred_region
    _
  $region17: #{network_block_apply.10} parent=0 // pred_fallthru
    _
  // Predicated region
  $region18: #{network_block_apply.10} parent=0 // pred_check
    _
  $region19: #{network_block_apply.10} parent=0 // pred_check_branch
    %1367 = sbr.rel (0) target = $region21
  $region20: #{network_block_apply.10} parent=0 // pred_region
    _
  $region21: #{network_block_apply.10} parent=0 // pred_fallthru
    _

</llo_original>
